<compile_context>
chip_gen: v6e
topology: v6e:2x2x1
jax: 0.10.0
libtpu: 0.0.40
codegen_flags: <defaults>
</compile_context>

<pallas_src>
import functools
import math

import jax
import jax.numpy as jnp
from jax import lax
from jax.experimental import pallas as pl
from jax.experimental.pallas import tpu as pltpu

# ----------------------------- small CLIP config -----------------------------
B = 2              # batch
VOCAB = 64         # text vocab
T_SEQ = 8          # text sequence length
T_HID = 32         # text hidden size
T_HEADS = 2
T_LAYERS = 2
IMG = 16           # image H = W
CH = 3             # image channels
PATCH = 4          # patch size (stride == kernel)
NUM_PATCHES = (IMG // PATCH) ** 2
V_SEQ = NUM_PATCHES + 1   # +1 for class token
V_HID = 32
V_HEADS = 2
V_LAYERS = 2
PROJ = 16          # shared projection dim
LN_EPS = 1e-5
NEG_INF = -1e9
LANES = 128        # lane width of the packed per-layer weight slab


# ------------------------------ shared in-kernel math -------------------------
def _ln(x, g, b, eps=LN_EPS):
    """LayerNorm over the last axis. g, b are (1, D) and broadcast."""
    mu = jnp.mean(x, axis=-1, keepdims=True)
    xc = x - mu
    var = jnp.mean(xc * xc, axis=-1, keepdims=True)
    return xc * lax.rsqrt(var + eps) * g + b


# --------------------- packed per-layer weight slab layout --------------------
def _slab_layout(heads, head_dim, d, d_ff):
    """Row layout of the (rows, 128) per-layer weight slab.

    Every block starts at lane 0 (so the kernel never lane-offset-slices); head
    selection only indexes the sublane axis.  Layout:
      [Wq_h | Wk_h | Wv_h for each head] (d rows each, head_dim lanes)
      O-proj (d rows, d lanes), FC1 (d rows, d_ff lanes), FC2 (d_ff rows, d lanes)
      ln1_g, ln1_b, ln2_g, ln2_b, o_b, fc1_b, fc2_b  (1 row each)
      per-head q/k/v biases (1 row each, head_dim lanes)
    """
    assert max(d, d_ff, head_dim) <= LANES
    off = {}
    r = 0
    for h in range(heads):
        for t in ("q", "k", "v"):
            off[f"w{t}{h}"] = (r, d, head_dim)
            r += d
    off["ow"] = (r, d, d); r += d
    off["fc1w"] = (r, d, d_ff); r += d
    off["fc2w"] = (r, d_ff, d); r += d_ff
    for name, width in (("ln1_g", d), ("ln1_b", d), ("ln2_g", d), ("ln2_b", d),
                        ("o_b", d), ("fc1_b", d_ff), ("fc2_b", d)):
        off[name] = (r, 1, width); r += 1
    for h in range(heads):
        for t in ("q", "k", "v"):
            off[f"b{t}{h}"] = (r, 1, head_dim); r += 1
    rows = ((r + 7) // 8) * 8
    return off, rows


# ------------------------------ fused encoder layer ---------------------------
def _encoder_layer(x, mask, w_ref, *, off, heads, head_dim, d, d_ff):
    """One pre-LN CLIP encoder layer; w_ref is the (1, rows, 128) packed slab."""
    def rd(name):
        r0, nr, nl = off[name]
        return w_ref[0, r0:r0 + nr, 0:nl]          # static ref view -> single load

    scale = head_dim ** -0.5
    h = _ln(x, rd("ln1_g"), rd("ln1_b"))

    ow_r0, _, _ = off["ow"]
    acc = jnp.zeros(x.shape, jnp.float32)
    for hd in range(heads):
        qh = jnp.dot(h, rd(f"wq{hd}"), preferred_element_type=jnp.float32) + rd(f"bq{hd}")
        kh = jnp.dot(h, rd(f"wk{hd}"), preferred_element_type=jnp.float32) + rd(f"bk{hd}")
        vh = jnp.dot(h, rd(f"wv{hd}"), preferred_element_type=jnp.float32) + rd(f"bv{hd}")
        s = lax.dot_general(qh, kh, (((1,), (1,)), ((), ())),
                            preferred_element_type=jnp.float32) * scale + mask
        s = s - jnp.max(s, axis=-1, keepdims=True)
        p = jnp.exp(s)
        p = p / jnp.sum(p, axis=-1, keepdims=True)     # exact softmax (matches torch)
        oh = jnp.dot(p, vh, preferred_element_type=jnp.float32)        # (N, head_dim)
        ow_h = w_ref[0, ow_r0 + hd * head_dim:ow_r0 + (hd + 1) * head_dim, 0:d]
        acc = acc + jnp.dot(oh, ow_h, preferred_element_type=jnp.float32)
    x = x + acc + rd("o_b")

    g = _ln(x, rd("ln2_g"), rd("ln2_b"))
    g = jnp.dot(g, rd("fc1w"), preferred_element_type=jnp.float32) + rd("fc1_b")
    g = g * jax.nn.sigmoid(1.702 * g)                  # QuickGELU
    g = jnp.dot(g, rd("fc2w"), preferred_element_type=jnp.float32) + rd("fc2_b")
    return x + g


# ------------------------------ tower kernels ---------------------------------
def _text_tower_kernel(x_ref, mask_ref, w_ref, o_ref, *, off, heads, head_dim, d, d_ff):
    @pl.when(pl.program_id(0) == 0)
    def _():
        o_ref[...] = x_ref[...]                        # residual stream stays resident
    o_ref[...] = _encoder_layer(o_ref[...], mask_ref[...], w_ref,
                                off=off, heads=heads, head_dim=head_dim, d=d, d_ff=d_ff)


def _vision_tower_kernel(patch_ref, emb_ref, mask_ref, w_ref, o_ref, *,
                         off, heads, head_dim, d, d_ff, bsz, n_patch, pdim):
    @pl.when(pl.program_id(0) == 0)
    def _():
        # fused patch-embedding prologue: Conv2d-as-matmul + CLS + pos-emb + pre-LN
        pw = emb_ref[0:pdim, :]
        cls = emb_ref[pdim:pdim + 1, :]
        pos0 = emb_ref[pdim + 1:pdim + 2, :]
        posr = emb_ref[pdim + 2:pdim + 2 + n_patch, :]
        pre_g = emb_ref[pdim + 2 + n_patch:pdim + 3 + n_patch, :]
        pre_b = emb_ref[pdim + 3 + n_patch:pdim + 4 + n_patch, :]
        pe = jnp.dot(patch_ref[...], pw, preferred_element_type=jnp.float32)
        blocks = []
        for b in range(bsz):
            blocks.append(cls + pos0)
            blocks.append(pe[b * n_patch:(b + 1) * n_patch, :] + posr)
        o_ref[...] = _ln(jnp.concatenate(blocks, axis=0), pre_g, pre_b)
    o_ref[...] = _encoder_layer(o_ref[...], mask_ref[...], w_ref,
                                off=off, heads=heads, head_dim=head_dim, d=d, d_ff=d_ff)


def run_text_tower(x2d, mask, slab, heads, d, d_ff):
    n = x2d.shape[0]
    num_layers, rows, lanes = slab.shape
    off, _ = _slab_layout(heads, d // heads, d, d_ff)
    kernel = functools.partial(_text_tower_kernel, off=off, heads=heads,
                               head_dim=d // heads, d=d, d_ff=d_ff)
    return pl.pallas_call(
        kernel,
        grid=(num_layers,),
        out_shape=jax.ShapeDtypeStruct((n, d), jnp.float32),
        in_specs=[pl.BlockSpec((n, d), lambda l: (0, 0)),            # fetched once
                  pl.BlockSpec((n, n), lambda l: (0, 0)),            # fetched once
                  pl.BlockSpec((1, rows, lanes), lambda l: (l, 0, 0))],
        out_specs=pl.BlockSpec((n, d), lambda l: (0, 0)),
        compiler_params=pltpu.CompilerParams(dimension_semantics=("arbitrary",)),
    )(x2d, mask, slab)


def run_vision_tower(patches, emb_slab, mask, slab, heads, d, d_ff, bsz, n_patch):
    pdim = patches.shape[1]
    n = bsz * (n_patch + 1)
    num_layers, rows, lanes = slab.shape
    emb_rows = emb_slab.shape[0]
    off, _ = _slab_layout(heads, d // heads, d, d_ff)
    kernel = functools.partial(_vision_tower_kernel, off=off, heads=heads,
                               head_dim=d // heads, d=d, d_ff=d_ff,
                               bsz=bsz, n_patch=n_patch, pdim=pdim)
    return pl.pallas_call(
        kernel,
        grid=(num_layers,),
        out_shape=jax.ShapeDtypeStruct((n, d), jnp.float32),
        in_specs=[pl.BlockSpec((bsz * n_patch, pdim), lambda l: (0, 0)),
                  pl.BlockSpec((emb_rows, d), lambda l: (0, 0)),
                  pl.BlockSpec((n, n), lambda l: (0, 0)),
                  pl.BlockSpec((1, rows, lanes), lambda l: (l, 0, 0))],
        out_specs=pl.BlockSpec((n, d), lambda l: (0, 0)),
        compiler_params=pltpu.CompilerParams(dimension_semantics=("arbitrary",)),
    )(patches, emb_slab, mask, slab)


# ------------------------------- fused tail kernel ----------------------------
def _tail_kernel(scale_ref, tsel_ref, vsel_ref, t_ref, v_ref, p_ref, out_ref,
                 *, bsz, t_hid, v_hid, proj):
    # text: EOS pooling (original-CLIP argmax-token convention, one-hot built in XLA)
    pooled_t = jnp.dot(tsel_ref[...], t_ref[...], preferred_element_type=jnp.float32)
    pooled_t = _ln(pooled_t, p_ref[0:1, 0:t_hid], p_ref[1:2, 0:t_hid])
    te = jnp.dot(pooled_t, p_ref[2:2 + t_hid, 0:proj],
                 preferred_element_type=jnp.float32)

    # vision: CLS pooling + post LN + projection
    pooled_v = jnp.dot(vsel_ref[...], v_ref[...], preferred_element_type=jnp.float32)
    pooled_v = _ln(pooled_v, p_ref[2 + t_hid:3 + t_hid, 0:v_hid],
                   p_ref[3 + t_hid:4 + t_hid, 0:v_hid])
    ie = jnp.dot(pooled_v, p_ref[4 + t_hid:4 + t_hid + v_hid, 0:proj],
                 preferred_element_type=jnp.float32)

    # L2 normalize (tiny clamp avoids 0/0 for degenerate embeddings)
    te = te * lax.rsqrt(jnp.maximum(jnp.sum(te * te, axis=-1, keepdims=True), 1e-12))
    ie = ie * lax.rsqrt(jnp.maximum(jnp.sum(ie * ie, axis=-1, keepdims=True), 1e-12))

    lt = jnp.exp(scale_ref[...]) * lax.dot_general(
        te, ie, (((1,), (1,)), ((), ())), preferred_element_type=jnp.float32)

    row = lax.broadcasted_iota(jnp.int32, (bsz, bsz), 0)
    col = lax.broadcasted_iota(jnp.int32, (bsz, bsz), 1)
    eye = (row == col).astype(jnp.float32)

    m_r = jnp.max(lt, axis=-1, keepdims=True)
    lse_r = m_r + jnp.log(jnp.sum(jnp.exp(lt - m_r), axis=-1, keepdims=True))
    ce_r = jnp.sum(lse_r - jnp.sum(lt * eye, axis=-1, keepdims=True),
                   axis=0, keepdims=True) / bsz                       # (1, 1)
    m_c = jnp.max(lt, axis=0, keepdims=True)
    lse_c = m_c + jnp.log(jnp.sum(jnp.exp(lt - m_c), axis=0, keepdims=True))
    ce_c = jnp.sum(lse_c - jnp.sum(lt * eye, axis=0, keepdims=True),
                   axis=1, keepdims=True) / bsz                       # (1, 1)
    loss = 0.5 * (ce_r + ce_c)

    # pack everything into one lane-dense (32, 128) output slab (one output DMA);
    # each section sits at an 8-aligned sublane offset.
    out_ref[...] = jnp.zeros_like(out_ref)
    out_ref[0:bsz, 0:bsz] = lt
    out_ref[8:8 + bsz, 0:proj] = te
    out_ref[16:16 + bsz, 0:proj] = ie
    out_ref[24:25, 0:1] = loss


def clip_tail(t_act, v_act, t_sel, v_sel, tail_slab, logit_scale):
    n_t, t_hid = t_act.shape
    n_v, v_hid = v_act.shape
    bsz = t_sel.shape[0]
    kernel = functools.partial(_tail_kernel, bsz=bsz, t_hid=t_hid, v_hid=v_hid,
                               proj=PROJ)
    # grid-less call; all inputs / the output are whole-array VMEM blocks.
    return pl.pallas_call(
        kernel,
        out_shape=jax.ShapeDtypeStruct((32, 128), jnp.float32),
    )(logit_scale, t_sel, v_sel, t_act, v_act, tail_slab)


# ------------------------------- XLA-side glue --------------------------------
def build_attention_mask(att_mask, bsz, seq, causal):
    """Additive (B*S, B*S) mask: block-diag per batch (+ causal + key padding)."""
    n = bsz * seq
    idx = jnp.arange(n)
    rb = idx // seq
    rp = idx % seq
    keep = rb[:, None] == rb[None, :]
    if causal:
        keep = keep & (rp[None, :] <= rp[:, None])
    key_keep = att_mask.reshape(n) > 0
    keep = keep & key_keep[None, :]
    return jnp.where(keep, 0.0, NEG_INF).astype(jnp.float32)


def clip_forward(params, input_ids, att_mask, pixel_values):
    bsz, seq = input_ids.shape

    # ---------- text tower ----------
    # TODO(synk): token-embedding gather stays as XLA glue (no efficient tiny-gather kernel).
    x_t = (params["t_tok_emb"][input_ids] + params["t_pos_emb"][None]).reshape(
        bsz * seq, T_HID)
    t_mask = build_attention_mask(att_mask, bsz, seq, causal=True)
    t_act = run_text_tower(x_t, t_mask, params["t_slab"], T_HEADS, T_HID, 4 * T_HID)

    # ---------- vision tower (patch embedding fused into the tower kernel) ----------
    nh = nw = IMG // PATCH
    n_patch = nh * nw
    patches = pixel_values.reshape(bsz, CH, nh, PATCH, nw, PATCH).transpose(
        0, 2, 4, 1, 3, 5).reshape(bsz * n_patch, CH * PATCH * PATCH)
    v_mask = build_attention_mask(jnp.ones((bsz, n_patch + 1), jnp.int32),
                                  bsz, n_patch + 1, causal=False)
    v_act = run_vision_tower(patches, params["v_emb_slab"], v_mask, params["v_slab"],
                             V_HEADS, V_HID, 4 * V_HID, bsz, n_patch)

    # ---------- pooling one-hots (XLA glue) ----------
    # original-CLIP EOS pooling convention: token with the largest id per sequence.
    eos_idx = jnp.argmax(input_ids, axis=-1)
    t_sel = jax.nn.one_hot(jnp.arange(bsz) * seq + eos_idx, bsz * seq,
                           dtype=jnp.float32)
    v_sel = jax.nn.one_hot(jnp.arange(bsz) * (n_patch + 1), bsz * (n_patch + 1),
                           dtype=jnp.float32)

    tail = clip_tail(t_act, v_act, t_sel, v_sel, params["tail_slab"],
                     params["logit_scale"])
    lt = tail[0:bsz, 0:bsz]
    te = tail[8:8 + bsz, 0:PROJ]
    ie = tail[16:16 + bsz, 0:PROJ]
    return {"loss": tail[24, 0],
            "logits_per_text": lt,
            "logits_per_image": lt.T,          # exact transpose; no second MXU pass
            "text_embeds": te,
            "image_embeds": ie}


# ------------------------------ parameter init -------------------------------
def _nrm(key, shape, scale=0.02):
    return scale * jax.random.normal(key, shape, dtype=jnp.float32)


def init_tower_slab(key, d, d_ff, heads, n_layers):
    """Pack one encoder layer's weights into a (rows, 128) slab; stack over layers."""
    head_dim = d // heads
    off, rows = _slab_layout(heads, head_dim, d, d_ff)
    slabs = []
    for lk in jax.random.split(key, n_layers):
        ks = jax.random.split(lk, 6)
        wq, wk, wv = _nrm(ks[0], (d, d)), _nrm(ks[1], (d, d)), _nrm(ks[2], (d, d))
        entries = {
            "ow": _nrm(ks[3], (d, d)),
            "fc1w": _nrm(ks[4], (d, d_ff)),
            "fc2w": _nrm(ks[5], (d_ff, d)),
            "ln1_g": jnp.ones((1, d), jnp.float32),
            "ln1_b": jnp.zeros((1, d), jnp.float32),
            "ln2_g": jnp.ones((1, d), jnp.float32),
            "ln2_b": jnp.zeros((1, d), jnp.float32),
            "o_b": jnp.zeros((1, d), jnp.float32),
            "fc1_b": jnp.zeros((1, d_ff), jnp.float32),
            "fc2_b": jnp.zeros((1, d), jnp.float32),
        }
        for h in range(heads):
            cs = slice(h * head_dim, (h + 1) * head_dim)
            entries[f"wq{h}"] = wq[:, cs]
            entries[f"wk{h}"] = wk[:, cs]
            entries[f"wv{h}"] = wv[:, cs]
            entries[f"bq{h}"] = jnp.zeros((1, head_dim), jnp.float32)
            entries[f"bk{h}"] = jnp.zeros((1, head_dim), jnp.float32)
            entries[f"bv{h}"] = jnp.zeros((1, head_dim), jnp.float32)
        slab = jnp.zeros((rows, LANES), jnp.float32)
        for name, val in entries.items():
            r0, nr, nl = off[name]
            slab = slab.at[r0:r0 + nr, 0:nl].set(val.astype(jnp.float32))
        slabs.append(slab)
    return jnp.stack(slabs, axis=0)


def init_vision_embed_slab(key, d, ch, patch, n_patch):
    """patch_w | cls | pos(0..n_patch) | pre_g | pre_b stacked along sublanes."""
    pdim = ch * patch * patch
    k0, k1, k2 = jax.random.split(key, 3)
    patch_w_pt = _nrm(k0, (d, ch, patch, patch))          # PyTorch Conv2d weight layout
    pw = patch_w_pt.reshape(d, pdim).T                    # (C*P*P, D)
    cls = _nrm(k1, (1, d))
    pos = _nrm(k2, (n_patch + 1, d))
    pre_g = jnp.ones((1, d), jnp.float32)
    pre_b = jnp.zeros((1, d), jnp.float32)
    return jnp.concatenate([pw, cls, pos, pre_g, pre_b], axis=0)


def init_tail_slab(key, t_hid, v_hid, proj):
    """t_final_g | t_final_b | text_proj_w | v_post_g | v_post_b | vis_proj_w."""
    k1, k2 = jax.random.split(key)
    lw = max(t_hid, v_hid)
    slab = jnp.zeros((4 + t_hid + v_hid, lw), jnp.float32)
    slab = slab.at[0, 0:t_hid].set(1.0)                                    # t_final_g
    slab = slab.at[2:2 + t_hid, 0:proj].set(_nrm(k1, (t_hid, proj)))        # text proj
    slab = slab.at[2 + t_hid, 0:v_hid].set(1.0)                            # v_post_g
    slab = slab.at[4 + t_hid:4 + t_hid + v_hid, 0:proj].set(
        _nrm(k2, (v_hid, proj)))                                            # vis proj
    return slab


def init_params(key):
    ks = jax.random.split(key, 7)
    return {
        "t_tok_emb": _nrm(ks[0], (VOCAB, T_HID)),
        "t_pos_emb": _nrm(ks[1], (T_SEQ, T_HID)),
        "t_slab": init_tower_slab(ks[2], T_HID, 4 * T_HID, T_HEADS, T_LAYERS),
        "v_emb_slab": init_vision_embed_slab(ks[3], V_HID, CH, PATCH, NUM_PATCHES),
        "v_slab": init_tower_slab(ks[4], V_HID, 4 * V_HID, V_HEADS, V_LAYERS),
        "tail_slab": init_tail_slab(ks[5], T_HID, V_HID, PROJ),
        "logit_scale": jnp.full((1, 1), math.log(1.0 / 0.07), jnp.float32),
    }


# ------------------------------------ main ------------------------------------
if __name__ == "__main__":
    key = jax.random.PRNGKey(0)
    k_ids, k_px, k_params = jax.random.split(key, 3)

    # batch dict analogous to {'clip_input_ids', 'clip_att_mask', 'clip_pixel'}
    clip_input_ids = jax.random.randint(k_ids, (B, T_SEQ), 1, VOCAB, dtype=jnp.int32)
    clip_att_mask = jnp.ones((B, T_SEQ), jnp.int32).at[1, -2:].set(0)   # some padding
    clip_pixel = jax.random.normal(k_px, (B, CH, IMG, IMG), jnp.float32)  # NCHW

    params = init_params(k_params)

    fwd = jax.jit(clip_forward)          # single XLA program around the 3 pallas_calls
    out = fwd(params, clip_input_ids, clip_att_mask, clip_pixel)
    jax.block_until_ready(out)

    # basic sanity on shapes
    assert out["logits_per_text"].shape == (B, B)
    assert out["logits_per_image"].shape == (B, B)
    assert out["image_embeds"].shape == (B, PROJ)
    assert out["text_embeds"].shape == (B, PROJ)
    assert out["loss"].shape == ()
    assert bool(jnp.isfinite(out["loss"]))

    print("KERNEL_OK")
</pallas_src>

<mosaic_0001>
module attributes {stable_mosaic.version = 11 : i64} {
  func.func @_text_tower_kernel(%arg0: i32, %arg1: memref<16x32xf32, #tpu.memory_space<vmem>>, %arg2: memref<16x16xf32, #tpu.memory_space<vmem>>, %arg3: memref<1x400x128xf32, #tpu.memory_space<vmem>>, %arg4: memref<16x32xf32, #tpu.memory_space<vmem>>) attributes {dimension_semantics = [#tpu.dimension_semantics<arbitrary>], iteration_bounds = array<i64: 2>, scalar_prefetch = 0 : i64, scratch_operands = 0 : i64, tpu.core_type = #tpu.core_type<tc>, window_params = [{pipeline_mode = #tpu.pipeline_mode<synchronous>, transform_indices = @transform_0, window_bounds = array<i64: 16, 32>}, {pipeline_mode = #tpu.pipeline_mode<synchronous>, transform_indices = @transform_1, window_bounds = array<i64: 16, 16>}, {transform_indices = @transform_2, window_bounds = array<i64: 1, 400, 128>}, {pipeline_mode = #tpu.pipeline_mode<synchronous>, transform_indices = @transform_3, window_bounds = array<i64: 16, 32>}]} {
    %c0_i32 = arith.constant 0 : i32
    %0 = arith.cmpi eq, %arg0, %c0_i32 : i32
    %1 = arith.extui %0 : i1 to i32
    %c0_i32_0 = arith.constant 0 : i32
    %2 = arith.cmpi ne, %1, %c0_i32_0 : i32
    scf.if %2 {
      %c0_85 = arith.constant 0 : index
      %c0_86 = arith.constant 0 : index
      %161 = vector.load %arg1[%c0_85, %c0_86] : memref<16x32xf32, #tpu.memory_space<vmem>>, vector<16x32xf32>
      %c0_87 = arith.constant 0 : index
      %c0_88 = arith.constant 0 : index
      %162 = vector.load %arg4[%c0_87, %c0_88] : memref<16x32xf32, #tpu.memory_space<vmem>>, vector<16x32xf32>
      tpu.vector_store %arg4[%c0_87, %c0_88], %161 {strides = array<i32>} : memref<16x32xf32, #tpu.memory_space<vmem>>, vector<16x32xf32>,
    } else {
    }
    %c0 = arith.constant 0 : index
    %c0_1 = arith.constant 0 : index
    %3 = vector.load %arg4[%c0, %c0_1] : memref<16x32xf32, #tpu.memory_space<vmem>>, vector<16x32xf32>
    %c0_2 = arith.constant 0 : index
    %c0_3 = arith.constant 0 : index
    %4 = vector.load %arg2[%c0_2, %c0_3] : memref<16x16xf32, #tpu.memory_space<vmem>>, vector<16x16xf32>
    %c0_4 = arith.constant 0 : index
    %c384 = arith.constant 384 : index
    %c0_5 = arith.constant 0 : index
    %5 = vector.load %arg3[%c0_4, %c384, %c0_5] : memref<1x400x128xf32, #tpu.memory_space<vmem>>, vector<1x1x32xf32>
    %6 = vector.shape_cast %5 : vector<1x1x32xf32> to vector<1x32xf32>
    %c0_6 = arith.constant 0 : index
    %c385 = arith.constant 385 : index
    %c0_7 = arith.constant 0 : index
    %7 = vector.load %arg3[%c0_6, %c385, %c0_7] : memref<1x400x128xf32, #tpu.memory_space<vmem>>, vector<1x1x32xf32>
    %8 = vector.shape_cast %7 : vector<1x1x32xf32> to vector<1x32xf32>
    %cst = arith.constant dense<0.000000e+00> : vector<16xf32>
    %9 = vector.multi_reduction <add>, %3, %cst [1] : vector<16x32xf32> to vector<16xf32>
    %10 = vector.shape_cast %9 : vector<16xf32> to vector<16x1xf32>
    %cst_8 = arith.constant 3.200000e+01 : f32
    %11 = vector.broadcast %cst_8 : f32 to vector<16x1xf32>
    %12 = arith.divf %10, %11 : vector<16x1xf32>
    %13 = vector.broadcast %12 : vector<16x1xf32> to vector<16x32xf32>
    %14 = arith.subf %3, %13 : vector<16x32xf32>
    %15 = arith.mulf %14, %14 : vector<16x32xf32>
    %cst_9 = arith.constant dense<0.000000e+00> : vector<16xf32>
    %16 = vector.multi_reduction <add>, %15, %cst_9 [1] : vector<16x32xf32> to vector<16xf32>
    %17 = vector.shape_cast %16 : vector<16xf32> to vector<16x1xf32>
    %cst_10 = arith.constant 3.200000e+01 : f32
    %18 = vector.broadcast %cst_10 : f32 to vector<16x1xf32>
    %19 = arith.divf %17, %18 : vector<16x1xf32>
    %cst_11 = arith.constant 9.99999974E-6 : f32
    %20 = vector.broadcast %cst_11 : f32 to vector<16x1xf32>
    %21 = arith.addf %19, %20 : vector<16x1xf32>
    %22 = math.rsqrt %21 : vector<16x1xf32>
    %23 = vector.broadcast %22 : vector<16x1xf32> to vector<16x32xf32>
    %24 = arith.mulf %14, %23 : vector<16x32xf32>
    %25 = vector.broadcast %6 : vector<1x32xf32> to vector<16x32xf32>
    %26 = arith.mulf %24, %25 : vector<16x32xf32>
    %27 = vector.broadcast %8 : vector<1x32xf32> to vector<16x32xf32>
    %28 = arith.addf %26, %27 : vector<16x32xf32>
    %cst_12 = arith.constant 0.000000e+00 : f32
    %29 = vector.broadcast %cst_12 : f32 to vector<16x32xf32>
    %c0_13 = arith.constant 0 : index
    %c0_14 = arith.constant 0 : index
    %c0_15 = arith.constant 0 : index
    %30 = vector.load %arg3[%c0_13, %c0_14, %c0_15] : memref<1x400x128xf32, #tpu.memory_space<vmem>>, vector<1x32x16xf32>
    %31 = vector.shape_cast %30 : vector<1x32x16xf32> to vector<32x16xf32>
    %cst_16 = arith.constant dense<0.000000e+00> : vector<16x16xf32>
    %32 = tpu.matmul %28, %31, %cst_16 {dimension_numbers = #tpu.dot_dimension_numbers<[1], [0], [0], [1], [0, 0, 1, 1], [], []>} : vector<16x32xf32>, vector<32x16xf32>, vector<16x16xf32> -> vector<16x16xf32>
    %c0_17 = arith.constant 0 : index
    %c391 = arith.constant 391 : index
    %c0_18 = arith.constant 0 : index
    %33 = vector.load %arg3[%c0_17, %c391, %c0_18] : memref<1x400x128xf32, #tpu.memory_space<vmem>>, vector<1x1x16xf32>
    %34 = vector.shape_cast %33 : vector<1x1x16xf32> to vector<1x16xf32>
    %35 = vector.broadcast %34 : vector<1x16xf32> to vector<16x16xf32>
    %36 = arith.addf %32, %35 : vector<16x16xf32>
    %c0_19 = arith.constant 0 : index
    %c32 = arith.constant 32 : index
    %c0_20 = arith.constant 0 : index
    %37 = vector.load %arg3[%c0_19, %c32, %c0_20] : memref<1x400x128xf32, #tpu.memory_space<vmem>>, vector<1x32x16xf32>
    %38 = vector.shape_cast %37 : vector<1x32x16xf32> to vector<32x16xf32>
    %cst_21 = arith.constant dense<0.000000e+00> : vector<16x16xf32>
    %39 = tpu.matmul %28, %38, %cst_21 {dimension_numbers = #tpu.dot_dimension_numbers<[1], [0], [0], [1], [0, 0, 1, 1], [], []>} : vector<16x32xf32>, vector<32x16xf32>, vector<16x16xf32> -> vector<16x16xf32>
    %c0_22 = arith.constant 0 : index
    %c392 = arith.constant 392 : index
    %c0_23 = arith.constant 0 : index
    %40 = vector.load %arg3[%c0_22, %c392, %c0_23] : memref<1x400x128xf32, #tpu.memory_space<vmem>>, vector<1x1x16xf32>
    %41 = vector.shape_cast %40 : vector<1x1x16xf32> to vector<1x16xf32>
    %42 = vector.broadcast %41 : vector<1x16xf32> to vector<16x16xf32>
    %43 = arith.addf %39, %42 : vector<16x16xf32>
    %c0_24 = arith.constant 0 : index
    %c64 = arith.constant 64 : index
    %c0_25 = arith.constant 0 : index
    %44 = vector.load %arg3[%c0_24, %c64, %c0_25] : memref<1x400x128xf32, #tpu.memory_space<vmem>>, vector<1x32x16xf32>
    %45 = vector.shape_cast %44 : vector<1x32x16xf32> to vector<32x16xf32>
    %cst_26 = arith.constant dense<0.000000e+00> : vector<16x16xf32>
    %46 = tpu.matmul %28, %45, %cst_26 {dimension_numbers = #tpu.dot_dimension_numbers<[1], [0], [0], [1], [0, 0, 1, 1], [], []>} : vector<16x32xf32>, vector<32x16xf32>, vector<16x16xf32> -> vector<16x16xf32>
    %c0_27 = arith.constant 0 : index
    %c393 = arith.constant 393 : index
    %c0_28 = arith.constant 0 : index
    %47 = vector.load %arg3[%c0_27, %c393, %c0_28] : memref<1x400x128xf32, #tpu.memory_space<vmem>>, vector<1x1x16xf32>
    %48 = vector.shape_cast %47 : vector<1x1x16xf32> to vector<1x16xf32>
    %49 = vector.broadcast %48 : vector<1x16xf32> to vector<16x16xf32>
    %50 = arith.addf %46, %49 : vector<16x16xf32>
    %cst_29 = arith.constant dense<0.000000e+00> : vector<16x16xf32>
    %51 = tpu.matmul %36, %43, %cst_29 {dimension_numbers = #tpu.dot_dimension_numbers<[1], [1], [0], [0], [0, 0, 1, 0], [], []>} : vector<16x16xf32>, vector<16x16xf32>, vector<16x16xf32> -> vector<16x16xf32>
    %cst_30 = arith.constant 2.500000e-01 : f32
    %52 = vector.broadcast %cst_30 : f32 to vector<16x16xf32>
    %53 = arith.mulf %51, %52 : vector<16x16xf32>
    %54 = arith.addf %53, %4 : vector<16x16xf32>
    %cst_31 = arith.constant dense<0xFF800000> : vector<16xf32>
    %55 = vector.multi_reduction <maximumf>, %54, %cst_31 [1] : vector<16x16xf32> to vector<16xf32>
    %56 = vector.shape_cast %55 : vector<16xf32> to vector<16x1xf32>
    %57 = vector.broadcast %56 : vector<16x1xf32> to vector<16x16xf32>
    %58 = arith.subf %54, %57 : vector<16x16xf32>
    %59 = math.exp %58 : vector<16x16xf32>
    %cst_32 = arith.constant dense<0.000000e+00> : vector<16xf32>
    %60 = vector.multi_reduction <add>, %59, %cst_32 [1] : vector<16x16xf32> to vector<16xf32>
    %61 = vector.shape_cast %60 : vector<16xf32> to vector<16x1xf32>
    %62 = vector.broadcast %61 : vector<16x1xf32> to vector<16x16xf32>
    %63 = arith.divf %59, %62 : vector<16x16xf32>
    %cst_33 = arith.constant dense<0.000000e+00> : vector<16x16xf32>
    %64 = tpu.matmul %63, %50, %cst_33 {dimension_numbers = #tpu.dot_dimension_numbers<[1], [0], [0], [1], [0, 0, 1, 1], [], []>} : vector<16x16xf32>, vector<16x16xf32>, vector<16x16xf32> -> vector<16x16xf32>
    %c0_34 = arith.constant 0 : index
    %c192 = arith.constant 192 : index
    %c0_35 = arith.constant 0 : index
    %65 = vector.load %arg3[%c0_34, %c192, %c0_35] : memref<1x400x128xf32, #tpu.memory_space<vmem>>, vector<1x16x32xf32>
    %66 = vector.shape_cast %65 : vector<1x16x32xf32> to vector<16x32xf32>
    %cst_36 = arith.constant dense<0.000000e+00> : vector<16x32xf32>
    %67 = tpu.matmul %64, %66, %cst_36 {dimension_numbers = #tpu.dot_dimension_numbers<[1], [0], [0], [1], [0, 0, 1, 1], [], []>} : vector<16x16xf32>, vector<16x32xf32>, vector<16x32xf32> -> vector<16x32xf32>
    %68 = arith.addf %29, %67 : vector<16x32xf32>
    %c0_37 = arith.constant 0 : index
    %c96 = arith.constant 96 : index
    %c0_38 = arith.constant 0 : index
    %69 = vector.load %arg3[%c0_37, %c96, %c0_38] : memref<1x400x128xf32, #tpu.memory_space<vmem>>, vector<1x32x16xf32>
    %70 = vector.shape_cast %69 : vector<1x32x16xf32> to vector<32x16xf32>
    %cst_39 = arith.constant dense<0.000000e+00> : vector<16x16xf32>
    %71 = tpu.matmul %28, %70, %cst_39 {dimension_numbers = #tpu.dot_dimension_numbers<[1], [0], [0], [1], [0, 0, 1, 1], [], []>} : vector<16x32xf32>, vector<32x16xf32>, vector<16x16xf32> -> vector<16x16xf32>
    %c0_40 = arith.constant 0 : index
    %c394 = arith.constant 394 : index
    %c0_41 = arith.constant 0 : index
    %72 = vector.load %arg3[%c0_40, %c394, %c0_41] : memref<1x400x128xf32, #tpu.memory_space<vmem>>, vector<1x1x16xf32>
    %73 = vector.shape_cast %72 : vector<1x1x16xf32> to vector<1x16xf32>
    %74 = vector.broadcast %73 : vector<1x16xf32> to vector<16x16xf32>
    %75 = arith.addf %71, %74 : vector<16x16xf32>
    %c0_42 = arith.constant 0 : index
    %c128 = arith.constant 128 : index
    %c0_43 = arith.constant 0 : index
    %76 = vector.load %arg3[%c0_42, %c128, %c0_43] : memref<1x400x128xf32, #tpu.memory_space<vmem>>, vector<1x32x16xf32>
    %77 = vector.shape_cast %76 : vector<1x32x16xf32> to vector<32x16xf32>
    %cst_44 = arith.constant dense<0.000000e+00> : vector<16x16xf32>
    %78 = tpu.matmul %28, %77, %cst_44 {dimension_numbers = #tpu.dot_dimension_numbers<[1], [0], [0], [1], [0, 0, 1, 1], [], []>} : vector<16x32xf32>, vector<32x16xf32>, vector<16x16xf32> -> vector<16x16xf32>
    %c0_45 = arith.constant 0 : index
    %c395 = arith.constant 395 : index
    %c0_46 = arith.constant 0 : index
    %79 = vector.load %arg3[%c0_45, %c395, %c0_46] : memref<1x400x128xf32, #tpu.memory_space<vmem>>, vector<1x1x16xf32>
    %80 = vector.shape_cast %79 : vector<1x1x16xf32> to vector<1x16xf32>
    %81 = vector.broadcast %80 : vector<1x16xf32> to vector<16x16xf32>
    %82 = arith.addf %78, %81 : vector<16x16xf32>
    %c0_47 = arith.constant 0 : index
    %c160 = arith.constant 160 : index
    %c0_48 = arith.constant 0 : index
    %83 = vector.load %arg3[%c0_47, %c160, %c0_48] : memref<1x400x128xf32, #tpu.memory_space<vmem>>, vector<1x32x16xf32>
    %84 = vector.shape_cast %83 : vector<1x32x16xf32> to vector<32x16xf32>
    %cst_49 = arith.constant dense<0.000000e+00> : vector<16x16xf32>
    %85 = tpu.matmul %28, %84, %cst_49 {dimension_numbers = #tpu.dot_dimension_numbers<[1], [0], [0], [1], [0, 0, 1, 1], [], []>} : vector<16x32xf32>, vector<32x16xf32>, vector<16x16xf32> -> vector<16x16xf32>
    %c0_50 = arith.constant 0 : index
    %c396 = arith.constant 396 : index
    %c0_51 = arith.constant 0 : index
    %86 = vector.load %arg3[%c0_50, %c396, %c0_51] : memref<1x400x128xf32, #tpu.memory_space<vmem>>, vector<1x1x16xf32>
    %87 = vector.shape_cast %86 : vector<1x1x16xf32> to vector<1x16xf32>
    %88 = vector.broadcast %87 : vector<1x16xf32> to vector<16x16xf32>
    %89 = arith.addf %85, %88 : vector<16x16xf32>
    %cst_52 = arith.constant dense<0.000000e+00> : vector<16x16xf32>
    %90 = tpu.matmul %75, %82, %cst_52 {dimension_numbers = #tpu.dot_dimension_numbers<[1], [1], [0], [0], [0, 0, 1, 0], [], []>} : vector<16x16xf32>, vector<16x16xf32>, vector<16x16xf32> -> vector<16x16xf32>
    %cst_53 = arith.constant 2.500000e-01 : f32
    %91 = vector.broadcast %cst_53 : f32 to vector<16x16xf32>
    %92 = arith.mulf %90, %91 : vector<16x16xf32>
    %93 = arith.addf %92, %4 : vector<16x16xf32>
    %cst_54 = arith.constant dense<0xFF800000> : vector<16xf32>
    %94 = vector.multi_reduction <maximumf>, %93, %cst_54 [1] : vector<16x16xf32> to vector<16xf32>
    %95 = vector.shape_cast %94 : vector<16xf32> to vector<16x1xf32>
    %96 = vector.broadcast %95 : vector<16x1xf32> to vector<16x16xf32>
    %97 = arith.subf %93, %96 : vector<16x16xf32>
    %98 = math.exp %97 : vector<16x16xf32>
    %cst_55 = arith.constant dense<0.000000e+00> : vector<16xf32>
    %99 = vector.multi_reduction <add>, %98, %cst_55 [1] : vector<16x16xf32> to vector<16xf32>
    %100 = vector.shape_cast %99 : vector<16xf32> to vector<16x1xf32>
    %101 = vector.broadcast %100 : vector<16x1xf32> to vector<16x16xf32>
    %102 = arith.divf %98, %101 : vector<16x16xf32>
    %cst_56 = arith.constant dense<0.000000e+00> : vector<16x16xf32>
    %103 = tpu.matmul %102, %89, %cst_56 {dimension_numbers = #tpu.dot_dimension_numbers<[1], [0], [0], [1], [0, 0, 1, 1], [], []>} : vector<16x16xf32>, vector<16x16xf32>, vector<16x16xf32> -> vector<16x16xf32>
    %c0_57 = arith.constant 0 : index
    %c208 = arith.constant 208 : index
    %c0_58 = arith.constant 0 : index
    %104 = vector.load %arg3[%c0_57, %c208, %c0_58] : memref<1x400x128xf32, #tpu.memory_space<vmem>>, vector<1x16x32xf32>
    %105 = vector.shape_cast %104 : vector<1x16x32xf32> to vector<16x32xf32>
    %cst_59 = arith.constant dense<0.000000e+00> : vector<16x32xf32>
    %106 = tpu.matmul %103, %105, %cst_59 {dimension_numbers = #tpu.dot_dimension_numbers<[1], [0], [0], [1], [0, 0, 1, 1], [], []>} : vector<16x16xf32>, vector<16x32xf32>, vector<16x32xf32> -> vector<16x32xf32>
    %107 = arith.addf %68, %106 : vector<16x32xf32>
    %108 = arith.addf %3, %107 : vector<16x32xf32>
    %c0_60 = arith.constant 0 : index
    %c388 = arith.constant 388 : index
    %c0_61 = arith.constant 0 : index
    %109 = vector.load %arg3[%c0_60, %c388, %c0_61] : memref<1x400x128xf32, #tpu.memory_space<vmem>>, vector<1x1x32xf32>
    %110 = vector.shape_cast %109 : vector<1x1x32xf32> to vector<1x32xf32>
    %111 = vector.broadcast %110 : vector<1x32xf32> to vector<16x32xf32>
    %112 = arith.addf %108, %111 : vector<16x32xf32>
    %c0_62 = arith.constant 0 : index
    %c386 = arith.constant 386 : index
    %c0_63 = arith.constant 0 : index
    %113 = vector.load %arg3[%c0_62, %c386, %c0_63] : memref<1x400x128xf32, #tpu.memory_space<vmem>>, vector<1x1x32xf32>
    %114 = vector.shape_cast %113 : vector<1x1x32xf32> to vector<1x32xf32>
    %c0_64 = arith.constant 0 : index
    %c387 = arith.constant 387 : index
    %c0_65 = arith.constant 0 : index
    %115 = vector.load %arg3[%c0_64, %c387, %c0_65] : memref<1x400x128xf32, #tpu.memory_space<vmem>>, vector<1x1x32xf32>
    %116 = vector.shape_cast %115 : vector<1x1x32xf32> to vector<1x32xf32>
    %cst_66 = arith.constant dense<0.000000e+00> : vector<16xf32>
    %117 = vector.multi_reduction <add>, %112, %cst_66 [1] : vector<16x32xf32> to vector<16xf32>
    %118 = vector.shape_cast %117 : vector<16xf32> to vector<16x1xf32>
    %cst_67 = arith.constant 3.200000e+01 : f32
    %119 = vector.broadcast %cst_67 : f32 to vector<16x1xf32>
    %120 = arith.divf %118, %119 : vector<16x1xf32>
    %121 = vector.broadcast %120 : vector<16x1xf32> to vector<16x32xf32>
    %122 = arith.subf %112, %121 : vector<16x32xf32>
    %123 = arith.mulf %122, %122 : vector<16x32xf32>
    %cst_68 = arith.constant dense<0.000000e+00> : vector<16xf32>
    %124 = vector.multi_reduction <add>, %123, %cst_68 [1] : vector<16x32xf32> to vector<16xf32>
    %125 = vector.shape_cast %124 : vector<16xf32> to vector<16x1xf32>
    %cst_69 = arith.constant 3.200000e+01 : f32
    %126 = vector.broadcast %cst_69 : f32 to vector<16x1xf32>
    %127 = arith.divf %125, %126 : vector<16x1xf32>
    %cst_70 = arith.constant 9.99999974E-6 : f32
    %128 = vector.broadcast %cst_70 : f32 to vector<16x1xf32>
    %129 = arith.addf %127, %128 : vector<16x1xf32>
    %130 = math.rsqrt %129 : vector<16x1xf32>
    %131 = vector.broadcast %130 : vector<16x1xf32> to vector<16x32xf32>
    %132 = arith.mulf %122, %131 : vector<16x32xf32>
    %133 = vector.broadcast %114 : vector<1x32xf32> to vector<16x32xf32>
    %134 = arith.mulf %132, %133 : vector<16x32xf32>
    %135 = vector.broadcast %116 : vector<1x32xf32> to vector<16x32xf32>
    %136 = arith.addf %134, %135 : vector<16x32xf32>
    %c0_71 = arith.constant 0 : index
    %c224 = arith.constant 224 : index
    %c0_72 = arith.constant 0 : index
    %137 = vector.load %arg3[%c0_71, %c224, %c0_72] : memref<1x400x128xf32, #tpu.memory_space<vmem>>, vector<1x32x128xf32>
    %138 = vector.shape_cast %137 : vector<1x32x128xf32> to vector<32x128xf32>
    %cst_73 = arith.constant dense<0.000000e+00> : vector<16x128xf32>
    %139 = tpu.matmul %136, %138, %cst_73 {dimension_numbers = #tpu.dot_dimension_numbers<[1], [0], [0], [1], [0, 0, 1, 1], [], []>} : vector<16x32xf32>, vector<32x128xf32>, vector<16x128xf32> -> vector<16x128xf32>
    %c0_74 = arith.constant 0 : index
    %c389 = arith.constant 389 : index
    %c0_75 = arith.constant 0 : index
    %140 = vector.load %arg3[%c0_74, %c389, %c0_75] : memref<1x400x128xf32, #tpu.memory_space<vmem>>, vector<1x1x128xf32>
    %141 = vector.shape_cast %140 : vector<1x1x128xf32> to vector<1x128xf32>
    %142 = vector.broadcast %141 : vector<1x128xf32> to vector<16x128xf32>
    %143 = arith.addf %139, %142 : vector<16x128xf32>
    %cst_76 = arith.constant 1.702000e+00 : f32
    %144 = vector.broadcast %cst_76 : f32 to vector<16x128xf32>
    %145 = arith.mulf %144, %143 : vector<16x128xf32>
    %146 = arith.negf %145 : vector<16x128xf32>
    %147 = math.exp %146 : vector<16x128xf32>
    %cst_77 = arith.constant 1.000000e+00 : f32
    %148 = vector.broadcast %cst_77 : f32 to vector<16x128xf32>
    %149 = arith.addf %148, %147 : vector<16x128xf32>
    %150 = arith.divf %148, %149 : vector<16x128xf32>
    %151 = arith.mulf %143, %150 : vector<16x128xf32>
    %c0_78 = arith.constant 0 : index
    %c256 = arith.constant 256 : index
    %c0_79 = arith.constant 0 : index
    %152 = vector.load %arg3[%c0_78, %c256, %c0_79] : memref<1x400x128xf32, #tpu.memory_space<vmem>>, vector<1x128x32xf32>
    %153 = vector.shape_cast %152 : vector<1x128x32xf32> to vector<128x32xf32>
    %cst_80 = arith.constant dense<0.000000e+00> : vector<16x32xf32>
    %154 = tpu.matmul %151, %153, %cst_80 {dimension_numbers = #tpu.dot_dimension_numbers<[1], [0], [0], [1], [0, 0, 1, 1], [], []>} : vector<16x128xf32>, vector<128x32xf32>, vector<16x32xf32> -> vector<16x32xf32>
    %c0_81 = arith.constant 0 : index
    %c390 = arith.constant 390 : index
    %c0_82 = arith.constant 0 : index
    %155 = vector.load %arg3[%c0_81, %c390, %c0_82] : memref<1x400x128xf32, #tpu.memory_space<vmem>>, vector<1x1x32xf32>
    %156 = vector.shape_cast %155 : vector<1x1x32xf32> to vector<1x32xf32>
    %157 = vector.broadcast %156 : vector<1x32xf32> to vector<16x32xf32>
    %158 = arith.addf %154, %157 : vector<16x32xf32>
    %159 = arith.addf %112, %158 : vector<16x32xf32>
    %c0_83 = arith.constant 0 : index
    %c0_84 = arith.constant 0 : index
    %160 = vector.load %arg4[%c0_83, %c0_84] : memref<16x32xf32, #tpu.memory_space<vmem>>, vector<16x32xf32>
    tpu.vector_store %arg4[%c0_83, %c0_84], %159 {strides = array<i32>} : memref<16x32xf32, #tpu.memory_space<vmem>>, vector<16x32xf32>,
    return
  }
  func.func @transform_0(%arg0: i32) -> (i32, i32) {
    %c0_i32 = arith.constant 0 : i32
    %c0_i32_0 = arith.constant 0 : i32
    %c0_i32_1 = arith.constant 0 : i32
    return %c0_i32, %c0_i32_0 : i32, i32
  }
  func.func @transform_1(%arg0: i32) -> (i32, i32) {
    %c0_i32 = arith.constant 0 : i32
    %c0_i32_0 = arith.constant 0 : i32
    %c0_i32_1 = arith.constant 0 : i32
    return %c0_i32, %c0_i32_0 : i32, i32
  }
  func.func @transform_2(%arg0: i32) -> (i32, i32, i32) {
    %c0_i32 = arith.constant 0 : i32
    %c0_i32_0 = arith.constant 0 : i32
    %c0_i32_1 = arith.constant 0 : i32
    return %arg0, %c0_i32, %c0_i32_0 : i32, i32, i32
  }
  func.func @transform_3(%arg0: i32) -> (i32, i32) {
    %c0_i32 = arith.constant 0 : i32
    %c0_i32_0 = arith.constant 0 : i32
    %c0_i32_1 = arith.constant 0 : i32
    return %c0_i32, %c0_i32_0 : i32, i32
  }
}

module attributes {stable_mosaic.version = 11 : i64} {
  func.func @_vision_tower_kernel(%arg0: i32, %arg1: memref<32x48xf32, #tpu.memory_space<vmem>>, %arg2: memref<68x32xf32, #tpu.memory_space<vmem>>, %arg3: memref<34x34xf32, #tpu.memory_space<vmem>>, %arg4: memref<1x400x128xf32, #tpu.memory_space<vmem>>, %arg5: memref<34x32xf32, #tpu.memory_space<vmem>>) attributes {dimension_semantics = [#tpu.dimension_semantics<arbitrary>], iteration_bounds = array<i64: 2>, scalar_prefetch = 0 : i64, scratch_operands = 0 : i64, tpu.core_type = #tpu.core_type<tc>, window_params = [{pipeline_mode = #tpu.pipeline_mode<synchronous>, transform_indices = @transform_0, window_bounds = array<i64: 32, 48>}, {pipeline_mode = #tpu.pipeline_mode<synchronous>, transform_indices = @transform_1, window_bounds = array<i64: 68, 32>}, {pipeline_mode = #tpu.pipeline_mode<synchronous>, transform_indices = @transform_2, window_bounds = array<i64: 34, 34>}, {transform_indices = @transform_3, window_bounds = array<i64: 1, 400, 128>}, {pipeline_mode = #tpu.pipeline_mode<synchronous>, transform_indices = @transform_4, window_bounds = array<i64: 34, 32>}]} {
    %c0_i32 = arith.constant 0 : i32
    %0 = arith.cmpi eq, %arg0, %c0_i32 : i32
    %1 = arith.extui %0 : i1 to i32
    %c0_i32_0 = arith.constant 0 : i32
    %2 = arith.cmpi ne, %1, %c0_i32_0 : i32
    scf.if %2 {
      %c0_85 = arith.constant 0 : index
      %c0_86 = arith.constant 0 : index
      %161 = vector.load %arg2[%c0_85, %c0_86] : memref<68x32xf32, #tpu.memory_space<vmem>>, vector<48x32xf32>
      %c48 = arith.constant 48 : index
      %c0_87 = arith.constant 0 : index
      %162 = vector.load %arg2[%c48, %c0_87] : memref<68x32xf32, #tpu.memory_space<vmem>>, vector<1x32xf32>
      %c49 = arith.constant 49 : index
      %c0_88 = arith.constant 0 : index
      %163 = vector.load %arg2[%c49, %c0_88] : memref<68x32xf32, #tpu.memory_space<vmem>>, vector<1x32xf32>
      %c50 = arith.constant 50 : index
      %c0_89 = arith.constant 0 : index
      %164 = vector.load %arg2[%c50, %c0_89] : memref<68x32xf32, #tpu.memory_space<vmem>>, vector<16x32xf32>
      %c66 = arith.constant 66 : index
      %c0_90 = arith.constant 0 : index
      %165 = vector.load %arg2[%c66, %c0_90] : memref<68x32xf32, #tpu.memory_space<vmem>>, vector<1x32xf32>
      %c67 = arith.constant 67 : index
      %c0_91 = arith.constant 0 : index
      %166 = vector.load %arg2[%c67, %c0_91] : memref<68x32xf32, #tpu.memory_space<vmem>>, vector<1x32xf32>
      %c0_92 = arith.constant 0 : index
      %c0_93 = arith.constant 0 : index
      %167 = vector.load %arg1[%c0_92, %c0_93] : memref<32x48xf32, #tpu.memory_space<vmem>>, vector<32x48xf32>
      %cst_94 = arith.constant dense<0.000000e+00> : vector<32x32xf32>
      %168 = tpu.matmul %167, %161, %cst_94 {dimension_numbers = #tpu.dot_dimension_numbers<[1], [0], [0], [1], [0, 0, 1, 1], [], []>} : vector<32x48xf32>, vector<48x32xf32>, vector<32x32xf32> -> vector<32x32xf32>
      %169 = arith.addf %162, %163 : vector<1x32xf32>
      %170 = vector.extract_strided_slice %168 {offsets = [0, 0], sizes = [16, 32], strides = [1, 1]} : vector<32x32xf32> to vector<16x32xf32>
      %171 = arith.addf %170, %164 : vector<16x32xf32>
      %172 = arith.addf %162, %163 : vector<1x32xf32>
      %173 = vector.extract_strided_slice %168 {offsets = [16, 0], sizes = [16, 32], strides = [1, 1]} : vector<32x32xf32> to vector<16x32xf32>
      %174 = arith.addf %173, %164 : vector<16x32xf32>
      %175 = tpu.concatenate %169, %171, %172, %174 in 0 : vector<1x32xf32>, vector<16x32xf32>, vector<1x32xf32>, vector<16x32xf32> -> vector<34x32xf32>
      %cst_95 = arith.constant dense<0.000000e+00> : vector<34xf32>
      %176 = vector.multi_reduction <add>, %175, %cst_95 [1] : vector<34x32xf32> to vector<34xf32>
      %177 = vector.shape_cast %176 : vector<34xf32> to vector<34x1xf32>
      %cst_96 = arith.constant 3.200000e+01 : f32
      %178 = vector.broadcast %cst_96 : f32 to vector<34x1xf32>
      %179 = arith.divf %177, %178 : vector<34x1xf32>
      %180 = vector.broadcast %179 : vector<34x1xf32> to vector<34x32xf32>
      %181 = arith.subf %175, %180 : vector<34x32xf32>
      %182 = arith.mulf %181, %181 : vector<34x32xf32>
      %cst_97 = arith.constant dense<0.000000e+00> : vector<34xf32>
      %183 = vector.multi_reduction <add>, %182, %cst_97 [1] : vector<34x32xf32> to vector<34xf32>
      %184 = vector.shape_cast %183 : vector<34xf32> to vector<34x1xf32>
      %cst_98 = arith.constant 3.200000e+01 : f32
      %185 = vector.broadcast %cst_98 : f32 to vector<34x1xf32>
      %186 = arith.divf %184, %185 : vector<34x1xf32>
      %cst_99 = arith.constant 9.99999974E-6 : f32
      %187 = vector.broadcast %cst_99 : f32 to vector<34x1xf32>
      %188 = arith.addf %186, %187 : vector<34x1xf32>
      %189 = math.rsqrt %188 : vector<34x1xf32>
      %190 = vector.broadcast %189 : vector<34x1xf32> to vector<34x32xf32>
      %191 = arith.mulf %181, %190 : vector<34x32xf32>
      %192 = vector.broadcast %165 : vector<1x32xf32> to vector<34x32xf32>
      %193 = arith.mulf %191, %192 : vector<34x32xf32>
      %194 = vector.broadcast %166 : vector<1x32xf32> to vector<34x32xf32>
      %195 = arith.addf %193, %194 : vector<34x32xf32>
      %c0_100 = arith.constant 0 : index
      %c0_101 = arith.constant 0 : index
      %196 = vector.load %arg5[%c0_100, %c0_101] : memref<34x32xf32, #tpu.memory_space<vmem>>, vector<34x32xf32>
      tpu.vector_store %arg5[%c0_100, %c0_101], %195 {strides = array<i32>} : memref<34x32xf32, #tpu.memory_space<vmem>>, vector<34x32xf32>,
    } else {
    }
    %c0 = arith.constant 0 : index
    %c0_1 = arith.constant 0 : index
    %3 = vector.load %arg5[%c0, %c0_1] : memref<34x32xf32, #tpu.memory_space<vmem>>, vector<34x32xf32>
    %c0_2 = arith.constant 0 : index
    %c0_3 = arith.constant 0 : index
    %4 = vector.load %arg3[%c0_2, %c0_3] : memref<34x34xf32, #tpu.memory_space<vmem>>, vector<34x34xf32>
    %c0_4 = arith.constant 0 : index
    %c384 = arith.constant 384 : index
    %c0_5 = arith.constant 0 : index
    %5 = vector.load %arg4[%c0_4, %c384, %c0_5] : memref<1x400x128xf32, #tpu.memory_space<vmem>>, vector<1x1x32xf32>
    %6 = vector.shape_cast %5 : vector<1x1x32xf32> to vector<1x32xf32>
    %c0_6 = arith.constant 0 : index
    %c385 = arith.constant 385 : index
    %c0_7 = arith.constant 0 : index
    %7 = vector.load %arg4[%c0_6, %c385, %c0_7] : memref<1x400x128xf32, #tpu.memory_space<vmem>>, vector<1x1x32xf32>
    %8 = vector.shape_cast %7 : vector<1x1x32xf32> to vector<1x32xf32>
    %cst = arith.constant dense<0.000000e+00> : vector<34xf32>
    %9 = vector.multi_reduction <add>, %3, %cst [1] : vector<34x32xf32> to vector<34xf32>
    %10 = vector.shape_cast %9 : vector<34xf32> to vector<34x1xf32>
    %cst_8 = arith.constant 3.200000e+01 : f32
    %11 = vector.broadcast %cst_8 : f32 to vector<34x1xf32>
    %12 = arith.divf %10, %11 : vector<34x1xf32>
    %13 = vector.broadcast %12 : vector<34x1xf32> to vector<34x32xf32>
    %14 = arith.subf %3, %13 : vector<34x32xf32>
    %15 = arith.mulf %14, %14 : vector<34x32xf32>
    %cst_9 = arith.constant dense<0.000000e+00> : vector<34xf32>
    %16 = vector.multi_reduction <add>, %15, %cst_9 [1] : vector<34x32xf32> to vector<34xf32>
    %17 = vector.shape_cast %16 : vector<34xf32> to vector<34x1xf32>
    %cst_10 = arith.constant 3.200000e+01 : f32
    %18 = vector.broadcast %cst_10 : f32 to vector<34x1xf32>
    %19 = arith.divf %17, %18 : vector<34x1xf32>
    %cst_11 = arith.constant 9.99999974E-6 : f32
    %20 = vector.broadcast %cst_11 : f32 to vector<34x1xf32>
    %21 = arith.addf %19, %20 : vector<34x1xf32>
    %22 = math.rsqrt %21 : vector<34x1xf32>
    %23 = vector.broadcast %22 : vector<34x1xf32> to vector<34x32xf32>
    %24 = arith.mulf %14, %23 : vector<34x32xf32>
    %25 = vector.broadcast %6 : vector<1x32xf32> to vector<34x32xf32>
    %26 = arith.mulf %24, %25 : vector<34x32xf32>
    %27 = vector.broadcast %8 : vector<1x32xf32> to vector<34x32xf32>
    %28 = arith.addf %26, %27 : vector<34x32xf32>
    %cst_12 = arith.constant 0.000000e+00 : f32
    %29 = vector.broadcast %cst_12 : f32 to vector<34x32xf32>
    %c0_13 = arith.constant 0 : index
    %c0_14 = arith.constant 0 : index
    %c0_15 = arith.constant 0 : index
    %30 = vector.load %arg4[%c0_13, %c0_14, %c0_15] : memref<1x400x128xf32, #tpu.memory_space<vmem>>, vector<1x32x16xf32>
    %31 = vector.shape_cast %30 : vector<1x32x16xf32> to vector<32x16xf32>
    %cst_16 = arith.constant dense<0.000000e+00> : vector<34x16xf32>
    %32 = tpu.matmul %28, %31, %cst_16 {dimension_numbers = #tpu.dot_dimension_numbers<[1], [0], [0], [1], [0, 0, 1, 1], [], []>} : vector<34x32xf32>, vector<32x16xf32>, vector<34x16xf32> -> vector<34x16xf32>
    %c0_17 = arith.constant 0 : index
    %c391 = arith.constant 391 : index
    %c0_18 = arith.constant 0 : index
    %33 = vector.load %arg4[%c0_17, %c391, %c0_18] : memref<1x400x128xf32, #tpu.memory_space<vmem>>, vector<1x1x16xf32>
    %34 = vector.shape_cast %33 : vector<1x1x16xf32> to vector<1x16xf32>
    %35 = vector.broadcast %34 : vector<1x16xf32> to vector<34x16xf32>
    %36 = arith.addf %32, %35 : vector<34x16xf32>
    %c0_19 = arith.constant 0 : index
    %c32 = arith.constant 32 : index
    %c0_20 = arith.constant 0 : index
    %37 = vector.load %arg4[%c0_19, %c32, %c0_20] : memref<1x400x128xf32, #tpu.memory_space<vmem>>, vector<1x32x16xf32>
    %38 = vector.shape_cast %37 : vector<1x32x16xf32> to vector<32x16xf32>
    %cst_21 = arith.constant dense<0.000000e+00> : vector<34x16xf32>
    %39 = tpu.matmul %28, %38, %cst_21 {dimension_numbers = #tpu.dot_dimension_numbers<[1], [0], [0], [1], [0, 0, 1, 1], [], []>} : vector<34x32xf32>, vector<32x16xf32>, vector<34x16xf32> -> vector<34x16xf32>
    %c0_22 = arith.constant 0 : index
    %c392 = arith.constant 392 : index
    %c0_23 = arith.constant 0 : index
    %40 = vector.load %arg4[%c0_22, %c392, %c0_23] : memref<1x400x128xf32, #tpu.memory_space<vmem>>, vector<1x1x16xf32>
    %41 = vector.shape_cast %40 : vector<1x1x16xf32> to vector<1x16xf32>
    %42 = vector.broadcast %41 : vector<1x16xf32> to vector<34x16xf32>
    %43 = arith.addf %39, %42 : vector<34x16xf32>
    %c0_24 = arith.constant 0 : index
    %c64 = arith.constant 64 : index
    %c0_25 = arith.constant 0 : index
    %44 = vector.load %arg4[%c0_24, %c64, %c0_25] : memref<1x400x128xf32, #tpu.memory_space<vmem>>, vector<1x32x16xf32>
    %45 = vector.shape_cast %44 : vector<1x32x16xf32> to vector<32x16xf32>
    %cst_26 = arith.constant dense<0.000000e+00> : vector<34x16xf32>
    %46 = tpu.matmul %28, %45, %cst_26 {dimension_numbers = #tpu.dot_dimension_numbers<[1], [0], [0], [1], [0, 0, 1, 1], [], []>} : vector<34x32xf32>, vector<32x16xf32>, vector<34x16xf32> -> vector<34x16xf32>
    %c0_27 = arith.constant 0 : index
    %c393 = arith.constant 393 : index
    %c0_28 = arith.constant 0 : index
    %47 = vector.load %arg4[%c0_27, %c393, %c0_28] : memref<1x400x128xf32, #tpu.memory_space<vmem>>, vector<1x1x16xf32>
    %48 = vector.shape_cast %47 : vector<1x1x16xf32> to vector<1x16xf32>
    %49 = vector.broadcast %48 : vector<1x16xf32> to vector<34x16xf32>
    %50 = arith.addf %46, %49 : vector<34x16xf32>
    %cst_29 = arith.constant dense<0.000000e+00> : vector<34x34xf32>
    %51 = tpu.matmul %36, %43, %cst_29 {dimension_numbers = #tpu.dot_dimension_numbers<[1], [1], [0], [0], [0, 0, 1, 0], [], []>} : vector<34x16xf32>, vector<34x16xf32>, vector<34x34xf32> -> vector<34x34xf32>
    %cst_30 = arith.constant 2.500000e-01 : f32
    %52 = vector.broadcast %cst_30 : f32 to vector<34x34xf32>
    %53 = arith.mulf %51, %52 : vector<34x34xf32>
    %54 = arith.addf %53, %4 : vector<34x34xf32>
    %cst_31 = arith.constant dense<0xFF800000> : vector<34xf32>
    %55 = vector.multi_reduction <maximumf>, %54, %cst_31 [1] : vector<34x34xf32> to vector<34xf32>
    %56 = vector.shape_cast %55 : vector<34xf32> to vector<34x1xf32>
    %57 = vector.broadcast %56 : vector<34x1xf32> to vector<34x34xf32>
    %58 = arith.subf %54, %57 : vector<34x34xf32>
    %59 = math.exp %58 : vector<34x34xf32>
    %cst_32 = arith.constant dense<0.000000e+00> : vector<34xf32>
    %60 = vector.multi_reduction <add>, %59, %cst_32 [1] : vector<34x34xf32> to vector<34xf32>
    %61 = vector.shape_cast %60 : vector<34xf32> to vector<34x1xf32>
    %62 = vector.broadcast %61 : vector<34x1xf32> to vector<34x34xf32>
    %63 = arith.divf %59, %62 : vector<34x34xf32>
    %cst_33 = arith.constant dense<0.000000e+00> : vector<34x16xf32>
    %64 = tpu.matmul %63, %50, %cst_33 {dimension_numbers = #tpu.dot_dimension_numbers<[1], [0], [0], [1], [0, 0, 1, 1], [], []>} : vector<34x34xf32>, vector<34x16xf32>, vector<34x16xf32> -> vector<34x16xf32>
    %c0_34 = arith.constant 0 : index
    %c192 = arith.constant 192 : index
    %c0_35 = arith.constant 0 : index
    %65 = vector.load %arg4[%c0_34, %c192, %c0_35] : memref<1x400x128xf32, #tpu.memory_space<vmem>>, vector<1x16x32xf32>
    %66 = vector.shape_cast %65 : vector<1x16x32xf32> to vector<16x32xf32>
    %cst_36 = arith.constant dense<0.000000e+00> : vector<34x32xf32>
    %67 = tpu.matmul %64, %66, %cst_36 {dimension_numbers = #tpu.dot_dimension_numbers<[1], [0], [0], [1], [0, 0, 1, 1], [], []>} : vector<34x16xf32>, vector<16x32xf32>, vector<34x32xf32> -> vector<34x32xf32>
    %68 = arith.addf %29, %67 : vector<34x32xf32>
    %c0_37 = arith.constant 0 : index
    %c96 = arith.constant 96 : index
    %c0_38 = arith.constant 0 : index
    %69 = vector.load %arg4[%c0_37, %c96, %c0_38] : memref<1x400x128xf32, #tpu.memory_space<vmem>>, vector<1x32x16xf32>
    %70 = vector.shape_cast %69 : vector<1x32x16xf32> to vector<32x16xf32>
    %cst_39 = arith.constant dense<0.000000e+00> : vector<34x16xf32>
    %71 = tpu.matmul %28, %70, %cst_39 {dimension_numbers = #tpu.dot_dimension_numbers<[1], [0], [0], [1], [0, 0, 1, 1], [], []>} : vector<34x32xf32>, vector<32x16xf32>, vector<34x16xf32> -> vector<34x16xf32>
    %c0_40 = arith.constant 0 : index
    %c394 = arith.constant 394 : index
    %c0_41 = arith.constant 0 : index
    %72 = vector.load %arg4[%c0_40, %c394, %c0_41] : memref<1x400x128xf32, #tpu.memory_space<vmem>>, vector<1x1x16xf32>
    %73 = vector.shape_cast %72 : vector<1x1x16xf32> to vector<1x16xf32>
    %74 = vector.broadcast %73 : vector<1x16xf32> to vector<34x16xf32>
    %75 = arith.addf %71, %74 : vector<34x16xf32>
    %c0_42 = arith.constant 0 : index
    %c128 = arith.constant 128 : index
    %c0_43 = arith.constant 0 : index
    %76 = vector.load %arg4[%c0_42, %c128, %c0_43] : memref<1x400x128xf32, #tpu.memory_space<vmem>>, vector<1x32x16xf32>
    %77 = vector.shape_cast %76 : vector<1x32x16xf32> to vector<32x16xf32>
    %cst_44 = arith.constant dense<0.000000e+00> : vector<34x16xf32>
    %78 = tpu.matmul %28, %77, %cst_44 {dimension_numbers = #tpu.dot_dimension_numbers<[1], [0], [0], [1], [0, 0, 1, 1], [], []>} : vector<34x32xf32>, vector<32x16xf32>, vector<34x16xf32> -> vector<34x16xf32>
    %c0_45 = arith.constant 0 : index
    %c395 = arith.constant 395 : index
    %c0_46 = arith.constant 0 : index
    %79 = vector.load %arg4[%c0_45, %c395, %c0_46] : memref<1x400x128xf32, #tpu.memory_space<vmem>>, vector<1x1x16xf32>
    %80 = vector.shape_cast %79 : vector<1x1x16xf32> to vector<1x16xf32>
    %81 = vector.broadcast %80 : vector<1x16xf32> to vector<34x16xf32>
    %82 = arith.addf %78, %81 : vector<34x16xf32>
    %c0_47 = arith.constant 0 : index
    %c160 = arith.constant 160 : index
    %c0_48 = arith.constant 0 : index
    %83 = vector.load %arg4[%c0_47, %c160, %c0_48] : memref<1x400x128xf32, #tpu.memory_space<vmem>>, vector<1x32x16xf32>
    %84 = vector.shape_cast %83 : vector<1x32x16xf32> to vector<32x16xf32>
    %cst_49 = arith.constant dense<0.000000e+00> : vector<34x16xf32>
    %85 = tpu.matmul %28, %84, %cst_49 {dimension_numbers = #tpu.dot_dimension_numbers<[1], [0], [0], [1], [0, 0, 1, 1], [], []>} : vector<34x32xf32>, vector<32x16xf32>, vector<34x16xf32> -> vector<34x16xf32>
    %c0_50 = arith.constant 0 : index
    %c396 = arith.constant 396 : index
    %c0_51 = arith.constant 0 : index
    %86 = vector.load %arg4[%c0_50, %c396, %c0_51] : memref<1x400x128xf32, #tpu.memory_space<vmem>>, vector<1x1x16xf32>
    %87 = vector.shape_cast %86 : vector<1x1x16xf32> to vector<1x16xf32>
    %88 = vector.broadcast %87 : vector<1x16xf32> to vector<34x16xf32>
    %89 = arith.addf %85, %88 : vector<34x16xf32>
    %cst_52 = arith.constant dense<0.000000e+00> : vector<34x34xf32>
    %90 = tpu.matmul %75, %82, %cst_52 {dimension_numbers = #tpu.dot_dimension_numbers<[1], [1], [0], [0], [0, 0, 1, 0], [], []>} : vector<34x16xf32>, vector<34x16xf32>, vector<34x34xf32> -> vector<34x34xf32>
    %cst_53 = arith.constant 2.500000e-01 : f32
    %91 = vector.broadcast %cst_53 : f32 to vector<34x34xf32>
    %92 = arith.mulf %90, %91 : vector<34x34xf32>
    %93 = arith.addf %92, %4 : vector<34x34xf32>
    %cst_54 = arith.constant dense<0xFF800000> : vector<34xf32>
    %94 = vector.multi_reduction <maximumf>, %93, %cst_54 [1] : vector<34x34xf32> to vector<34xf32>
    %95 = vector.shape_cast %94 : vector<34xf32> to vector<34x1xf32>
    %96 = vector.broadcast %95 : vector<34x1xf32> to vector<34x34xf32>
    %97 = arith.subf %93, %96 : vector<34x34xf32>
    %98 = math.exp %97 : vector<34x34xf32>
    %cst_55 = arith.constant dense<0.000000e+00> : vector<34xf32>
    %99 = vector.multi_reduction <add>, %98, %cst_55 [1] : vector<34x34xf32> to vector<34xf32>
    %100 = vector.shape_cast %99 : vector<34xf32> to vector<34x1xf32>
    %101 = vector.broadcast %100 : vector<34x1xf32> to vector<34x34xf32>
    %102 = arith.divf %98, %101 : vector<34x34xf32>
    %cst_56 = arith.constant dense<0.000000e+00> : vector<34x16xf32>
    %103 = tpu.matmul %102, %89, %cst_56 {dimension_numbers = #tpu.dot_dimension_numbers<[1], [0], [0], [1], [0, 0, 1, 1], [], []>} : vector<34x34xf32>, vector<34x16xf32>, vector<34x16xf32> -> vector<34x16xf32>
    %c0_57 = arith.constant 0 : index
    %c208 = arith.constant 208 : index
    %c0_58 = arith.constant 0 : index
    %104 = vector.load %arg4[%c0_57, %c208, %c0_58] : memref<1x400x128xf32, #tpu.memory_space<vmem>>, vector<1x16x32xf32>
    %105 = vector.shape_cast %104 : vector<1x16x32xf32> to vector<16x32xf32>
    %cst_59 = arith.constant dense<0.000000e+00> : vector<34x32xf32>
    %106 = tpu.matmul %103, %105, %cst_59 {dimension_numbers = #tpu.dot_dimension_numbers<[1], [0], [0], [1], [0, 0, 1, 1], [], []>} : vector<34x16xf32>, vector<16x32xf32>, vector<34x32xf32> -> vector<34x32xf32>
    %107 = arith.addf %68, %106 : vector<34x32xf32>
    %108 = arith.addf %3, %107 : vector<34x32xf32>
    %c0_60 = arith.constant 0 : index
    %c388 = arith.constant 388 : index
    %c0_61 = arith.constant 0 : index
    %109 = vector.load %arg4[%c0_60, %c388, %c0_61] : memref<1x400x128xf32, #tpu.memory_space<vmem>>, vector<1x1x32xf32>
    %110 = vector.shape_cast %109 : vector<1x1x32xf32> to vector<1x32xf32>
    %111 = vector.broadcast %110 : vector<1x32xf32> to vector<34x32xf32>
    %112 = arith.addf %108, %111 : vector<34x32xf32>
    %c0_62 = arith.constant 0 : index
    %c386 = arith.constant 386 : index
    %c0_63 = arith.constant 0 : index
    %113 = vector.load %arg4[%c0_62, %c386, %c0_63] : memref<1x400x128xf32, #tpu.memory_space<vmem>>, vector<1x1x32xf32>
    %114 = vector.shape_cast %113 : vector<1x1x32xf32> to vector<1x32xf32>
    %c0_64 = arith.constant 0 : index
    %c387 = arith.constant 387 : index
    %c0_65 = arith.constant 0 : index
    %115 = vector.load %arg4[%c0_64, %c387, %c0_65] : memref<1x400x128xf32, #tpu.memory_space<vmem>>, vector<1x1x32xf32>
    %116 = vector.shape_cast %115 : vector<1x1x32xf32> to vector<1x32xf32>
    %cst_66 = arith.constant dense<0.000000e+00> : vector<34xf32>
    %117 = vector.multi_reduction <add>, %112, %cst_66 [1] : vector<34x32xf32> to vector<34xf32>
    %118 = vector.shape_cast %117 : vector<34xf32> to vector<34x1xf32>
    %cst_67 = arith.constant 3.200000e+01 : f32
    %119 = vector.broadcast %cst_67 : f32 to vector<34x1xf32>
    %120 = arith.divf %118, %119 : vector<34x1xf32>
    %121 = vector.broadcast %120 : vector<34x1xf32> to vector<34x32xf32>
    %122 = arith.subf %112, %121 : vector<34x32xf32>
    %123 = arith.mulf %122, %122 : vector<34x32xf32>
    %cst_68 = arith.constant dense<0.000000e+00> : vector<34xf32>
    %124 = vector.multi_reduction <add>, %123, %cst_68 [1] : vector<34x32xf32> to vector<34xf32>
    %125 = vector.shape_cast %124 : vector<34xf32> to vector<34x1xf32>
    %cst_69 = arith.constant 3.200000e+01 : f32
    %126 = vector.broadcast %cst_69 : f32 to vector<34x1xf32>
    %127 = arith.divf %125, %126 : vector<34x1xf32>
    %cst_70 = arith.constant 9.99999974E-6 : f32
    %128 = vector.broadcast %cst_70 : f32 to vector<34x1xf32>
    %129 = arith.addf %127, %128 : vector<34x1xf32>
    %130 = math.rsqrt %129 : vector<34x1xf32>
    %131 = vector.broadcast %130 : vector<34x1xf32> to vector<34x32xf32>
    %132 = arith.mulf %122, %131 : vector<34x32xf32>
    %133 = vector.broadcast %114 : vector<1x32xf32> to vector<34x32xf32>
    %134 = arith.mulf %132, %133 : vector<34x32xf32>
    %135 = vector.broadcast %116 : vector<1x32xf32> to vector<34x32xf32>
    %136 = arith.addf %134, %135 : vector<34x32xf32>
    %c0_71 = arith.constant 0 : index
    %c224 = arith.constant 224 : index
    %c0_72 = arith.constant 0 : index
    %137 = vector.load %arg4[%c0_71, %c224, %c0_72] : memref<1x400x128xf32, #tpu.memory_space<vmem>>, vector<1x32x128xf32>
    %138 = vector.shape_cast %137 : vector<1x32x128xf32> to vector<32x128xf32>
    %cst_73 = arith.constant dense<0.000000e+00> : vector<34x128xf32>
    %139 = tpu.matmul %136, %138, %cst_73 {dimension_numbers = #tpu.dot_dimension_numbers<[1], [0], [0], [1], [0, 0, 1, 1], [], []>} : vector<34x32xf32>, vector<32x128xf32>, vector<34x128xf32> -> vector<34x128xf32>
    %c0_74 = arith.constant 0 : index
    %c389 = arith.constant 389 : index
    %c0_75 = arith.constant 0 : index
    %140 = vector.load %arg4[%c0_74, %c389, %c0_75] : memref<1x400x128xf32, #tpu.memory_space<vmem>>, vector<1x1x128xf32>
    %141 = vector.shape_cast %140 : vector<1x1x128xf32> to vector<1x128xf32>
    %142 = vector.broadcast %141 : vector<1x128xf32> to vector<34x128xf32>
    %143 = arith.addf %139, %142 : vector<34x128xf32>
    %cst_76 = arith.constant 1.702000e+00 : f32
    %144 = vector.broadcast %cst_76 : f32 to vector<34x128xf32>
    %145 = arith.mulf %144, %143 : vector<34x128xf32>
    %146 = arith.negf %145 : vector<34x128xf32>
    %147 = math.exp %146 : vector<34x128xf32>
    %cst_77 = arith.constant 1.000000e+00 : f32
    %148 = vector.broadcast %cst_77 : f32 to vector<34x128xf32>
    %149 = arith.addf %148, %147 : vector<34x128xf32>
    %150 = arith.divf %148, %149 : vector<34x128xf32>
    %151 = arith.mulf %143, %150 : vector<34x128xf32>
    %c0_78 = arith.constant 0 : index
    %c256 = arith.constant 256 : index
    %c0_79 = arith.constant 0 : index
    %152 = vector.load %arg4[%c0_78, %c256, %c0_79] : memref<1x400x128xf32, #tpu.memory_space<vmem>>, vector<1x128x32xf32>
    %153 = vector.shape_cast %152 : vector<1x128x32xf32> to vector<128x32xf32>
    %cst_80 = arith.constant dense<0.000000e+00> : vector<34x32xf32>
    %154 = tpu.matmul %151, %153, %cst_80 {dimension_numbers = #tpu.dot_dimension_numbers<[1], [0], [0], [1], [0, 0, 1, 1], [], []>} : vector<34x128xf32>, vector<128x32xf32>, vector<34x32xf32> -> vector<34x32xf32>
    %c0_81 = arith.constant 0 : index
    %c390 = arith.constant 390 : index
    %c0_82 = arith.constant 0 : index
    %155 = vector.load %arg4[%c0_81, %c390, %c0_82] : memref<1x400x128xf32, #tpu.memory_space<vmem>>, vector<1x1x32xf32>
    %156 = vector.shape_cast %155 : vector<1x1x32xf32> to vector<1x32xf32>
    %157 = vector.broadcast %156 : vector<1x32xf32> to vector<34x32xf32>
    %158 = arith.addf %154, %157 : vector<34x32xf32>
    %159 = arith.addf %112, %158 : vector<34x32xf32>
    %c0_83 = arith.constant 0 : index
    %c0_84 = arith.constant 0 : index
    %160 = vector.load %arg5[%c0_83, %c0_84] : memref<34x32xf32, #tpu.memory_space<vmem>>, vector<34x32xf32>
    tpu.vector_store %arg5[%c0_83, %c0_84], %159 {strides = array<i32>} : memref<34x32xf32, #tpu.memory_space<vmem>>, vector<34x32xf32>,
    return
  }
  func.func @transform_0(%arg0: i32) -> (i32, i32) {
    %c0_i32 = arith.constant 0 : i32
    %c0_i32_0 = arith.constant 0 : i32
    %c0_i32_1 = arith.constant 0 : i32
    return %c0_i32, %c0_i32_0 : i32, i32
  }
  func.func @transform_1(%arg0: i32) -> (i32, i32) {
    %c0_i32 = arith.constant 0 : i32
    %c0_i32_0 = arith.constant 0 : i32
    %c0_i32_1 = arith.constant 0 : i32
    return %c0_i32, %c0_i32_0 : i32, i32
  }
  func.func @transform_2(%arg0: i32) -> (i32, i32) {
    %c0_i32 = arith.constant 0 : i32
    %c0_i32_0 = arith.constant 0 : i32
    %c0_i32_1 = arith.constant 0 : i32
    return %c0_i32, %c0_i32_0 : i32, i32
  }
  func.func @transform_3(%arg0: i32) -> (i32, i32, i32) {
    %c0_i32 = arith.constant 0 : i32
    %c0_i32_0 = arith.constant 0 : i32
    %c0_i32_1 = arith.constant 0 : i32
    return %arg0, %c0_i32, %c0_i32_0 : i32, i32, i32
  }
  func.func @transform_4(%arg0: i32) -> (i32, i32) {
    %c0_i32 = arith.constant 0 : i32
    %c0_i32_0 = arith.constant 0 : i32
    %c0_i32_1 = arith.constant 0 : i32
    return %c0_i32, %c0_i32_0 : i32, i32
  }
}

module attributes {stable_mosaic.version = 11 : i64} {
  func.func @_tail_kernel(%arg0: memref<1x1xf32, #tpu.memory_space<vmem>>, %arg1: memref<2x16xf32, #tpu.memory_space<vmem>>, %arg2: memref<2x34xf32, #tpu.memory_space<vmem>>, %arg3: memref<16x32xf32, #tpu.memory_space<vmem>>, %arg4: memref<34x32xf32, #tpu.memory_space<vmem>>, %arg5: memref<68x32xf32, #tpu.memory_space<vmem>>, %arg6: memref<32x128xf32, #tpu.memory_space<vmem>>) attributes {dimension_semantics = [], scalar_prefetch = 0 : i64, scratch_operands = 0 : i64, tpu.core_type = #tpu.core_type<tc>} {
    %c0 = arith.constant 0 : index
    %c0_0 = arith.constant 0 : index
    %0 = vector.load %arg1[%c0, %c0_0] : memref<2x16xf32, #tpu.memory_space<vmem>>, vector<2x16xf32>
    %c0_1 = arith.constant 0 : index
    %c0_2 = arith.constant 0 : index
    %1 = vector.load %arg3[%c0_1, %c0_2] : memref<16x32xf32, #tpu.memory_space<vmem>>, vector<16x32xf32>
    %cst = arith.constant dense<0.000000e+00> : vector<2x32xf32>
    %2 = tpu.matmul %0, %1, %cst {dimension_numbers = #tpu.dot_dimension_numbers<[1], [0], [0], [1], [0, 0, 1, 1], [], []>} : vector<2x16xf32>, vector<16x32xf32>, vector<2x32xf32> -> vector<2x32xf32>
    %c0_3 = arith.constant 0 : index
    %c0_4 = arith.constant 0 : index
    %3 = vector.load %arg5[%c0_3, %c0_4] : memref<68x32xf32, #tpu.memory_space<vmem>>, vector<1x32xf32>
    %c1 = arith.constant 1 : index
    %c0_5 = arith.constant 0 : index
    %4 = vector.load %arg5[%c1, %c0_5] : memref<68x32xf32, #tpu.memory_space<vmem>>, vector<1x32xf32>
    %cst_6 = arith.constant dense<0.000000e+00> : vector<2xf32>
    %5 = vector.multi_reduction <add>, %2, %cst_6 [1] : vector<2x32xf32> to vector<2xf32>
    %6 = vector.shape_cast %5 : vector<2xf32> to vector<2x1xf32>
    %cst_7 = arith.constant 3.200000e+01 : f32
    %7 = vector.broadcast %cst_7 : f32 to vector<2x1xf32>
    %8 = arith.divf %6, %7 : vector<2x1xf32>
    %9 = vector.broadcast %8 : vector<2x1xf32> to vector<2x32xf32>
    %10 = arith.subf %2, %9 : vector<2x32xf32>
    %11 = arith.mulf %10, %10 : vector<2x32xf32>
    %cst_8 = arith.constant dense<0.000000e+00> : vector<2xf32>
    %12 = vector.multi_reduction <add>, %11, %cst_8 [1] : vector<2x32xf32> to vector<2xf32>
    %13 = vector.shape_cast %12 : vector<2xf32> to vector<2x1xf32>
    %cst_9 = arith.constant 3.200000e+01 : f32
    %14 = vector.broadcast %cst_9 : f32 to vector<2x1xf32>
    %15 = arith.divf %13, %14 : vector<2x1xf32>
    %cst_10 = arith.constant 9.99999974E-6 : f32
    %16 = vector.broadcast %cst_10 : f32 to vector<2x1xf32>
    %17 = arith.addf %15, %16 : vector<2x1xf32>
    %18 = math.rsqrt %17 : vector<2x1xf32>
    %19 = vector.broadcast %18 : vector<2x1xf32> to vector<2x32xf32>
    %20 = arith.mulf %10, %19 : vector<2x32xf32>
    %21 = vector.broadcast %3 : vector<1x32xf32> to vector<2x32xf32>
    %22 = arith.mulf %20, %21 : vector<2x32xf32>
    %23 = vector.broadcast %4 : vector<1x32xf32> to vector<2x32xf32>
    %24 = arith.addf %22, %23 : vector<2x32xf32>
    %c2 = arith.constant 2 : index
    %c0_11 = arith.constant 0 : index
    %25 = vector.load %arg5[%c2, %c0_11] : memref<68x32xf32, #tpu.memory_space<vmem>>, vector<32x16xf32>
    %cst_12 = arith.constant dense<0.000000e+00> : vector<2x16xf32>
    %26 = tpu.matmul %24, %25, %cst_12 {dimension_numbers = #tpu.dot_dimension_numbers<[1], [0], [0], [1], [0, 0, 1, 1], [], []>} : vector<2x32xf32>, vector<32x16xf32>, vector<2x16xf32> -> vector<2x16xf32>
    %c0_13 = arith.constant 0 : index
    %c0_14 = arith.constant 0 : index
    %27 = vector.load %arg2[%c0_13, %c0_14] : memref<2x34xf32, #tpu.memory_space<vmem>>, vector<2x34xf32>
    %c0_15 = arith.constant 0 : index
    %c0_16 = arith.constant 0 : index
    %28 = vector.load %arg4[%c0_15, %c0_16] : memref<34x32xf32, #tpu.memory_space<vmem>>, vector<34x32xf32>
    %cst_17 = arith.constant dense<0.000000e+00> : vector<2x32xf32>
    %29 = tpu.matmul %27, %28, %cst_17 {dimension_numbers = #tpu.dot_dimension_numbers<[1], [0], [0], [1], [0, 0, 1, 1], [], []>} : vector<2x34xf32>, vector<34x32xf32>, vector<2x32xf32> -> vector<2x32xf32>
    %c34 = arith.constant 34 : index
    %c0_18 = arith.constant 0 : index
    %30 = vector.load %arg5[%c34, %c0_18] : memref<68x32xf32, #tpu.memory_space<vmem>>, vector<1x32xf32>
    %c35 = arith.constant 35 : index
    %c0_19 = arith.constant 0 : index
    %31 = vector.load %arg5[%c35, %c0_19] : memref<68x32xf32, #tpu.memory_space<vmem>>, vector<1x32xf32>
    %cst_20 = arith.constant dense<0.000000e+00> : vector<2xf32>
    %32 = vector.multi_reduction <add>, %29, %cst_20 [1] : vector<2x32xf32> to vector<2xf32>
    %33 = vector.shape_cast %32 : vector<2xf32> to vector<2x1xf32>
    %cst_21 = arith.constant 3.200000e+01 : f32
    %34 = vector.broadcast %cst_21 : f32 to vector<2x1xf32>
    %35 = arith.divf %33, %34 : vector<2x1xf32>
    %36 = vector.broadcast %35 : vector<2x1xf32> to vector<2x32xf32>
    %37 = arith.subf %29, %36 : vector<2x32xf32>
    %38 = arith.mulf %37, %37 : vector<2x32xf32>
    %cst_22 = arith.constant dense<0.000000e+00> : vector<2xf32>
    %39 = vector.multi_reduction <add>, %38, %cst_22 [1] : vector<2x32xf32> to vector<2xf32>
    %40 = vector.shape_cast %39 : vector<2xf32> to vector<2x1xf32>
    %cst_23 = arith.constant 3.200000e+01 : f32
    %41 = vector.broadcast %cst_23 : f32 to vector<2x1xf32>
    %42 = arith.divf %40, %41 : vector<2x1xf32>
    %cst_24 = arith.constant 9.99999974E-6 : f32
    %43 = vector.broadcast %cst_24 : f32 to vector<2x1xf32>
    %44 = arith.addf %42, %43 : vector<2x1xf32>
    %45 = math.rsqrt %44 : vector<2x1xf32>
    %46 = vector.broadcast %45 : vector<2x1xf32> to vector<2x32xf32>
    %47 = arith.mulf %37, %46 : vector<2x32xf32>
    %48 = vector.broadcast %30 : vector<1x32xf32> to vector<2x32xf32>
    %49 = arith.mulf %47, %48 : vector<2x32xf32>
    %50 = vector.broadcast %31 : vector<1x32xf32> to vector<2x32xf32>
    %51 = arith.addf %49, %50 : vector<2x32xf32>
    %c36 = arith.constant 36 : index
    %c0_25 = arith.constant 0 : index
    %52 = vector.load %arg5[%c36, %c0_25] : memref<68x32xf32, #tpu.memory_space<vmem>>, vector<32x16xf32>
    %cst_26 = arith.constant dense<0.000000e+00> : vector<2x16xf32>
    %53 = tpu.matmul %51, %52, %cst_26 {dimension_numbers = #tpu.dot_dimension_numbers<[1], [0], [0], [1], [0, 0, 1, 1], [], []>} : vector<2x32xf32>, vector<32x16xf32>, vector<2x16xf32> -> vector<2x16xf32>
    %54 = arith.mulf %26, %26 : vector<2x16xf32>
    %cst_27 = arith.constant dense<0.000000e+00> : vector<2xf32>
    %55 = vector.multi_reduction <add>, %54, %cst_27 [1] : vector<2x16xf32> to vector<2xf32>
    %56 = vector.shape_cast %55 : vector<2xf32> to vector<2x1xf32>
    %cst_28 = arith.constant 9.99999996E-13 : f32
    %57 = vector.broadcast %cst_28 : f32 to vector<2x1xf32>
    %58 = arith.maximumf %56, %57 : vector<2x1xf32>
    %59 = math.rsqrt %58 : vector<2x1xf32>
    %60 = vector.broadcast %59 : vector<2x1xf32> to vector<2x16xf32>
    %61 = arith.mulf %26, %60 : vector<2x16xf32>
    %62 = arith.mulf %53, %53 : vector<2x16xf32>
    %cst_29 = arith.constant dense<0.000000e+00> : vector<2xf32>
    %63 = vector.multi_reduction <add>, %62, %cst_29 [1] : vector<2x16xf32> to vector<2xf32>
    %64 = vector.shape_cast %63 : vector<2xf32> to vector<2x1xf32>
    %cst_30 = arith.constant 9.99999996E-13 : f32
    %65 = vector.broadcast %cst_30 : f32 to vector<2x1xf32>
    %66 = arith.maximumf %64, %65 : vector<2x1xf32>
    %67 = math.rsqrt %66 : vector<2x1xf32>
    %68 = vector.broadcast %67 : vector<2x1xf32> to vector<2x16xf32>
    %69 = arith.mulf %53, %68 : vector<2x16xf32>
    %c0_31 = arith.constant 0 : index
    %c0_32 = arith.constant 0 : index
    %70 = vector.load %arg0[%c0_31, %c0_32] : memref<1x1xf32, #tpu.memory_space<vmem>>, vector<1x1xf32>
    %71 = math.exp %70 : vector<1x1xf32>
    %cst_33 = arith.constant dense<0.000000e+00> : vector<2x2xf32>
    %72 = tpu.matmul %61, %69, %cst_33 {dimension_numbers = #tpu.dot_dimension_numbers<[1], [1], [0], [0], [0, 0, 1, 0], [], []>} : vector<2x16xf32>, vector<2x16xf32>, vector<2x2xf32> -> vector<2x2xf32>
    %73 = vector.broadcast %71 : vector<1x1xf32> to vector<2x2xf32>
    %74 = arith.mulf %73, %72 : vector<2x2xf32>
    %75 = tpu.iota {dimensions = array<i32: 0>} : vector<2x2xi32>
    %76 = tpu.iota {dimensions = array<i32: 1>} : vector<2x2xi32>
    %77 = arith.cmpi eq, %75, %76 : vector<2x2xi32>
    %78 = arith.extui %77 : vector<2x2xi1> to vector<2x2xi32>
    %79 = arith.sitofp %78 : vector<2x2xi32> to vector<2x2xf32>
    %cst_34 = arith.constant dense<0xFF800000> : vector<2xf32>
    %80 = vector.multi_reduction <maximumf>, %74, %cst_34 [1] : vector<2x2xf32> to vector<2xf32>
    %81 = vector.shape_cast %80 : vector<2xf32> to vector<2x1xf32>
    %82 = vector.broadcast %81 : vector<2x1xf32> to vector<2x2xf32>
    %83 = arith.subf %74, %82 : vector<2x2xf32>
    %84 = math.exp %83 : vector<2x2xf32>
    %cst_35 = arith.constant dense<0.000000e+00> : vector<2xf32>
    %85 = vector.multi_reduction <add>, %84, %cst_35 [1] : vector<2x2xf32> to vector<2xf32>
    %86 = vector.shape_cast %85 : vector<2xf32> to vector<2x1xf32>
    %87 = math.log %86 : vector<2x1xf32>
    %88 = arith.addf %81, %87 : vector<2x1xf32>
    %89 = arith.mulf %74, %79 : vector<2x2xf32>
    %cst_36 = arith.constant dense<0.000000e+00> : vector<2xf32>
    %90 = vector.multi_reduction <add>, %89, %cst_36 [1] : vector<2x2xf32> to vector<2xf32>
    %91 = vector.shape_cast %90 : vector<2xf32> to vector<2x1xf32>
    %92 = arith.subf %88, %91 : vector<2x1xf32>
    %cst_37 = arith.constant dense<0.000000e+00> : vector<1xf32>
    %93 = vector.multi_reduction <add>, %92, %cst_37 [0] : vector<2x1xf32> to vector<1xf32>
    %94 = vector.shape_cast %93 : vector<1xf32> to vector<1x1xf32>
    %cst_38 = arith.constant 2.000000e+00 : f32
    %95 = vector.broadcast %cst_38 : f32 to vector<1x1xf32>
    %96 = arith.divf %94, %95 : vector<1x1xf32>
    %cst_39 = arith.constant dense<0xFF800000> : vector<2xf32>
    %97 = vector.multi_reduction <maximumf>, %74, %cst_39 [0] : vector<2x2xf32> to vector<2xf32>
    %98 = vector.shape_cast %97 : vector<2xf32> to vector<1x2xf32>
    %99 = vector.broadcast %98 : vector<1x2xf32> to vector<2x2xf32>
    %100 = arith.subf %74, %99 : vector<2x2xf32>
    %101 = math.exp %100 : vector<2x2xf32>
    %cst_40 = arith.constant dense<0.000000e+00> : vector<2xf32>
    %102 = vector.multi_reduction <add>, %101, %cst_40 [0] : vector<2x2xf32> to vector<2xf32>
    %103 = vector.shape_cast %102 : vector<2xf32> to vector<1x2xf32>
    %104 = math.log %103 : vector<1x2xf32>
    %105 = arith.addf %98, %104 : vector<1x2xf32>
    %106 = arith.mulf %74, %79 : vector<2x2xf32>
    %cst_41 = arith.constant dense<0.000000e+00> : vector<2xf32>
    %107 = vector.multi_reduction <add>, %106, %cst_41 [0] : vector<2x2xf32> to vector<2xf32>
    %108 = vector.shape_cast %107 : vector<2xf32> to vector<1x2xf32>
    %109 = arith.subf %105, %108 : vector<1x2xf32>
    %cst_42 = arith.constant dense<0.000000e+00> : vector<1xf32>
    %110 = vector.multi_reduction <add>, %109, %cst_42 [1] : vector<1x2xf32> to vector<1xf32>
    %111 = vector.shape_cast %110 : vector<1xf32> to vector<1x1xf32>
    %cst_43 = arith.constant 2.000000e+00 : f32
    %112 = vector.broadcast %cst_43 : f32 to vector<1x1xf32>
    %113 = arith.divf %111, %112 : vector<1x1xf32>
    %114 = arith.addf %96, %113 : vector<1x1xf32>
    %cst_44 = arith.constant 5.000000e-01 : f32
    %115 = vector.broadcast %cst_44 : f32 to vector<1x1xf32>
    %116 = arith.mulf %115, %114 : vector<1x1xf32>
    %cst_45 = arith.constant 0.000000e+00 : f32
    %117 = vector.broadcast %cst_45 : f32 to vector<32x128xf32>
    %c0_46 = arith.constant 0 : index
    %c0_47 = arith.constant 0 : index
    %118 = vector.load %arg6[%c0_46, %c0_47] : memref<32x128xf32, #tpu.memory_space<vmem>>, vector<32x128xf32>
    tpu.vector_store %arg6[%c0_46, %c0_47], %117 {strides = array<i32>} : memref<32x128xf32, #tpu.memory_space<vmem>>, vector<32x128xf32>,
    %c0_48 = arith.constant 0 : index
    %c0_49 = arith.constant 0 : index
    %119 = vector.load %arg6[%c0_48, %c0_49] : memref<32x128xf32, #tpu.memory_space<vmem>>, vector<2x2xf32>
    tpu.vector_store %arg6[%c0_48, %c0_49], %74 {strides = array<i32>} : memref<32x128xf32, #tpu.memory_space<vmem>>, vector<2x2xf32>,
    %c8 = arith.constant 8 : index
    %c0_50 = arith.constant 0 : index
    %120 = vector.load %arg6[%c8, %c0_50] : memref<32x128xf32, #tpu.memory_space<vmem>>, vector<2x16xf32>
    tpu.vector_store %arg6[%c8, %c0_50], %61 {strides = array<i32>} : memref<32x128xf32, #tpu.memory_space<vmem>>, vector<2x16xf32>,
    %c16 = arith.constant 16 : index
    %c0_51 = arith.constant 0 : index
    %121 = vector.load %arg6[%c16, %c0_51] : memref<32x128xf32, #tpu.memory_space<vmem>>, vector<2x16xf32>
    tpu.vector_store %arg6[%c16, %c0_51], %69 {strides = array<i32>} : memref<32x128xf32, #tpu.memory_space<vmem>>, vector<2x16xf32>,
    %c24 = arith.constant 24 : index
    %c0_52 = arith.constant 0 : index
    %122 = vector.load %arg6[%c24, %c0_52] : memref<32x128xf32, #tpu.memory_space<vmem>>, vector<1x1xf32>
    tpu.vector_store %arg6[%c24, %c0_52], %116 {strides = array<i32>} : memref<32x128xf32, #tpu.memory_space<vmem>>, vector<1x1xf32>,
    return
  }
}

</mosaic_0001>

<llo_original>
// kernel: clip_forward.3
$region0: #{clip_forward.3}
  #allocation0 [shape = 'u32[]', space=smem, size = 0x4, offset = 0x4, fixed_abs, tag = 'smem constant byte address 0x4 - core index']
  #allocation1 [shape = 'u32[144,128]{1,0:T(1,128)}', space=vmem, size = 0x12000, scoped, tag = 'internal scratch']
  %s0 = inlined_call_operand.vmem [shape: f32[16,32], index: 0, kind: input, shape index: {}]
  %s1 = inlined_call_operand.vmem [shape: f32[16,16], index: 1, kind: input, shape index: {}]
  %s2 = inlined_call_operand.hbm [shape: f32[2,400,128], index: 2, kind: input, shape index: {}]
  %s3 = inlined_call_operand.vmem [shape: f32[16,32], index: 3, kind: output, shape index: {}]
  %s4 = sld [smem:[#allocation0]]
  $region53: #{clip_forward.3} parent=0
    _
  %s6 = ssub.s32 1, %s4
  %s7 = scalar_select 0, %s6, %s4
  $region1: #{clip_forward.3} parent=0
    #allocation2 [shape = 'u8[409600]{0}', space=vmem, size = 0x64000, scoped, tag = 'input window, operand 2']
    #allocation3 [shape = 's32[2]{0}', space=sflag, size = 0x8, scoped, tag = 'scoped memory for clip_forward.3']
    %8 = vsyncpa [#allocation3], 0
    %s9 = scalar_lea.sflag [#allocation3], 1
    %10 = vsyncpa %s9, 0
    loop: start=0, step=1, limit=4
    $region2: #{clip_forward.3} parent=1 // loop_pre_header
      _
    $region3: #{clip_forward.3} parent=1 // loop_header
      %s12 = sphi 0, %s16
      %p13 = scmp.ge.s32.totalorder %s12, 4
      %s20 = sphi 0, %s20
      %s22 = sphi 0, %s20
      %s23 = sphi 0, %s22
      %s37 = sphi 0, %s23
      %s41 = sphi 0, %s41
      %s43 = sphi 0, %s41
      %s44 = sphi 0, %s43
      %s58 = sphi 0, %s44
      %s64 = sphi 0, %s66
      %s67 = sphi 0, %s64
      %s68 = sphi 0, %s67
      %s84 = sphi 0, %s68
      %s88 = sphi 0, %s88
      %s90 = sphi 0, %s88
      %s91 = sphi 0, %s90
      %s105 = sphi 0, %s91
    $region4: #{clip_forward.3} parent=1 // loop_header_branch
      %15 = sbr.rel (%p13) target = $region8
    $region5: #{clip_forward.3} parent=1 // loop_body
      %s17 = ssub.s32 %s12, 1
      %s18 = ssub.s32 %s12, 2
      %s19 = sadd.s32 %s12, 1
      %s21 = sadd.s32 %s20, 1
      %p24 = scmp.eq.s32.totalorder %s12, 1
      %p25 = scmp.ne.s32.totalorder %s20, %s22
      %p26 = scmp.eq.s32.totalorder %s12, 0
      %p27 = por %p25, %p26
      %p28 = scmp.ne.s32.totalorder %s20, %s22
      %p29 = scmp.eq.s32.totalorder %s17, 1
      %p30 = por %p28, %p29
      %p31 = scmp.ne.s32.totalorder %s22, %s23
      %p32 = scmp.eq.s32.totalorder %s17, 0
      %p33 = por %p31, %p32
      %p34 = scmp.ne.s32.totalorder %s22, %s23
      %p35 = scmp.eq.s32.totalorder %s18, 1
      %p36 = por %p34, %p35
      %p38 = scmp.ne.s32.totalorder %s23, %s37
      %p39 = scmp.eq.s32.totalorder %s18, 0
      %p40 = por %p38, %p39
      %s42 = sadd.s32 %s41, 1
      %p45 = scmp.eq.s32.totalorder %s12, 1
      %p46 = scmp.ne.s32.totalorder %s41, %s43
      %p47 = scmp.eq.s32.totalorder %s12, 0
      %p48 = por %p46, %p47
      %p49 = scmp.ne.s32.totalorder %s41, %s43
      %p50 = scmp.eq.s32.totalorder %s17, 1
      %p51 = por %p49, %p50
      %p52 = scmp.ne.s32.totalorder %s43, %s44
      %p53 = scmp.eq.s32.totalorder %s17, 0
      %p54 = por %p52, %p53
      %p55 = scmp.ne.s32.totalorder %s43, %s44
      %p56 = scmp.eq.s32.totalorder %s18, 1
      %p57 = por %p55, %p56
      %p59 = scmp.ne.s32.totalorder %s44, %s58
      %p60 = scmp.eq.s32.totalorder %s18, 0
      %p61 = por %p59, %p60
      %s62 = ssub.s32 %s12, %s19
      %p63 = scmp.eq.s32.totalorder %s62, 0
      %s65 = sadd.s32 %s64, 1
      %s66 = scalar_select %p63, %s64, %s65
      %p69 = pneg %p63
      %p70 = scmp.eq.s32.totalorder %s12, 1
      %p71 = por %p69, %p70
      %p72 = scmp.ne.s32.totalorder %s64, %s67
      %p73 = scmp.eq.s32.totalorder %s12, 0
      %p74 = por %p72, %p73
      %p75 = scmp.ne.s32.totalorder %s64, %s67
      %p76 = scmp.eq.s32.totalorder %s17, 1
      %p77 = por %p75, %p76
      %p78 = scmp.ne.s32.totalorder %s67, %s68
      %p79 = scmp.eq.s32.totalorder %s17, 0
      %p80 = por %p78, %p79
      %p81 = scmp.ne.s32.totalorder %s67, %s68
      %p82 = scmp.eq.s32.totalorder %s18, 1
      %p83 = por %p81, %p82
      %p85 = scmp.ne.s32.totalorder %s68, %s84
      %p86 = scmp.eq.s32.totalorder %s18, 0
      %p87 = por %p85, %p86
      %s89 = sadd.s32 %s88, 1
      %p92 = scmp.eq.s32.totalorder %s12, 1
      %p93 = scmp.ne.s32.totalorder %s88, %s90
      %p94 = scmp.eq.s32.totalorder %s12, 0
      %p95 = por %p93, %p94
      %p96 = scmp.ne.s32.totalorder %s88, %s90
      %p97 = scmp.eq.s32.totalorder %s17, 1
      %p98 = por %p96, %p97
      %p99 = scmp.ne.s32.totalorder %s90, %s91
      %p100 = scmp.eq.s32.totalorder %s17, 0
      %p101 = por %p99, %p100
      %p102 = scmp.ne.s32.totalorder %s90, %s91
      %p103 = scmp.eq.s32.totalorder %s18, 1
      %p104 = por %p102, %p103
      %p106 = scmp.ne.s32.totalorder %s91, %s105
      %p107 = scmp.eq.s32.totalorder %s18, 0
      %p108 = por %p106, %p107
      %p109 = scmp.le.s32.totalorder 1, %s12
      %p110 = scmp.lt.s32.totalorder %s12, 3
      %p111 = pnand %p109, %p110
      %p112 = pneg %p111
      // Predicated region
      $region9: #{clip_forward.3} parent=5 // pred_check
        _
      $region10: #{clip_forward.3} parent=5 // pred_check_branch
        %114 = sbr.rel (%p111) target = $region12
      $region11: #{clip_forward.3} parent=5 // pred_region
        %s115 = ssub.s32 %s12, 1
        // Predicated region
        $region13: #{clip_forward.3} parent=11 // pred_check
          %p116 = pneg %p33
        $region14: #{clip_forward.3} parent=11 // pred_check_branch
          %118 = sbr.rel (%p116) target = $region16
        $region15: #{clip_forward.3} parent=11 // pred_region
          _
        $region16: #{clip_forward.3} parent=11 // pred_fallthru
          _
        // Predicated region
        $region17: #{clip_forward.3} parent=11 // pred_check
          %p119 = pneg %p54
        $region18: #{clip_forward.3} parent=11 // pred_check_branch
          %121 = sbr.rel (%p119) target = $region20
        $region19: #{clip_forward.3} parent=11 // pred_region
          _
        $region20: #{clip_forward.3} parent=11 // pred_fallthru
          _
      $region12: #{clip_forward.3} parent=5 // pred_fallthru
        _
      %p122 = scmp.lt.s32.totalorder %s12, 2
      // Predicated region
      $region21: #{clip_forward.3} parent=5 // pred_check
        %p123 = pneg %p122
      $region22: #{clip_forward.3} parent=5 // pred_check_branch
        %125 = sbr.rel (%p123) target = $region24
      $region23: #{clip_forward.3} parent=5 // pred_region
        // Predicated region
        $region25: #{clip_forward.3} parent=23 // pred_check
          %p126 = pneg %p74
        $region26: #{clip_forward.3} parent=23 // pred_check_branch
          %128 = sbr.rel (%p126) target = $region28
        $region27: #{clip_forward.3} parent=23 // pred_region
          %s129 = sand.u32 %s64, 1
          %s130 = scalar_lea.sflag [#allocation3], %s129
          %s131 = sand.u32 %s64, 1
          %s132 = smul.addr %s131, 400
          %s133 = scalar_lea.vmem [#allocation2], %s132
          %s135 = ssub.s32 6400, 6400
          %136 = vsyncadd %s130, %s135
          %s137 = smul.addr %s12, 50
          %s138 = smul.addr %s137, 128
          %s139 = scalar_lea.hbm %s2, %s138
          %s140 = sshll.u32 %s133, 4
          %s141 = int_to_ptr.vmem [resolvable:$true] %s140
          %146 = dma.hbm_to_vmem [thread:$0]  %s139, 6400, %s141, %s130, 128, 128, 8
        $region28: #{clip_forward.3} parent=23 // pred_fallthru
          _
      $region24: #{clip_forward.3} parent=5 // pred_fallthru
        _
      %p147 = scmp.le.s32.totalorder 1, %s12
      %p148 = scmp.lt.s32.totalorder %s12, 3
      %p149 = pnand %p147, %p148
      %p150 = pneg %p149
      // Predicated region
      $region29: #{clip_forward.3} parent=5 // pred_check
        _
      $region30: #{clip_forward.3} parent=5 // pred_check_branch
        %152 = sbr.rel (%p149) target = $region32
      $region31: #{clip_forward.3} parent=5 // pred_region
        %s153 = ssub.s32 %s12, 1
        %s154 = sand.u32 %s67, 1
        %s155 = scalar_lea.sflag [#allocation3], %s154
        %s156 = sand.u32 %s67, 1
        %s157 = smul.addr %s156, 400
        %s158 = scalar_lea.vmem [#allocation2], %s157
        // Predicated region
        $region33: #{clip_forward.3} parent=31 // pred_check
          %p159 = pneg %p80
        $region34: #{clip_forward.3} parent=31 // pred_check_branch
          %161 = sbr.rel (%p159) target = $region36
        $region35: #{clip_forward.3} parent=31 // pred_region
          %162 = dma.done %s155, 6400
        $region36: #{clip_forward.3} parent=31 // pred_fallthru
          _
        %p163 = pneg %p33
        %p164 = pneg %p30
        %p165 = pneg %p54
        %p166 = pneg %p51
        %s167 = sand.u32 %s67, 1
        %s168 = scalar_lea.sflag [#allocation3], %s167
        %s169 = sand.u32 %s67, 1
        %s170 = smul.addr %s169, 400
        %s171 = scalar_lea.vmem [#allocation2], %s170
        %p172 = pneg %p80
        %p173 = pneg %p77
        %p174 = pneg %p101
        %p175 = pneg %p98
        %p176 = scmp.eq.s32.totalorder %s17, 0
        // Predicated region
        $region37: #{clip_forward.3} parent=31 // pred_check
          %p177 = pneg %p176
        $region38: #{clip_forward.3} parent=31 // pred_check_branch
          %179 = sbr.rel (%p177) target = $region40
        $region39: #{clip_forward.3} parent=31 // pred_region
          %v180 = vld [vmem:[%s0] sm:$0xff]
          %v181 = vld [vmem:[%s0 + $0x8] sm:$0xff]
          %vm182 = vcmask 261120
          %183 = vst.msk [vmem:[%s3] sm:$0xff] %vm182, %v180
          %184 = vst.msk [vmem:[%s3 + $0x8] sm:$0xff] %vm182, %v181
        $region40: #{clip_forward.3} parent=31 // pred_fallthru
          _
        %v185 = vld [vmem:[%s3] sm:$0xff]
        %v186 = vld [vmem:[%s3 + $0x8] sm:$0xff]
        %v187 = vld [vmem:[%s1] sm:$0xff]
        %v188 = vld [vmem:[%s1 + $0x8] sm:$0xff]
        %v189 = vld [vmem:[%s158 + $0x180] sm:$0x1]
        %v190 = vld [vmem:[%s158 + $0x181] sm:$0x1]
        %vm191 = vcmask 261120
        %v192 = vsel %vm191, %v185, 0.0
        %193 = vadd.xlane.f32.xlu0 %v192
        %v194 = vpop.xlane.xlu0 %193
        %v195 = vsel %vm191, %v186, 0.0
        %196 = vadd.xlane.f32.xlu0 %v195
        %v197 = vpop.xlane.xlu0 %196
        %v198 = vrcp.pop 32.0
        %v199 = vmul.f32 %v194, %v198
        %v200 = vmul.f32 %v197, %v198
        %v201 = vsub.f32 %v185, %v199
        %v202 = vsub.f32 %v186, %v200
        %v203 = vmul.f32 %v201, %v201
        %v204 = vmul.f32 %v202, %v202
        %v205 = vsel %vm191, %v203, 0.0
        %206 = vadd.xlane.f32.xlu0 %v205
        %v207 = vpop.xlane.xlu0 %206
        %v208 = vsel %vm191, %v204, 0.0
        %209 = vadd.xlane.f32.xlu0 %v208
        %v210 = vpop.xlane.xlu0 %209
        %v211 = vmul.f32 %v207, %v198
        %v212 = vmul.f32 %v210, %v198
        %v213 = vadd.f32 %v211, 1e-05
        %v214 = vadd.f32 %v212, 1e-05
        %v215 = vrsqrt.pop %v213
        %v216 = vrsqrt.pop %v214
        %v217 = vmul.f32 %v201, %v215
        %v218 = vmul.f32 %v202, %v216
        %v219 = vlaneseq
        %v220 = vshrl.u32 %v219, 7
        %v221 = vsub.s32 0, %v220
        %v222 = vrot.slane %v189, %v221
        %v223 = vmul.f32 %v217, %v222
        %v224 = vmul.f32 %v218, %v222
        %v225 = vlaneseq
        %v226 = vshrl.u32 %v225, 7
        %v227 = vsub.s32 0, %v226
        %v228 = vrot.slane %v190, %v227
        %v229 = vadd.f32 %v223, %v228
        %v230 = vadd.f32 %v224, %v228
        %v231 = vld [vmem:[%s158] sm:$0xff]
        %v232 = vld [vmem:[%s158 + $0x8] sm:$0xff]
        %v233 = vld [vmem:[%s158 + $0x10] sm:$0xff]
        %v234 = vld [vmem:[%s158 + $0x18] sm:$0xff]
        %v235 = vld [vmem:[%s158 + $0x187] sm:$0x1]
        %v236 = vlaneseq
        %v237 = vshrl.u32 %v236, 7
        %v238 = vsub.s32 0, %v237
        %v239 = vrot.slane %v235, %v238
        %v241 = vsel %vm191, %v229, 0
        %v244 = vsel %vm191, %v230, 0
        %246 = vmatprep.subr.mxu0 0.0
        %247 = vmatpush1.msra.mxu0 0.0
        %248 = vmatprep.subr.mxu0 0.0
        %249 = vmatpush1.msra.mxu0 0.0
        %250 = vmatprep.subr.mxu0 0.0
        %251 = vmatpush1.msra.mxu0 0.0
        %252 = vmatprep.subr.mxu0 0.0
        %253 = vmatpush1.msra.mxu0 0.0
        %254 = vmatprep.subr.mxu0 0.0
        %255 = vmatpush1.msra.mxu0 0.0
        %256 = vmatprep.subr.mxu0 0.0
        %257 = vmatpush1.msra.mxu0 0.0
        %258 = vmatprep.subr.mxu0 0.0
        %259 = vmatpush1.msra.mxu0 0.0
        %260 = vmatprep.subr.mxu0 0.0
        %261 = vmatpush1.msra.mxu0 0.0
        %262 = vmatprep.subr.mxu0 0.0
        %263 = vmatpush1.msra.mxu0 0.0
        %264 = vmatprep.subr.mxu0 0.0
        %265 = vmatpush1.msra.mxu0 0.0
        %266 = vmatprep.subr.mxu0 0.0
        %267 = vmatpush1.msra.mxu0 0.0
        %268 = vmatprep.subr.mxu0 0.0
        %269 = vmatpush1.msra.mxu0 0.0
        %270 = vmatprep.subr.mxu0 0.0
        %271 = vmatpush1.msra.mxu0 %v234
        %272 = vmatprep.subr.mxu0 0.0
        %273 = vmatpush1.msra.mxu0 %v233
        %274 = vmatprep.subr.mxu0 0.0
        %275 = vmatpush1.msra.mxu0 %v232
        %276 = vmatprep.subr.mxu0 0.0
        %277 = vmatpush1.msra.mxu0 %v231
        %278 = vmatprep.subr.mxu0 0.0
        %279 = vmatpush2.msra.mxu0 0.0
        %280 = vmatprep.subr.mxu0 0.0
        %281 = vmatpush2.msra.mxu0 0.0
        %282 = vmatprep.subr.mxu0 0.0
        %283 = vmatpush2.msra.mxu0 0.0
        %284 = vmatprep.subr.mxu0 0.0
        %285 = vmatpush2.msra.mxu0 0.0
        %286 = vmatprep.subr.mxu0 0.0
        %287 = vmatpush2.msra.mxu0 0.0
        %288 = vmatprep.subr.mxu0 0.0
        %289 = vmatpush2.msra.mxu0 0.0
        %290 = vmatprep.subr.mxu0 0.0
        %291 = vmatpush2.msra.mxu0 0.0
        %292 = vmatprep.subr.mxu0 0.0
        %293 = vmatpush2.msra.mxu0 0.0
        %294 = vmatprep.subr.mxu0 0.0
        %295 = vmatpush2.msra.mxu0 0.0
        %296 = vmatprep.subr.mxu0 0.0
        %297 = vmatpush2.msra.mxu0 0.0
        %298 = vmatprep.subr.mxu0 0.0
        %299 = vmatpush2.msra.mxu0 0.0
        %300 = vmatprep.subr.mxu0 0.0
        %301 = vmatpush2.msra.mxu0 0.0
        %302 = vmatprep.subr.mxu0 0.0
        %303 = vmatpush2.msra.mxu0 0.0
        %304 = vmatprep.subr.mxu0 0.0
        %305 = vmatpush2.msra.mxu0 0.0
        %306 = vmatprep.subr.mxu0 0.0
        %307 = vmatpush2.msra.mxu0 0.0
        %308 = vmatprep.subr.mxu0 0.0
        %309 = vmatpush2.msra.mxu0 0.0
        %310 = vmatprep.mubr.f32.mxu0 0.0
        %311 = vmatmul.mubr.f32.gmra.mxu0 %v241
        %v312 = vpop.f32.mrf.mxu0
        %v313 = vadd.f32 %v239, %v312
        %v314 = vpop.f32.mrf.mxu0
        %315 = vmatprep.mubr.f32.mxu0 0.0
        %316 = vmatmul.mubr.f32.gmra.mxu0 %v244
        %v317 = vpop.f32.mrf.mxu0
        %v318 = vadd.f32 %v239, %v317
        %v319 = vpop.f32.mrf.mxu0
        %320 = vdwg.mxu0
        %v321 = vld [vmem:[%s158 + $0x20] sm:$0xff]
        %v322 = vld [vmem:[%s158 + $0x28] sm:$0xff]
        %v323 = vld [vmem:[%s158 + $0x30] sm:$0xff]
        %v324 = vld [vmem:[%s158 + $0x38] sm:$0xff]
        %v325 = vld [vmem:[%s158 + $0x188] sm:$0x1]
        %v326 = vlaneseq
        %v327 = vshrl.u32 %v326, 7
        %v328 = vsub.s32 0, %v327
        %v329 = vrot.slane %v325, %v328
        %330 = vmatprep.subr.mxu0 0.0
        %331 = vmatpush1.msra.mxu0 0.0
        %332 = vmatprep.subr.mxu0 0.0
        %333 = vmatpush1.msra.mxu0 0.0
        %334 = vmatprep.subr.mxu0 0.0
        %335 = vmatpush1.msra.mxu0 0.0
        %336 = vmatprep.subr.mxu0 0.0
        %337 = vmatpush1.msra.mxu0 0.0
        %338 = vmatprep.subr.mxu0 0.0
        %339 = vmatpush1.msra.mxu0 0.0
        %340 = vmatprep.subr.mxu0 0.0
        %341 = vmatpush1.msra.mxu0 0.0
        %342 = vmatprep.subr.mxu0 0.0
        %343 = vmatpush1.msra.mxu0 0.0
        %344 = vmatprep.subr.mxu0 0.0
        %345 = vmatpush1.msra.mxu0 0.0
        %346 = vmatprep.subr.mxu0 0.0
        %347 = vmatpush1.msra.mxu0 0.0
        %348 = vmatprep.subr.mxu0 0.0
        %349 = vmatpush1.msra.mxu0 0.0
        %350 = vmatprep.subr.mxu0 0.0
        %351 = vmatpush1.msra.mxu0 0.0
        %352 = vmatprep.subr.mxu0 0.0
        %353 = vmatpush1.msra.mxu0 0.0
        %354 = vmatprep.subr.mxu0 0.0
        %355 = vmatpush1.msra.mxu0 %v324
        %356 = vmatprep.subr.mxu0 0.0
        %357 = vmatpush1.msra.mxu0 %v323
        %358 = vmatprep.subr.mxu0 0.0
        %359 = vmatpush1.msra.mxu0 %v322
        %360 = vmatprep.subr.mxu0 0.0
        %361 = vmatpush1.msra.mxu0 %v321
        %362 = vmatprep.subr.mxu0 0.0
        %363 = vmatpush2.msra.mxu0 0.0
        %364 = vmatprep.subr.mxu0 0.0
        %365 = vmatpush2.msra.mxu0 0.0
        %366 = vmatprep.subr.mxu0 0.0
        %367 = vmatpush2.msra.mxu0 0.0
        %368 = vmatprep.subr.mxu0 0.0
        %369 = vmatpush2.msra.mxu0 0.0
        %370 = vmatprep.subr.mxu0 0.0
        %371 = vmatpush2.msra.mxu0 0.0
        %372 = vmatprep.subr.mxu0 0.0
        %373 = vmatpush2.msra.mxu0 0.0
        %374 = vmatprep.subr.mxu0 0.0
        %375 = vmatpush2.msra.mxu0 0.0
        %376 = vmatprep.subr.mxu0 0.0
        %377 = vmatpush2.msra.mxu0 0.0
        %378 = vmatprep.subr.mxu0 0.0
        %379 = vmatpush2.msra.mxu0 0.0
        %380 = vmatprep.subr.mxu0 0.0
        %381 = vmatpush2.msra.mxu0 0.0
        %382 = vmatprep.subr.mxu0 0.0
        %383 = vmatpush2.msra.mxu0 0.0
        %384 = vmatprep.subr.mxu0 0.0
        %385 = vmatpush2.msra.mxu0 0.0
        %386 = vmatprep.subr.mxu0 0.0
        %387 = vmatpush2.msra.mxu0 0.0
        %388 = vmatprep.subr.mxu0 0.0
        %389 = vmatpush2.msra.mxu0 0.0
        %390 = vmatprep.subr.mxu0 0.0
        %391 = vmatpush2.msra.mxu0 0.0
        %392 = vmatprep.subr.mxu0 0.0
        %393 = vmatpush2.msra.mxu0 0.0
        %394 = vmatprep.mubr.f32.mxu0 0.0
        %395 = vmatmul.mubr.f32.gmra.mxu0 %v241
        %v396 = vpop.f32.mrf.mxu0
        %v397 = vadd.f32 %v329, %v396
        %v398 = vpop.f32.mrf.mxu0
        %399 = vmatprep.mubr.f32.mxu0 0.0
        %400 = vmatmul.mubr.f32.gmra.mxu0 %v244
        %v401 = vpop.f32.mrf.mxu0
        %v402 = vadd.f32 %v329, %v401
        %v403 = vpop.f32.mrf.mxu0
        %404 = vdwg.mxu0
        %v405 = vld [vmem:[%s158 + $0x40] sm:$0xff]
        %v406 = vld [vmem:[%s158 + $0x48] sm:$0xff]
        %v407 = vld [vmem:[%s158 + $0x50] sm:$0xff]
        %v408 = vld [vmem:[%s158 + $0x58] sm:$0xff]
        %v409 = vld [vmem:[%s158 + $0x189] sm:$0x1]
        %v410 = vlaneseq
        %v411 = vshrl.u32 %v410, 7
        %v412 = vsub.s32 0, %v411
        %v413 = vrot.slane %v409, %v412
        %414 = vmatprep.subr.mxu0 0.0
        %415 = vmatpush1.msra.mxu0 0.0
        %416 = vmatprep.subr.mxu0 0.0
        %417 = vmatpush1.msra.mxu0 0.0
        %418 = vmatprep.subr.mxu0 0.0
        %419 = vmatpush1.msra.mxu0 0.0
        %420 = vmatprep.subr.mxu0 0.0
        %421 = vmatpush1.msra.mxu0 0.0
        %422 = vmatprep.subr.mxu0 0.0
        %423 = vmatpush1.msra.mxu0 0.0
        %424 = vmatprep.subr.mxu0 0.0
        %425 = vmatpush1.msra.mxu0 0.0
        %426 = vmatprep.subr.mxu0 0.0
        %427 = vmatpush1.msra.mxu0 0.0
        %428 = vmatprep.subr.mxu0 0.0
        %429 = vmatpush1.msra.mxu0 0.0
        %430 = vmatprep.subr.mxu0 0.0
        %431 = vmatpush1.msra.mxu0 0.0
        %432 = vmatprep.subr.mxu0 0.0
        %433 = vmatpush1.msra.mxu0 0.0
        %434 = vmatprep.subr.mxu0 0.0
        %435 = vmatpush1.msra.mxu0 0.0
        %436 = vmatprep.subr.mxu0 0.0
        %437 = vmatpush1.msra.mxu0 0.0
        %438 = vmatprep.subr.mxu0 0.0
        %439 = vmatpush1.msra.mxu0 %v408
        %440 = vmatprep.subr.mxu0 0.0
        %441 = vmatpush1.msra.mxu0 %v407
        %442 = vmatprep.subr.mxu0 0.0
        %443 = vmatpush1.msra.mxu0 %v406
        %444 = vmatprep.subr.mxu0 0.0
        %445 = vmatpush1.msra.mxu0 %v405
        %446 = vmatprep.subr.mxu0 0.0
        %447 = vmatpush2.msra.mxu0 0.0
        %448 = vmatprep.subr.mxu0 0.0
        %449 = vmatpush2.msra.mxu0 0.0
        %450 = vmatprep.subr.mxu0 0.0
        %451 = vmatpush2.msra.mxu0 0.0
        %452 = vmatprep.subr.mxu0 0.0
        %453 = vmatpush2.msra.mxu0 0.0
        %454 = vmatprep.subr.mxu0 0.0
        %455 = vmatpush2.msra.mxu0 0.0
        %456 = vmatprep.subr.mxu0 0.0
        %457 = vmatpush2.msra.mxu0 0.0
        %458 = vmatprep.subr.mxu0 0.0
        %459 = vmatpush2.msra.mxu0 0.0
        %460 = vmatprep.subr.mxu0 0.0
        %461 = vmatpush2.msra.mxu0 0.0
        %462 = vmatprep.subr.mxu0 0.0
        %463 = vmatpush2.msra.mxu0 0.0
        %464 = vmatprep.subr.mxu0 0.0
        %465 = vmatpush2.msra.mxu0 0.0
        %466 = vmatprep.subr.mxu0 0.0
        %467 = vmatpush2.msra.mxu0 0.0
        %468 = vmatprep.subr.mxu0 0.0
        %469 = vmatpush2.msra.mxu0 0.0
        %470 = vmatprep.subr.mxu0 0.0
        %471 = vmatpush2.msra.mxu0 0.0
        %472 = vmatprep.subr.mxu0 0.0
        %473 = vmatpush2.msra.mxu0 0.0
        %474 = vmatprep.subr.mxu0 0.0
        %475 = vmatpush2.msra.mxu0 0.0
        %476 = vmatprep.subr.mxu0 0.0
        %477 = vmatpush2.msra.mxu0 0.0
        %478 = vmatprep.mubr.f32.mxu0 0.0
        %479 = vmatmul.mubr.f32.gmra.mxu0 %v241
        %v480 = vpop.f32.mrf.mxu0
        %v481 = vadd.f32 %v413, %v480
        %v482 = vpop.f32.mrf.mxu0
        %483 = vmatprep.mubr.f32.mxu0 0.0
        %484 = vmatmul.mubr.f32.gmra.mxu0 %v244
        %v485 = vpop.f32.mrf.mxu0
        %v486 = vadd.f32 %v413, %v485
        %v487 = vpop.f32.mrf.mxu0
        %488 = vdwg.mxu0
        %vm489 = vcmask 130048
        %v491 = vsel %vm489, %v313, 0
        %v494 = vsel %vm489, %v318, 0
        %v497 = vsel %vm489, %v397, 0
        %v500 = vsel %vm489, %v402, 0
        %502 = vmatprep.subr.mxu0 0.0
        %503 = vmatpush1.xpose.msra.mxu0 0.0
        %504 = vmatprep.subr.mxu0 0.0
        %505 = vmatpush1.xpose.msra.mxu0 0.0
        %506 = vmatprep.subr.mxu0 0.0
        %507 = vmatpush1.xpose.msra.mxu0 0.0
        %508 = vmatprep.subr.mxu0 0.0
        %509 = vmatpush1.xpose.msra.mxu0 0.0
        %510 = vmatprep.subr.mxu0 0.0
        %511 = vmatpush1.xpose.msra.mxu0 0.0
        %512 = vmatprep.subr.mxu0 0.0
        %513 = vmatpush1.xpose.msra.mxu0 0.0
        %514 = vmatprep.subr.mxu0 0.0
        %515 = vmatpush1.xpose.msra.mxu0 0.0
        %516 = vmatprep.subr.mxu0 0.0
        %517 = vmatpush1.xpose.msra.mxu0 0.0
        %518 = vmatprep.subr.mxu0 0.0
        %519 = vmatpush1.xpose.msra.mxu0 0.0
        %520 = vmatprep.subr.mxu0 0.0
        %521 = vmatpush1.xpose.msra.mxu0 0.0
        %522 = vmatprep.subr.mxu0 0.0
        %523 = vmatpush1.xpose.msra.mxu0 0.0
        %524 = vmatprep.subr.mxu0 0.0
        %525 = vmatpush1.xpose.msra.mxu0 0.0
        %526 = vmatprep.subr.mxu0 0.0
        %527 = vmatpush1.xpose.msra.mxu0 0.0
        %528 = vmatprep.subr.mxu0 0.0
        %529 = vmatpush1.xpose.msra.mxu0 0.0
        %530 = vmatprep.subr.mxu0 0.0
        %531 = vmatpush1.xpose.msra.mxu0 %v500
        %532 = vmatprep.subr.mxu0 0.0
        %533 = vmatpush1.xpose.msra.mxu0 %v497
        %534 = vmatprep.subr.mxu0 0.0
        %535 = vmatpush2.xpose.msra.mxu0 0.0
        %536 = vmatprep.subr.mxu0 0.0
        %537 = vmatpush2.xpose.msra.mxu0 0.0
        %538 = vmatprep.subr.mxu0 0.0
        %539 = vmatpush2.xpose.msra.mxu0 0.0
        %540 = vmatprep.subr.mxu0 0.0
        %541 = vmatpush2.xpose.msra.mxu0 0.0
        %542 = vmatprep.subr.mxu0 0.0
        %543 = vmatpush2.xpose.msra.mxu0 0.0
        %544 = vmatprep.subr.mxu0 0.0
        %545 = vmatpush2.xpose.msra.mxu0 0.0
        %546 = vmatprep.subr.mxu0 0.0
        %547 = vmatpush2.xpose.msra.mxu0 0.0
        %548 = vmatprep.subr.mxu0 0.0
        %549 = vmatpush2.xpose.msra.mxu0 0.0
        %550 = vmatprep.subr.mxu0 0.0
        %551 = vmatpush2.xpose.msra.mxu0 0.0
        %552 = vmatprep.subr.mxu0 0.0
        %553 = vmatpush2.xpose.msra.mxu0 0.0
        %554 = vmatprep.subr.mxu0 0.0
        %555 = vmatpush2.xpose.msra.mxu0 0.0
        %556 = vmatprep.subr.mxu0 0.0
        %557 = vmatpush2.xpose.msra.mxu0 0.0
        %558 = vmatprep.subr.mxu0 0.0
        %559 = vmatpush2.xpose.msra.mxu0 0.0
        %560 = vmatprep.subr.mxu0 0.0
        %561 = vmatpush2.xpose.msra.mxu0 0.0
        %562 = vmatprep.subr.mxu0 0.0
        %563 = vmatpush2.xpose.msra.mxu0 0.0
        %564 = vmatprep.subr.mxu0 0.0
        %565 = vmatpush2.xpose.msra.mxu0 0.0
        %566 = vmatprep.mubr.f32.mxu0 0.0
        %567 = vmatmul.mubr.f32.gmra.mxu0 %v491
        %v568 = vpop.f32.mrf.mxu0
        %v569 = vadd.f32 0.0, %v568
        %v570 = vpop.f32.mrf.mxu0
        %571 = vmatprep.mubr.f32.mxu0 0.0
        %572 = vmatmul.mubr.f32.gmra.mxu0 %v494
        %v573 = vpop.f32.mrf.mxu0
        %v574 = vadd.f32 0.0, %v573
        %v575 = vpop.f32.mrf.mxu0
        %576 = vdwg.mxu0
        %v577 = vmul.f32 %v569, 0.25
        %v578 = vmul.f32 %v574, 0.25
        %v579 = vadd.f32 %v577, %v187
        %v580 = vadd.f32 %v578, %v188
        %v581 = vsel %vm489, %v579, -inf
        %582 = vmax.xlane.f32.xlu0 %v581
        %v583 = vpop.xlane.xlu0 %582
        %v584 = vsel %vm489, %v580, -inf
        %585 = vmax.xlane.f32.xlu0 %v584
        %v586 = vpop.xlane.xlu0 %585
        %v587 = vsub.f32 %v579, %v583
        %v588 = vsub.f32 %v580, %v586
        %v589 = vmul.f32 %v587, 1.442695
        %v590 = vpow.pop %v589
        %v591 = vmul.f32 %v588, 1.442695
        %v592 = vpow.pop %v591
        %v593 = vsel %vm489, %v590, 0.0
        %594 = vadd.xlane.f32.xlu0 %v593
        %v595 = vpop.xlane.xlu0 %594
        %v596 = vsel %vm489, %v592, 0.0
        %597 = vadd.xlane.f32.xlu0 %v596
        %v598 = vpop.xlane.xlu0 %597
        %v599 = vrcp.pop %v595
        %v600 = vmul.f32 %v590, %v599
        %v601 = vrcp.pop %v598
        %v602 = vmul.f32 %v592, %v601
        %v604 = vsel %vm489, %v600, 0
        %v607 = vsel %vm489, %v602, 0
        %609 = vmatprep.subr.mxu0 0.0
        %610 = vmatpush1.msra.mxu0 0.0
        %611 = vmatprep.subr.mxu0 0.0
        %612 = vmatpush1.msra.mxu0 0.0
        %613 = vmatprep.subr.mxu0 0.0
        %614 = vmatpush1.msra.mxu0 0.0
        %615 = vmatprep.subr.mxu0 0.0
        %616 = vmatpush1.msra.mxu0 0.0
        %617 = vmatprep.subr.mxu0 0.0
        %618 = vmatpush1.msra.mxu0 0.0
        %619 = vmatprep.subr.mxu0 0.0
        %620 = vmatpush1.msra.mxu0 0.0
        %621 = vmatprep.subr.mxu0 0.0
        %622 = vmatpush1.msra.mxu0 0.0
        %623 = vmatprep.subr.mxu0 0.0
        %624 = vmatpush1.msra.mxu0 0.0
        %625 = vmatprep.subr.mxu0 0.0
        %626 = vmatpush1.msra.mxu0 0.0
        %627 = vmatprep.subr.mxu0 0.0
        %628 = vmatpush1.msra.mxu0 0.0
        %629 = vmatprep.subr.mxu0 0.0
        %630 = vmatpush1.msra.mxu0 0.0
        %631 = vmatprep.subr.mxu0 0.0
        %632 = vmatpush1.msra.mxu0 0.0
        %633 = vmatprep.subr.mxu0 0.0
        %634 = vmatpush1.msra.mxu0 0.0
        %635 = vmatprep.subr.mxu0 0.0
        %636 = vmatpush1.msra.mxu0 0.0
        %637 = vmatprep.subr.mxu0 0.0
        %638 = vmatpush1.msra.mxu0 %v486
        %639 = vmatprep.subr.mxu0 0.0
        %640 = vmatpush1.msra.mxu0 %v481
        %641 = vmatprep.subr.mxu0 0.0
        %642 = vmatpush2.msra.mxu0 0.0
        %643 = vmatprep.subr.mxu0 0.0
        %644 = vmatpush2.msra.mxu0 0.0
        %645 = vmatprep.subr.mxu0 0.0
        %646 = vmatpush2.msra.mxu0 0.0
        %647 = vmatprep.subr.mxu0 0.0
        %648 = vmatpush2.msra.mxu0 0.0
        %649 = vmatprep.subr.mxu0 0.0
        %650 = vmatpush2.msra.mxu0 0.0
        %651 = vmatprep.subr.mxu0 0.0
        %652 = vmatpush2.msra.mxu0 0.0
        %653 = vmatprep.subr.mxu0 0.0
        %654 = vmatpush2.msra.mxu0 0.0
        %655 = vmatprep.subr.mxu0 0.0
        %656 = vmatpush2.msra.mxu0 0.0
        %657 = vmatprep.subr.mxu0 0.0
        %658 = vmatpush2.msra.mxu0 0.0
        %659 = vmatprep.subr.mxu0 0.0
        %660 = vmatpush2.msra.mxu0 0.0
        %661 = vmatprep.subr.mxu0 0.0
        %662 = vmatpush2.msra.mxu0 0.0
        %663 = vmatprep.subr.mxu0 0.0
        %664 = vmatpush2.msra.mxu0 0.0
        %665 = vmatprep.subr.mxu0 0.0
        %666 = vmatpush2.msra.mxu0 0.0
        %667 = vmatprep.subr.mxu0 0.0
        %668 = vmatpush2.msra.mxu0 0.0
        %669 = vmatprep.subr.mxu0 0.0
        %670 = vmatpush2.msra.mxu0 0.0
        %671 = vmatprep.subr.mxu0 0.0
        %672 = vmatpush2.msra.mxu0 0.0
        %673 = vmatprep.mubr.f32.mxu0 0.0
        %674 = vmatmul.mubr.f32.gmra.mxu0 %v604
        %v675 = vpop.f32.mrf.mxu0
        %v676 = vadd.f32 0.0, %v675
        %v677 = vpop.f32.mrf.mxu0
        %678 = vmatprep.mubr.f32.mxu0 0.0
        %679 = vmatmul.mubr.f32.gmra.mxu0 %v607
        %v680 = vpop.f32.mrf.mxu0
        %v681 = vadd.f32 0.0, %v680
        %v682 = vpop.f32.mrf.mxu0
        %683 = vdwg.mxu0
        %v684 = vld [vmem:[%s158 + $0xc0] sm:$0xff]
        %v685 = vld [vmem:[%s158 + $0xc8] sm:$0xff]
        %v686 = vld [vmem:[%s158 + $0x60] sm:$0xff]
        %v687 = vld [vmem:[%s158 + $0x68] sm:$0xff]
        %v688 = vld [vmem:[%s158 + $0x70] sm:$0xff]
        %v689 = vld [vmem:[%s158 + $0x78] sm:$0xff]
        %v690 = vld [vmem:[%s158 + $0x18a] sm:$0x1]
        %v691 = vlaneseq
        %v692 = vshrl.u32 %v691, 7
        %v693 = vsub.s32 0, %v692
        %v694 = vrot.slane %v690, %v693
        %695 = vmatprep.subr.mxu0 0.0
        %696 = vmatpush1.msra.mxu0 0.0
        %697 = vmatprep.subr.mxu0 0.0
        %698 = vmatpush1.msra.mxu0 0.0
        %699 = vmatprep.subr.mxu0 0.0
        %700 = vmatpush1.msra.mxu0 0.0
        %701 = vmatprep.subr.mxu0 0.0
        %702 = vmatpush1.msra.mxu0 0.0
        %703 = vmatprep.subr.mxu0 0.0
        %704 = vmatpush1.msra.mxu0 0.0
        %705 = vmatprep.subr.mxu0 0.0
        %706 = vmatpush1.msra.mxu0 0.0
        %707 = vmatprep.subr.mxu0 0.0
        %708 = vmatpush1.msra.mxu0 0.0
        %709 = vmatprep.subr.mxu0 0.0
        %710 = vmatpush1.msra.mxu0 0.0
        %711 = vmatprep.subr.mxu0 0.0
        %712 = vmatpush1.msra.mxu0 0.0
        %713 = vmatprep.subr.mxu0 0.0
        %714 = vmatpush1.msra.mxu0 0.0
        %715 = vmatprep.subr.mxu0 0.0
        %716 = vmatpush1.msra.mxu0 0.0
        %717 = vmatprep.subr.mxu0 0.0
        %718 = vmatpush1.msra.mxu0 0.0
        %719 = vmatprep.subr.mxu0 0.0
        %720 = vmatpush1.msra.mxu0 %v689
        %721 = vmatprep.subr.mxu0 0.0
        %722 = vmatpush1.msra.mxu0 %v688
        %723 = vmatprep.subr.mxu0 0.0
        %724 = vmatpush1.msra.mxu0 %v687
        %725 = vmatprep.subr.mxu0 0.0
        %726 = vmatpush1.msra.mxu0 %v686
        %727 = vmatprep.subr.mxu0 0.0
        %728 = vmatpush2.msra.mxu0 0.0
        %729 = vmatprep.subr.mxu0 0.0
        %730 = vmatpush2.msra.mxu0 0.0
        %731 = vmatprep.subr.mxu0 0.0
        %732 = vmatpush2.msra.mxu0 0.0
        %733 = vmatprep.subr.mxu0 0.0
        %734 = vmatpush2.msra.mxu0 0.0
        %735 = vmatprep.subr.mxu0 0.0
        %736 = vmatpush2.msra.mxu0 0.0
        %737 = vmatprep.subr.mxu0 0.0
        %738 = vmatpush2.msra.mxu0 0.0
        %739 = vmatprep.subr.mxu0 0.0
        %740 = vmatpush2.msra.mxu0 0.0
        %741 = vmatprep.subr.mxu0 0.0
        %742 = vmatpush2.msra.mxu0 0.0
        %743 = vmatprep.subr.mxu0 0.0
        %744 = vmatpush2.msra.mxu0 0.0
        %745 = vmatprep.subr.mxu0 0.0
        %746 = vmatpush2.msra.mxu0 0.0
        %747 = vmatprep.subr.mxu0 0.0
        %748 = vmatpush2.msra.mxu0 0.0
        %749 = vmatprep.subr.mxu0 0.0
        %750 = vmatpush2.msra.mxu0 0.0
        %751 = vmatprep.subr.mxu0 0.0
        %752 = vmatpush2.msra.mxu0 0.0
        %753 = vmatprep.subr.mxu0 0.0
        %754 = vmatpush2.msra.mxu0 0.0
        %755 = vmatprep.subr.mxu0 0.0
        %756 = vmatpush2.msra.mxu0 0.0
        %757 = vmatprep.subr.mxu0 0.0
        %758 = vmatpush2.msra.mxu0 0.0
        %759 = vmatprep.mubr.f32.mxu0 0.0
        %760 = vmatmul.mubr.f32.gmra.mxu0 %v241
        %v761 = vpop.f32.mrf.mxu0
        %v762 = vadd.f32 %v694, %v761
        %v763 = vpop.f32.mrf.mxu0
        %764 = vmatprep.mubr.f32.mxu0 0.0
        %765 = vmatmul.mubr.f32.gmra.mxu0 %v244
        %v766 = vpop.f32.mrf.mxu0
        %v767 = vadd.f32 %v694, %v766
        %v768 = vpop.f32.mrf.mxu0
        %769 = vdwg.mxu0
        %v770 = vld [vmem:[%s158 + $0x80] sm:$0xff]
        %v771 = vld [vmem:[%s158 + $0x88] sm:$0xff]
        %v772 = vld [vmem:[%s158 + $0x90] sm:$0xff]
        %v773 = vld [vmem:[%s158 + $0x98] sm:$0xff]
        %v774 = vld [vmem:[%s158 + $0x18b] sm:$0x1]
        %v775 = vlaneseq
        %v776 = vshrl.u32 %v775, 7
        %v777 = vsub.s32 0, %v776
        %v778 = vrot.slane %v774, %v777
        %779 = vmatprep.subr.mxu0 0.0
        %780 = vmatpush1.msra.mxu0 0.0
        %781 = vmatprep.subr.mxu0 0.0
        %782 = vmatpush1.msra.mxu0 0.0
        %783 = vmatprep.subr.mxu0 0.0
        %784 = vmatpush1.msra.mxu0 0.0
        %785 = vmatprep.subr.mxu0 0.0
        %786 = vmatpush1.msra.mxu0 0.0
        %787 = vmatprep.subr.mxu0 0.0
        %788 = vmatpush1.msra.mxu0 0.0
        %789 = vmatprep.subr.mxu0 0.0
        %790 = vmatpush1.msra.mxu0 0.0
        %791 = vmatprep.subr.mxu0 0.0
        %792 = vmatpush1.msra.mxu0 0.0
        %793 = vmatprep.subr.mxu0 0.0
        %794 = vmatpush1.msra.mxu0 0.0
        %795 = vmatprep.subr.mxu0 0.0
        %796 = vmatpush1.msra.mxu0 0.0
        %797 = vmatprep.subr.mxu0 0.0
        %798 = vmatpush1.msra.mxu0 0.0
        %799 = vmatprep.subr.mxu0 0.0
        %800 = vmatpush1.msra.mxu0 0.0
        %801 = vmatprep.subr.mxu0 0.0
        %802 = vmatpush1.msra.mxu0 0.0
        %803 = vmatprep.subr.mxu0 0.0
        %804 = vmatpush1.msra.mxu0 %v773
        %805 = vmatprep.subr.mxu0 0.0
        %806 = vmatpush1.msra.mxu0 %v772
        %807 = vmatprep.subr.mxu0 0.0
        %808 = vmatpush1.msra.mxu0 %v771
        %809 = vmatprep.subr.mxu0 0.0
        %810 = vmatpush1.msra.mxu0 %v770
        %811 = vmatprep.subr.mxu0 0.0
        %812 = vmatpush2.msra.mxu0 0.0
        %813 = vmatprep.subr.mxu0 0.0
        %814 = vmatpush2.msra.mxu0 0.0
        %815 = vmatprep.subr.mxu0 0.0
        %816 = vmatpush2.msra.mxu0 0.0
        %817 = vmatprep.subr.mxu0 0.0
        %818 = vmatpush2.msra.mxu0 0.0
        %819 = vmatprep.subr.mxu0 0.0
        %820 = vmatpush2.msra.mxu0 0.0
        %821 = vmatprep.subr.mxu0 0.0
        %822 = vmatpush2.msra.mxu0 0.0
        %823 = vmatprep.subr.mxu0 0.0
        %824 = vmatpush2.msra.mxu0 0.0
        %825 = vmatprep.subr.mxu0 0.0
        %826 = vmatpush2.msra.mxu0 0.0
        %827 = vmatprep.subr.mxu0 0.0
        %828 = vmatpush2.msra.mxu0 0.0
        %829 = vmatprep.subr.mxu0 0.0
        %830 = vmatpush2.msra.mxu0 0.0
        %831 = vmatprep.subr.mxu0 0.0
        %832 = vmatpush2.msra.mxu0 0.0
        %833 = vmatprep.subr.mxu0 0.0
        %834 = vmatpush2.msra.mxu0 0.0
        %835 = vmatprep.subr.mxu0 0.0
        %836 = vmatpush2.msra.mxu0 0.0
        %837 = vmatprep.subr.mxu0 0.0
        %838 = vmatpush2.msra.mxu0 0.0
        %839 = vmatprep.subr.mxu0 0.0
        %840 = vmatpush2.msra.mxu0 0.0
        %841 = vmatprep.subr.mxu0 0.0
        %842 = vmatpush2.msra.mxu0 0.0
        %843 = vmatprep.mubr.f32.mxu0 0.0
        %844 = vmatmul.mubr.f32.gmra.mxu0 %v241
        %v845 = vpop.f32.mrf.mxu0
        %v846 = vadd.f32 %v778, %v845
        %v847 = vpop.f32.mrf.mxu0
        %848 = vmatprep.mubr.f32.mxu0 0.0
        %849 = vmatmul.mubr.f32.gmra.mxu0 %v244
        %v850 = vpop.f32.mrf.mxu0
        %v851 = vadd.f32 %v778, %v850
        %v852 = vpop.f32.mrf.mxu0
        %853 = vdwg.mxu0
        %v854 = vld [vmem:[%s158 + $0xa0] sm:$0xff]
        %v855 = vld [vmem:[%s158 + $0xa8] sm:$0xff]
        %v856 = vld [vmem:[%s158 + $0xb0] sm:$0xff]
        %v857 = vld [vmem:[%s158 + $0xb8] sm:$0xff]
        %v858 = vld [vmem:[%s158 + $0x18c] sm:$0x1]
        %v859 = vlaneseq
        %v860 = vshrl.u32 %v859, 7
        %v861 = vsub.s32 0, %v860
        %v862 = vrot.slane %v858, %v861
        %863 = vmatprep.subr.mxu0 0.0
        %864 = vmatpush1.msra.mxu0 0.0
        %865 = vmatprep.subr.mxu0 0.0
        %866 = vmatpush1.msra.mxu0 0.0
        %867 = vmatprep.subr.mxu0 0.0
        %868 = vmatpush1.msra.mxu0 0.0
        %869 = vmatprep.subr.mxu0 0.0
        %870 = vmatpush1.msra.mxu0 0.0
        %871 = vmatprep.subr.mxu0 0.0
        %872 = vmatpush1.msra.mxu0 0.0
        %873 = vmatprep.subr.mxu0 0.0
        %874 = vmatpush1.msra.mxu0 0.0
        %875 = vmatprep.subr.mxu0 0.0
        %876 = vmatpush1.msra.mxu0 0.0
        %877 = vmatprep.subr.mxu0 0.0
        %878 = vmatpush1.msra.mxu0 0.0
        %879 = vmatprep.subr.mxu0 0.0
        %880 = vmatpush1.msra.mxu0 0.0
        %881 = vmatprep.subr.mxu0 0.0
        %882 = vmatpush1.msra.mxu0 0.0
        %883 = vmatprep.subr.mxu0 0.0
        %884 = vmatpush1.msra.mxu0 0.0
        %885 = vmatprep.subr.mxu0 0.0
        %886 = vmatpush1.msra.mxu0 0.0
        %887 = vmatprep.subr.mxu0 0.0
        %888 = vmatpush1.msra.mxu0 %v857
        %889 = vmatprep.subr.mxu0 0.0
        %890 = vmatpush1.msra.mxu0 %v856
        %891 = vmatprep.subr.mxu0 0.0
        %892 = vmatpush1.msra.mxu0 %v855
        %893 = vmatprep.subr.mxu0 0.0
        %894 = vmatpush1.msra.mxu0 %v854
        %895 = vmatprep.subr.mxu0 0.0
        %896 = vmatpush2.msra.mxu0 0.0
        %897 = vmatprep.subr.mxu0 0.0
        %898 = vmatpush2.msra.mxu0 0.0
        %899 = vmatprep.subr.mxu0 0.0
        %900 = vmatpush2.msra.mxu0 0.0
        %901 = vmatprep.subr.mxu0 0.0
        %902 = vmatpush2.msra.mxu0 0.0
        %903 = vmatprep.subr.mxu0 0.0
        %904 = vmatpush2.msra.mxu0 0.0
        %905 = vmatprep.subr.mxu0 0.0
        %906 = vmatpush2.msra.mxu0 0.0
        %907 = vmatprep.subr.mxu0 0.0
        %908 = vmatpush2.msra.mxu0 0.0
        %909 = vmatprep.subr.mxu0 0.0
        %910 = vmatpush2.msra.mxu0 0.0
        %911 = vmatprep.subr.mxu0 0.0
        %912 = vmatpush2.msra.mxu0 0.0
        %913 = vmatprep.subr.mxu0 0.0
        %914 = vmatpush2.msra.mxu0 0.0
        %915 = vmatprep.subr.mxu0 0.0
        %916 = vmatpush2.msra.mxu0 0.0
        %917 = vmatprep.subr.mxu0 0.0
        %918 = vmatpush2.msra.mxu0 0.0
        %919 = vmatprep.subr.mxu0 0.0
        %920 = vmatpush2.msra.mxu0 0.0
        %921 = vmatprep.subr.mxu0 0.0
        %922 = vmatpush2.msra.mxu0 0.0
        %923 = vmatprep.subr.mxu0 0.0
        %924 = vmatpush2.msra.mxu0 0.0
        %925 = vmatprep.subr.mxu0 0.0
        %926 = vmatpush2.msra.mxu0 0.0
        %927 = vmatprep.mubr.f32.mxu0 0.0
        %928 = vmatmul.mubr.f32.gmra.mxu0 %v241
        %v929 = vpop.f32.mrf.mxu0
        %v930 = vadd.f32 %v862, %v929
        %v931 = vpop.f32.mrf.mxu0
        %932 = vmatprep.mubr.f32.mxu0 0.0
        %933 = vmatmul.mubr.f32.gmra.mxu0 %v244
        %v934 = vpop.f32.mrf.mxu0
        %v935 = vadd.f32 %v862, %v934
        %v936 = vpop.f32.mrf.mxu0
        %937 = vdwg.mxu0
        %v939 = vsel %vm489, %v762, 0
        %v942 = vsel %vm489, %v767, 0
        %v945 = vsel %vm489, %v846, 0
        %v948 = vsel %vm489, %v851, 0
        %950 = vmatprep.subr.mxu0 0.0
        %951 = vmatpush1.xpose.msra.mxu0 0.0
        %952 = vmatprep.subr.mxu0 0.0
        %953 = vmatpush1.xpose.msra.mxu0 0.0
        %954 = vmatprep.subr.mxu0 0.0
        %955 = vmatpush1.xpose.msra.mxu0 0.0
        %956 = vmatprep.subr.mxu0 0.0
        %957 = vmatpush1.xpose.msra.mxu0 0.0
        %958 = vmatprep.subr.mxu0 0.0
        %959 = vmatpush1.xpose.msra.mxu0 0.0
        %960 = vmatprep.subr.mxu0 0.0
        %961 = vmatpush1.xpose.msra.mxu0 0.0
        %962 = vmatprep.subr.mxu0 0.0
        %963 = vmatpush1.xpose.msra.mxu0 0.0
        %964 = vmatprep.subr.mxu0 0.0
        %965 = vmatpush1.xpose.msra.mxu0 0.0
        %966 = vmatprep.subr.mxu0 0.0
        %967 = vmatpush1.xpose.msra.mxu0 0.0
        %968 = vmatprep.subr.mxu0 0.0
        %969 = vmatpush1.xpose.msra.mxu0 0.0
        %970 = vmatprep.subr.mxu0 0.0
        %971 = vmatpush1.xpose.msra.mxu0 0.0
        %972 = vmatprep.subr.mxu0 0.0
        %973 = vmatpush1.xpose.msra.mxu0 0.0
        %974 = vmatprep.subr.mxu0 0.0
        %975 = vmatpush1.xpose.msra.mxu0 0.0
        %976 = vmatprep.subr.mxu0 0.0
        %977 = vmatpush1.xpose.msra.mxu0 0.0
        %978 = vmatprep.subr.mxu0 0.0
        %979 = vmatpush1.xpose.msra.mxu0 %v948
        %980 = vmatprep.subr.mxu0 0.0
        %981 = vmatpush1.xpose.msra.mxu0 %v945
        %982 = vmatprep.subr.mxu0 0.0
        %983 = vmatpush2.xpose.msra.mxu0 0.0
        %984 = vmatprep.subr.mxu0 0.0
        %985 = vmatpush2.xpose.msra.mxu0 0.0
        %986 = vmatprep.subr.mxu0 0.0
        %987 = vmatpush2.xpose.msra.mxu0 0.0
        %988 = vmatprep.subr.mxu0 0.0
        %989 = vmatpush2.xpose.msra.mxu0 0.0
        %990 = vmatprep.subr.mxu0 0.0
        %991 = vmatpush2.xpose.msra.mxu0 0.0
        %992 = vmatprep.subr.mxu0 0.0
        %993 = vmatpush2.xpose.msra.mxu0 0.0
        %994 = vmatprep.subr.mxu0 0.0
        %995 = vmatpush2.xpose.msra.mxu0 0.0
        %996 = vmatprep.subr.mxu0 0.0
        %997 = vmatpush2.xpose.msra.mxu0 0.0
        %998 = vmatprep.subr.mxu0 0.0
        %999 = vmatpush2.xpose.msra.mxu0 0.0
        %1000 = vmatprep.subr.mxu0 0.0
        %1001 = vmatpush2.xpose.msra.mxu0 0.0
        %1002 = vmatprep.subr.mxu0 0.0
        %1003 = vmatpush2.xpose.msra.mxu0 0.0
        %1004 = vmatprep.subr.mxu0 0.0
        %1005 = vmatpush2.xpose.msra.mxu0 0.0
        %1006 = vmatprep.subr.mxu0 0.0
        %1007 = vmatpush2.xpose.msra.mxu0 0.0
        %1008 = vmatprep.subr.mxu0 0.0
        %1009 = vmatpush2.xpose.msra.mxu0 0.0
        %1010 = vmatprep.subr.mxu0 0.0
        %1011 = vmatpush2.xpose.msra.mxu0 0.0
        %1012 = vmatprep.subr.mxu0 0.0
        %1013 = vmatpush2.xpose.msra.mxu0 0.0
        %1014 = vmatprep.mubr.f32.mxu0 0.0
        %1015 = vmatmul.mubr.f32.gmra.mxu0 %v939
        %v1016 = vpop.f32.mrf.mxu0
        %v1017 = vadd.f32 0.0, %v1016
        %v1018 = vpop.f32.mrf.mxu0
        %1019 = vmatprep.mubr.f32.mxu0 0.0
        %1020 = vmatmul.mubr.f32.gmra.mxu0 %v942
        %v1021 = vpop.f32.mrf.mxu0
        %v1022 = vadd.f32 0.0, %v1021
        %v1023 = vpop.f32.mrf.mxu0
        %1024 = vdwg.mxu0
        %v1025 = vmul.f32 %v1017, 0.25
        %v1026 = vmul.f32 %v1022, 0.25
        %v1027 = vadd.f32 %v1025, %v187
        %v1028 = vadd.f32 %v1026, %v188
        %v1029 = vsel %vm489, %v1027, -inf
        %1030 = vmax.xlane.f32.xlu0 %v1029
        %v1031 = vpop.xlane.xlu0 %1030
        %v1032 = vsel %vm489, %v1028, -inf
        %1033 = vmax.xlane.f32.xlu0 %v1032
        %v1034 = vpop.xlane.xlu0 %1033
        %v1035 = vsub.f32 %v1027, %v1031
        %v1036 = vsub.f32 %v1028, %v1034
        %v1037 = vmul.f32 %v1035, 1.442695
        %v1038 = vpow.pop %v1037
        %v1039 = vmul.f32 %v1036, 1.442695
        %v1040 = vpow.pop %v1039
        %v1041 = vsel %vm489, %v1038, 0.0
        %1042 = vadd.xlane.f32.xlu0 %v1041
        %v1043 = vpop.xlane.xlu0 %1042
        %v1044 = vsel %vm489, %v1040, 0.0
        %1045 = vadd.xlane.f32.xlu0 %v1044
        %v1046 = vpop.xlane.xlu0 %1045
        %v1047 = vrcp.pop %v1043
        %v1048 = vmul.f32 %v1038, %v1047
        %v1049 = vrcp.pop %v1046
        %v1050 = vmul.f32 %v1040, %v1049
        %v1052 = vsel %vm489, %v1048, 0
        %v1055 = vsel %vm489, %v1050, 0
        %1057 = vmatprep.subr.mxu0 0.0
        %1058 = vmatpush1.msra.mxu0 0.0
        %1059 = vmatprep.subr.mxu0 0.0
        %1060 = vmatpush1.msra.mxu0 0.0
        %1061 = vmatprep.subr.mxu0 0.0
        %1062 = vmatpush1.msra.mxu0 0.0
        %1063 = vmatprep.subr.mxu0 0.0
        %1064 = vmatpush1.msra.mxu0 0.0
        %1065 = vmatprep.subr.mxu0 0.0
        %1066 = vmatpush1.msra.mxu0 0.0
        %1067 = vmatprep.subr.mxu0 0.0
        %1068 = vmatpush1.msra.mxu0 0.0
        %1069 = vmatprep.subr.mxu0 0.0
        %1070 = vmatpush1.msra.mxu0 0.0
        %1071 = vmatprep.subr.mxu0 0.0
        %1072 = vmatpush1.msra.mxu0 0.0
        %1073 = vmatprep.subr.mxu0 0.0
        %1074 = vmatpush1.msra.mxu0 0.0
        %1075 = vmatprep.subr.mxu0 0.0
        %1076 = vmatpush1.msra.mxu0 0.0
        %1077 = vmatprep.subr.mxu0 0.0
        %1078 = vmatpush1.msra.mxu0 0.0
        %1079 = vmatprep.subr.mxu0 0.0
        %1080 = vmatpush1.msra.mxu0 0.0
        %1081 = vmatprep.subr.mxu0 0.0
        %1082 = vmatpush1.msra.mxu0 0.0
        %1083 = vmatprep.subr.mxu0 0.0
        %1084 = vmatpush1.msra.mxu0 0.0
        %1085 = vmatprep.subr.mxu0 0.0
        %1086 = vmatpush1.msra.mxu0 %v935
        %1087 = vmatprep.subr.mxu0 0.0
        %1088 = vmatpush1.msra.mxu0 %v930
        %1089 = vmatprep.subr.mxu0 0.0
        %1090 = vmatpush2.msra.mxu0 0.0
        %1091 = vmatprep.subr.mxu0 0.0
        %1092 = vmatpush2.msra.mxu0 0.0
        %1093 = vmatprep.subr.mxu0 0.0
        %1094 = vmatpush2.msra.mxu0 0.0
        %1095 = vmatprep.subr.mxu0 0.0
        %1096 = vmatpush2.msra.mxu0 0.0
        %1097 = vmatprep.subr.mxu0 0.0
        %1098 = vmatpush2.msra.mxu0 0.0
        %1099 = vmatprep.subr.mxu0 0.0
        %1100 = vmatpush2.msra.mxu0 0.0
        %1101 = vmatprep.subr.mxu0 0.0
        %1102 = vmatpush2.msra.mxu0 0.0
        %1103 = vmatprep.subr.mxu0 0.0
        %1104 = vmatpush2.msra.mxu0 0.0
        %1105 = vmatprep.subr.mxu0 0.0
        %1106 = vmatpush2.msra.mxu0 0.0
        %1107 = vmatprep.subr.mxu0 0.0
        %1108 = vmatpush2.msra.mxu0 0.0
        %1109 = vmatprep.subr.mxu0 0.0
        %1110 = vmatpush2.msra.mxu0 0.0
        %1111 = vmatprep.subr.mxu0 0.0
        %1112 = vmatpush2.msra.mxu0 0.0
        %1113 = vmatprep.subr.mxu0 0.0
        %1114 = vmatpush2.msra.mxu0 0.0
        %1115 = vmatprep.subr.mxu0 0.0
        %1116 = vmatpush2.msra.mxu0 0.0
        %1117 = vmatprep.subr.mxu0 0.0
        %1118 = vmatpush2.msra.mxu0 0.0
        %1119 = vmatprep.subr.mxu0 0.0
        %1120 = vmatpush2.msra.mxu0 0.0
        %1121 = vmatprep.mubr.f32.mxu0 0.0
        %1122 = vmatmul.mubr.f32.gmra.mxu0 %v1052
        %v1123 = vpop.f32.mrf.mxu0
        %v1124 = vadd.f32 0.0, %v1123
        %v1125 = vpop.f32.mrf.mxu0
        %1126 = vmatprep.mubr.f32.mxu0 0.0
        %1127 = vmatmul.mubr.f32.gmra.mxu0 %v1055
        %v1128 = vpop.f32.mrf.mxu0
        %v1129 = vadd.f32 0.0, %v1128
        %v1130 = vpop.f32.mrf.mxu0
        %1131 = vdwg.mxu0
        %v1132 = vld [vmem:[%s158 + $0xd0] sm:$0xff]
        %v1133 = vld [vmem:[%s158 + $0xd8] sm:$0xff]
        %v1135 = vsel %vm489, %v1124, 0
        %v1138 = vsel %vm489, %v1129, 0
        %1140 = vmatprep.subr.mxu0 0.0
        %1141 = vmatpush1.msra.mxu0 0.0
        %1142 = vmatprep.subr.mxu0 0.0
        %1143 = vmatpush1.msra.mxu0 0.0
        %1144 = vmatprep.subr.mxu0 0.0
        %1145 = vmatpush1.msra.mxu0 0.0
        %1146 = vmatprep.subr.mxu0 0.0
        %1147 = vmatpush1.msra.mxu0 0.0
        %1148 = vmatprep.subr.mxu0 0.0
        %1149 = vmatpush1.msra.mxu0 0.0
        %1150 = vmatprep.subr.mxu0 0.0
        %1151 = vmatpush1.msra.mxu0 0.0
        %1152 = vmatprep.subr.mxu0 0.0
        %1153 = vmatpush1.msra.mxu0 0.0
        %1154 = vmatprep.subr.mxu0 0.0
        %1155 = vmatpush1.msra.mxu0 0.0
        %1156 = vmatprep.subr.mxu0 0.0
        %1157 = vmatpush1.msra.mxu0 0.0
        %1158 = vmatprep.subr.mxu0 0.0
        %1159 = vmatpush1.msra.mxu0 0.0
        %1160 = vmatprep.subr.mxu0 0.0
        %1161 = vmatpush1.msra.mxu0 0.0
        %1162 = vmatprep.subr.mxu0 0.0
        %1163 = vmatpush1.msra.mxu0 0.0
        %1164 = vmatprep.subr.mxu0 0.0
        %1165 = vmatpush1.msra.mxu0 0.0
        %1166 = vmatprep.subr.mxu0 0.0
        %1167 = vmatpush1.msra.mxu0 0.0
        %1168 = vmatprep.subr.mxu0 0.0
        %1169 = vmatpush1.msra.mxu0 %v1133
        %1170 = vmatprep.subr.mxu0 0.0
        %1171 = vmatpush1.msra.mxu0 %v1132
        %1172 = vmatprep.subr.mxu0 0.0
        %1173 = vmatpush2.msra.mxu0 0.0
        %1174 = vmatprep.subr.mxu0 0.0
        %1175 = vmatpush2.msra.mxu0 0.0
        %1176 = vmatprep.subr.mxu0 0.0
        %1177 = vmatpush2.msra.mxu0 0.0
        %1178 = vmatprep.subr.mxu0 0.0
        %1179 = vmatpush2.msra.mxu0 0.0
        %1180 = vmatprep.subr.mxu0 0.0
        %1181 = vmatpush2.msra.mxu0 0.0
        %1182 = vmatprep.subr.mxu0 0.0
        %1183 = vmatpush2.msra.mxu0 0.0
        %1184 = vmatprep.subr.mxu0 0.0
        %1185 = vmatpush2.msra.mxu0 0.0
        %1186 = vmatprep.subr.mxu0 0.0
        %1187 = vmatpush2.msra.mxu0 0.0
        %1188 = vmatprep.subr.mxu0 0.0
        %1189 = vmatpush2.msra.mxu0 0.0
        %1190 = vmatprep.subr.mxu0 0.0
        %1191 = vmatpush2.msra.mxu0 0.0
        %1192 = vmatprep.subr.mxu0 0.0
        %1193 = vmatpush2.msra.mxu0 0.0
        %1194 = vmatprep.subr.mxu0 0.0
        %1195 = vmatpush2.msra.mxu0 0.0
        %1196 = vmatprep.subr.mxu0 0.0
        %1197 = vmatpush2.msra.mxu0 0.0
        %1198 = vmatprep.subr.mxu0 0.0
        %1199 = vmatpush2.msra.mxu0 0.0
        %1200 = vmatprep.subr.mxu0 0.0
        %1201 = vmatpush2.msra.mxu0 0.0
        %1202 = vmatprep.subr.mxu0 0.0
        %1203 = vmatpush2.msra.mxu0 0.0
        %1204 = vmatprep.mubr.f32.mxu0 0.0
        %1205 = vmatmul.mubr.f32.gmra.mxu0 %v1135
        %v1206 = vpop.f32.mrf.mxu0
        %v1207 = vadd.f32 0.0, %v1206
        %v1208 = vpop.f32.mrf.mxu0
        %1209 = vmatprep.mubr.f32.mxu0 0.0
        %1210 = vmatmul.mubr.f32.gmra.mxu0 %v1138
        %v1211 = vpop.f32.mrf.mxu0
        %v1212 = vadd.f32 0.0, %v1211
        %v1213 = vpop.f32.mrf.mxu0
        %1214 = vdwg.mxu0
        %v1216 = vsel %vm489, %v676, 0
        %v1219 = vsel %vm489, %v681, 0
        %1221 = vmatprep.subr.mxu0 0.0
        %1222 = vmatpush1.msra.mxu0 0.0
        %1223 = vmatprep.subr.mxu0 0.0
        %1224 = vmatpush1.msra.mxu0 0.0
        %1225 = vmatprep.subr.mxu0 0.0
        %1226 = vmatpush1.msra.mxu0 0.0
        %1227 = vmatprep.subr.mxu0 0.0
        %1228 = vmatpush1.msra.mxu0 0.0
        %1229 = vmatprep.subr.mxu0 0.0
        %1230 = vmatpush1.msra.mxu0 0.0
        %1231 = vmatprep.subr.mxu0 0.0
        %1232 = vmatpush1.msra.mxu0 0.0
        %1233 = vmatprep.subr.mxu0 0.0
        %1234 = vmatpush1.msra.mxu0 0.0
        %1235 = vmatprep.subr.mxu0 0.0
        %1236 = vmatpush1.msra.mxu0 0.0
        %1237 = vmatprep.subr.mxu0 0.0
        %1238 = vmatpush1.msra.mxu0 0.0
        %1239 = vmatprep.subr.mxu0 0.0
        %1240 = vmatpush1.msra.mxu0 0.0
        %1241 = vmatprep.subr.mxu0 0.0
        %1242 = vmatpush1.msra.mxu0 0.0
        %1243 = vmatprep.subr.mxu0 0.0
        %1244 = vmatpush1.msra.mxu0 0.0
        %1245 = vmatprep.subr.mxu0 0.0
        %1246 = vmatpush1.msra.mxu0 0.0
        %1247 = vmatprep.subr.mxu0 0.0
        %1248 = vmatpush1.msra.mxu0 0.0
        %1249 = vmatprep.subr.mxu0 0.0
        %1250 = vmatpush1.msra.mxu0 %v685
        %1251 = vmatprep.subr.mxu0 0.0
        %1252 = vmatpush1.msra.mxu0 %v684
        %1253 = vmatprep.subr.mxu0 0.0
        %1254 = vmatpush2.msra.mxu0 0.0
        %1255 = vmatprep.subr.mxu0 0.0
        %1256 = vmatpush2.msra.mxu0 0.0
        %1257 = vmatprep.subr.mxu0 0.0
        %1258 = vmatpush2.msra.mxu0 0.0
        %1259 = vmatprep.subr.mxu0 0.0
        %1260 = vmatpush2.msra.mxu0 0.0
        %1261 = vmatprep.subr.mxu0 0.0
        %1262 = vmatpush2.msra.mxu0 0.0
        %1263 = vmatprep.subr.mxu0 0.0
        %1264 = vmatpush2.msra.mxu0 0.0
        %1265 = vmatprep.subr.mxu0 0.0
        %1266 = vmatpush2.msra.mxu0 0.0
        %1267 = vmatprep.subr.mxu0 0.0
        %1268 = vmatpush2.msra.mxu0 0.0
        %1269 = vmatprep.subr.mxu0 0.0
        %1270 = vmatpush2.msra.mxu0 0.0
        %1271 = vmatprep.subr.mxu0 0.0
        %1272 = vmatpush2.msra.mxu0 0.0
        %1273 = vmatprep.subr.mxu0 0.0
        %1274 = vmatpush2.msra.mxu0 0.0
        %1275 = vmatprep.subr.mxu0 0.0
        %1276 = vmatpush2.msra.mxu0 0.0
        %1277 = vmatprep.subr.mxu0 0.0
        %1278 = vmatpush2.msra.mxu0 0.0
        %1279 = vmatprep.subr.mxu0 0.0
        %1280 = vmatpush2.msra.mxu0 0.0
        %1281 = vmatprep.subr.mxu0 0.0
        %1282 = vmatpush2.msra.mxu0 0.0
        %1283 = vmatprep.subr.mxu0 0.0
        %1284 = vmatpush2.msra.mxu0 0.0
        %1285 = vmatprep.mubr.f32.mxu0 0.0
        %1286 = vmatmul.mubr.f32.gmra.mxu0 %v1216
        %v1287 = vpop.f32.mrf.mxu0
        %v1288 = vadd.f32 %v1207, %v1287
        %v1289 = vpop.f32.mrf.mxu0
        %1290 = vmatprep.mubr.f32.mxu0 0.0
        %1291 = vmatmul.mubr.f32.gmra.mxu0 %v1219
        %v1292 = vpop.f32.mrf.mxu0
        %v1293 = vadd.f32 %v1212, %v1292
        %v1294 = vpop.f32.mrf.mxu0
        %1295 = vdwg.mxu0
        %v1296 = vadd.f32 %v185, %v1288
        %v1297 = vadd.f32 %v186, %v1293
        %v1298 = vld [vmem:[%s158 + $0x184] sm:$0x1]
        %v1299 = vlaneseq
        %v1300 = vshrl.u32 %v1299, 7
        %v1301 = vsub.s32 0, %v1300
        %v1302 = vrot.slane %v1298, %v1301
        %v1303 = vadd.f32 %v1296, %v1302
        %v1304 = vadd.f32 %v1297, %v1302
        %v1305 = vld [vmem:[%s158 + $0x182] sm:$0x1]
        %v1306 = vld [vmem:[%s158 + $0x183] sm:$0x1]
        %v1307 = vsel %vm191, %v1303, 0.0
        %1308 = vadd.xlane.f32.xlu0 %v1307
        %v1309 = vpop.xlane.xlu0 %1308
        %v1310 = vsel %vm191, %v1304, 0.0
        %1311 = vadd.xlane.f32.xlu0 %v1310
        %v1312 = vpop.xlane.xlu0 %1311
        %v1313 = vmul.f32 %v1309, %v198
        %v1314 = vmul.f32 %v1312, %v198
        %v1315 = vsub.f32 %v1303, %v1313
        %v1316 = vsub.f32 %v1304, %v1314
        %v1317 = vmul.f32 %v1315, %v1315
        %v1318 = vmul.f32 %v1316, %v1316
        %v1319 = vsel %vm191, %v1317, 0.0
        %1320 = vadd.xlane.f32.xlu0 %v1319
        %v1321 = vpop.xlane.xlu0 %1320
        %v1322 = vsel %vm191, %v1318, 0.0
        %1323 = vadd.xlane.f32.xlu0 %v1322
        %v1324 = vpop.xlane.xlu0 %1323
        %v1325 = vmul.f32 %v1321, %v198
        %v1326 = vmul.f32 %v1324, %v198
        %v1327 = vadd.f32 %v1325, 1e-05
        %v1328 = vadd.f32 %v1326, 1e-05
        %v1329 = vrsqrt.pop %v1327
        %v1330 = vrsqrt.pop %v1328
        %v1331 = vmul.f32 %v1315, %v1329
        %v1332 = vmul.f32 %v1316, %v1330
        %v1333 = vlaneseq
        %v1334 = vshrl.u32 %v1333, 7
        %v1335 = vsub.s32 0, %v1334
        %v1336 = vrot.slane %v1305, %v1335
        %v1337 = vmul.f32 %v1331, %v1336
        %v1338 = vmul.f32 %v1332, %v1336
        %v1339 = vlaneseq
        %v1340 = vshrl.u32 %v1339, 7
        %v1341 = vsub.s32 0, %v1340
        %v1342 = vrot.slane %v1306, %v1341
        %v1343 = vadd.f32 %v1337, %v1342
        %v1344 = vadd.f32 %v1338, %v1342
        %v1345 = vld [vmem:[%s158 + $0xe0] sm:$0xff]
        %v1346 = vld [vmem:[%s158 + $0xe8] sm:$0xff]
        %v1347 = vld [vmem:[%s158 + $0xf0] sm:$0xff]
        %v1348 = vld [vmem:[%s158 + $0xf8] sm:$0xff]
        %v1349 = vld [vmem:[%s158 + $0x185] sm:$0x1]
        %v1350 = vlaneseq
        %v1351 = vshrl.u32 %v1350, 7
        %v1352 = vsub.s32 0, %v1351
        %v1353 = vrot.slane %v1349, %v1352
        %v1355 = vsel %vm191, %v1343, 0
        %v1358 = vsel %vm191, %v1344, 0
        %1360 = vmatprep.subr.mxu0 0.0
        %1361 = vmatpush1.msra.mxu0 0.0
        %1362 = vmatprep.subr.mxu0 0.0
        %1363 = vmatpush1.msra.mxu0 0.0
        %1364 = vmatprep.subr.mxu0 0.0
        %1365 = vmatpush1.msra.mxu0 0.0
        %1366 = vmatprep.subr.mxu0 0.0
        %1367 = vmatpush1.msra.mxu0 0.0
        %1368 = vmatprep.subr.mxu0 0.0
        %1369 = vmatpush1.msra.mxu0 0.0
        %1370 = vmatprep.subr.mxu0 0.0
        %1371 = vmatpush1.msra.mxu0 0.0
        %1372 = vmatprep.subr.mxu0 0.0
        %1373 = vmatpush1.msra.mxu0 0.0
        %1374 = vmatprep.subr.mxu0 0.0
        %1375 = vmatpush1.msra.mxu0 0.0
        %1376 = vmatprep.subr.mxu0 0.0
        %1377 = vmatpush1.msra.mxu0 0.0
        %1378 = vmatprep.subr.mxu0 0.0
        %1379 = vmatpush1.msra.mxu0 0.0
        %1380 = vmatprep.subr.mxu0 0.0
        %1381 = vmatpush1.msra.mxu0 0.0
        %1382 = vmatprep.subr.mxu0 0.0
        %1383 = vmatpush1.msra.mxu0 0.0
        %1384 = vmatprep.subr.mxu0 0.0
        %1385 = vmatpush1.msra.mxu0 %v1348
        %1386 = vmatprep.subr.mxu0 0.0
        %1387 = vmatpush1.msra.mxu0 %v1347
        %1388 = vmatprep.subr.mxu0 0.0
        %1389 = vmatpush1.msra.mxu0 %v1346
        %1390 = vmatprep.subr.mxu0 0.0
        %1391 = vmatpush1.msra.mxu0 %v1345
        %1392 = vmatprep.subr.mxu0 0.0
        %1393 = vmatpush2.msra.mxu0 0.0
        %1394 = vmatprep.subr.mxu0 0.0
        %1395 = vmatpush2.msra.mxu0 0.0
        %1396 = vmatprep.subr.mxu0 0.0
        %1397 = vmatpush2.msra.mxu0 0.0
        %1398 = vmatprep.subr.mxu0 0.0
        %1399 = vmatpush2.msra.mxu0 0.0
        %1400 = vmatprep.subr.mxu0 0.0
        %1401 = vmatpush2.msra.mxu0 0.0
        %1402 = vmatprep.subr.mxu0 0.0
        %1403 = vmatpush2.msra.mxu0 0.0
        %1404 = vmatprep.subr.mxu0 0.0
        %1405 = vmatpush2.msra.mxu0 0.0
        %1406 = vmatprep.subr.mxu0 0.0
        %1407 = vmatpush2.msra.mxu0 0.0
        %1408 = vmatprep.subr.mxu0 0.0
        %1409 = vmatpush2.msra.mxu0 0.0
        %1410 = vmatprep.subr.mxu0 0.0
        %1411 = vmatpush2.msra.mxu0 0.0
        %1412 = vmatprep.subr.mxu0 0.0
        %1413 = vmatpush2.msra.mxu0 0.0
        %1414 = vmatprep.subr.mxu0 0.0
        %1415 = vmatpush2.msra.mxu0 0.0
        %1416 = vmatprep.subr.mxu0 0.0
        %1417 = vmatpush2.msra.mxu0 0.0
        %1418 = vmatprep.subr.mxu0 0.0
        %1419 = vmatpush2.msra.mxu0 0.0
        %1420 = vmatprep.subr.mxu0 0.0
        %1421 = vmatpush2.msra.mxu0 0.0
        %1422 = vmatprep.subr.mxu0 0.0
        %1423 = vmatpush2.msra.mxu0 0.0
        %1424 = vmatprep.mubr.f32.mxu0 0.0
        %1425 = vmatmul.mubr.f32.gmra.mxu0 %v1355
        %v1426 = vpop.f32.mrf.mxu0
        %v1427 = vadd.f32 %v1353, %v1426
        %v1428 = vpop.f32.mrf.mxu0
        %1429 = vmatprep.mubr.f32.mxu0 0.0
        %1430 = vmatmul.mubr.f32.gmra.mxu0 %v1358
        %v1431 = vpop.f32.mrf.mxu0
        %v1432 = vadd.f32 %v1353, %v1431
        %v1433 = vpop.f32.mrf.mxu0
        %1434 = vdwg.mxu0
        %v1435 = vmul.f32 %v1427, 1.702
        %v1436 = vmul.f32 %v1432, 1.702
        %v1437 = vxor.u32 %v1435, 2147483648
        %v1438 = vxor.u32 %v1436, 2147483648
        %v1439 = vmul.f32 %v1437, 1.442695
        %v1440 = vpow.pop %v1439
        %v1441 = vmul.f32 %v1438, 1.442695
        %v1442 = vpow.pop %v1441
        %v1443 = vadd.f32 %v1440, 1.0
        %v1444 = vadd.f32 %v1442, 1.0
        %v1445 = vrcp.pop %v1443
        %v1446 = vmul.f32 1.0, %v1445
        %v1447 = vrcp.pop %v1444
        %v1448 = vmul.f32 1.0, %v1447
        %v1449 = vmul.f32 %v1427, %v1446
        %v1450 = vmul.f32 %v1432, %v1448
        %v1451 = vld [vmem:[%s158 + $0x100] sm:$0xff]
        %v1452 = vld [vmem:[%s158 + $0x108] sm:$0xff]
        %v1453 = vld [vmem:[%s158 + $0x110] sm:$0xff]
        %v1454 = vld [vmem:[%s158 + $0x118] sm:$0xff]
        %v1455 = vld [vmem:[%s158 + $0x120] sm:$0xff]
        %v1456 = vld [vmem:[%s158 + $0x128] sm:$0xff]
        %v1457 = vld [vmem:[%s158 + $0x130] sm:$0xff]
        %v1458 = vld [vmem:[%s158 + $0x138] sm:$0xff]
        %v1459 = vld [vmem:[%s158 + $0x140] sm:$0xff]
        %v1460 = vld [vmem:[%s158 + $0x148] sm:$0xff]
        %v1461 = vld [vmem:[%s158 + $0x150] sm:$0xff]
        %v1462 = vld [vmem:[%s158 + $0x158] sm:$0xff]
        %v1463 = vld [vmem:[%s158 + $0x160] sm:$0xff]
        %v1464 = vld [vmem:[%s158 + $0x168] sm:$0xff]
        %v1465 = vld [vmem:[%s158 + $0x170] sm:$0xff]
        %v1466 = vld [vmem:[%s158 + $0x178] sm:$0xff]
        %v1467 = vld [vmem:[%s158 + $0x186] sm:$0x1]
        %v1468 = vlaneseq
        %v1469 = vshrl.u32 %v1468, 7
        %v1470 = vsub.s32 0, %v1469
        %v1471 = vrot.slane %v1467, %v1470
        %1472 = vmatprep.subr.mxu0 0.0
        %1473 = vmatpush1.msra.mxu0 %v1466
        %1474 = vmatprep.subr.mxu0 0.0
        %1475 = vmatpush1.msra.mxu0 %v1465
        %1476 = vmatprep.subr.mxu0 0.0
        %1477 = vmatpush1.msra.mxu0 %v1464
        %1478 = vmatprep.subr.mxu0 0.0
        %1479 = vmatpush1.msra.mxu0 %v1463
        %1480 = vmatprep.subr.mxu0 0.0
        %1481 = vmatpush1.msra.mxu0 %v1462
        %1482 = vmatprep.subr.mxu0 0.0
        %1483 = vmatpush1.msra.mxu0 %v1461
        %1484 = vmatprep.subr.mxu0 0.0
        %1485 = vmatpush1.msra.mxu0 %v1460
        %1486 = vmatprep.subr.mxu0 0.0
        %1487 = vmatpush1.msra.mxu0 %v1459
        %1488 = vmatprep.subr.mxu0 0.0
        %1489 = vmatpush1.msra.mxu0 %v1458
        %1490 = vmatprep.subr.mxu0 0.0
        %1491 = vmatpush1.msra.mxu0 %v1457
        %1492 = vmatprep.subr.mxu0 0.0
        %1493 = vmatpush1.msra.mxu0 %v1456
        %1494 = vmatprep.subr.mxu0 0.0
        %1495 = vmatpush1.msra.mxu0 %v1455
        %1496 = vmatprep.subr.mxu0 0.0
        %1497 = vmatpush1.msra.mxu0 %v1454
        %1498 = vmatprep.subr.mxu0 0.0
        %1499 = vmatpush1.msra.mxu0 %v1453
        %1500 = vmatprep.subr.mxu0 0.0
        %1501 = vmatpush1.msra.mxu0 %v1452
        %1502 = vmatprep.subr.mxu0 0.0
        %1503 = vmatpush1.msra.mxu0 %v1451
        %1504 = vmatprep.subr.mxu0 0.0
        %1505 = vmatpush2.msra.mxu0 0.0
        %1506 = vmatprep.subr.mxu0 0.0
        %1507 = vmatpush2.msra.mxu0 0.0
        %1508 = vmatprep.subr.mxu0 0.0
        %1509 = vmatpush2.msra.mxu0 0.0
        %1510 = vmatprep.subr.mxu0 0.0
        %1511 = vmatpush2.msra.mxu0 0.0
        %1512 = vmatprep.subr.mxu0 0.0
        %1513 = vmatpush2.msra.mxu0 0.0
        %1514 = vmatprep.subr.mxu0 0.0
        %1515 = vmatpush2.msra.mxu0 0.0
        %1516 = vmatprep.subr.mxu0 0.0
        %1517 = vmatpush2.msra.mxu0 0.0
        %1518 = vmatprep.subr.mxu0 0.0
        %1519 = vmatpush2.msra.mxu0 0.0
        %1520 = vmatprep.subr.mxu0 0.0
        %1521 = vmatpush2.msra.mxu0 0.0
        %1522 = vmatprep.subr.mxu0 0.0
        %1523 = vmatpush2.msra.mxu0 0.0
        %1524 = vmatprep.subr.mxu0 0.0
        %1525 = vmatpush2.msra.mxu0 0.0
        %1526 = vmatprep.subr.mxu0 0.0
        %1527 = vmatpush2.msra.mxu0 0.0
        %1528 = vmatprep.subr.mxu0 0.0
        %1529 = vmatpush2.msra.mxu0 0.0
        %1530 = vmatprep.subr.mxu0 0.0
        %1531 = vmatpush2.msra.mxu0 0.0
        %1532 = vmatprep.subr.mxu0 0.0
        %1533 = vmatpush2.msra.mxu0 0.0
        %1534 = vmatprep.subr.mxu0 0.0
        %1535 = vmatpush2.msra.mxu0 0.0
        %1536 = vmatprep.mubr.f32.mxu0 0.0
        %1537 = vmatmul.mubr.f32.gmra.mxu0 %v1449
        %v1538 = vpop.f32.mrf.mxu0
        %v1539 = vadd.f32 %v1471, %v1538
        %v1540 = vpop.f32.mrf.mxu0
        %1541 = vmatprep.mubr.f32.mxu0 0.0
        %1542 = vmatmul.mubr.f32.gmra.mxu0 %v1450
        %v1543 = vpop.f32.mrf.mxu0
        %v1544 = vadd.f32 %v1471, %v1543
        %v1545 = vpop.f32.mrf.mxu0
        %1546 = vdwg.mxu0
        %v1547 = vadd.f32 %v1303, %v1539
        %v1548 = vadd.f32 %v1304, %v1544
        %1549 = vst.msk [vmem:[%s3] sm:$0xff] %vm191, %v1547
        %1550 = vst.msk [vmem:[%s3 + $0x8] sm:$0xff] %vm191, %v1548
        // Predicated region
        $region41: #{clip_forward.3} parent=31 // pred_check
          %p1551 = pneg %p98
        $region42: #{clip_forward.3} parent=31 // pred_check_branch
          %1553 = sbr.rel (%p1551) target = $region44
        $region43: #{clip_forward.3} parent=31 // pred_region
          _
        $region44: #{clip_forward.3} parent=31 // pred_fallthru
          _
        // Predicated region
        $region45: #{clip_forward.3} parent=31 // pred_check
          %p1554 = pneg %p98
        $region46: #{clip_forward.3} parent=31 // pred_check_branch
          %1556 = sbr.rel (%p1554) target = $region48
        $region47: #{clip_forward.3} parent=31 // pred_region
          _
        $region48: #{clip_forward.3} parent=31 // pred_fallthru
          _
      $region32: #{clip_forward.3} parent=5 // pred_fallthru
        _
      %p1557 = scmp.le.s32.totalorder 2, %s12
      // Predicated region
      $region49: #{clip_forward.3} parent=5 // pred_check
        %p1558 = pneg %p1557
      $region50: #{clip_forward.3} parent=5 // pred_check_branch
        %1560 = sbr.rel (%p1558) target = $region52
      $region51: #{clip_forward.3} parent=5 // pred_region
        %s1561 = ssub.s32 %s12, 2
      $region52: #{clip_forward.3} parent=5 // pred_fallthru
        _
    $region6: #{clip_forward.3} parent=1 // loop_footer
      %s16 = sadd.s32 1, %s12
    $region7: #{clip_forward.3} parent=1 // loop_footer_branch
      %11 = sbr.rel target = $region3
    $region8: #{clip_forward.3} parent=1 // loop_exit
      _
    %1562 = vsyncpa [#allocation3], 1
    %s1563 = scalar_lea.sflag [#allocation3], 1
    %1564 = vsyncpa %s1563, 1

// kernel: clip_forward.5
$region0: #{clip_forward.5}
  #allocation0 [shape = 'u32[]', space=smem, size = 0x4, offset = 0x4, fixed_abs, tag = 'smem constant byte address 0x4 - core index']
  #allocation1 [shape = 'u32[144,128]{1,0:T(1,128)}', space=vmem, size = 0x12000, scoped, tag = 'internal scratch']
  #allocation2 [shape = 'f32[1,1]{1,0:T(1,128)S(1)}', space=vmem, size = 0x200, scoped, tag = 'scoped memory for clip_forward.5']
  %s0 = inlined_call_operand.<no memory space> [shape: f32[1,1], index: 0, kind: input, shape index: {}]
  %s1 = inlined_call_operand.vmem [shape: f32[2,16], index: 1, kind: input, shape index: {}]
  %s2 = inlined_call_operand.vmem [shape: f32[2,34], index: 2, kind: input, shape index: {}]
  %s3 = inlined_call_operand.vmem [shape: f32[16,32], index: 3, kind: input, shape index: {}]
  %s4 = inlined_call_operand.vmem [shape: f32[34,32], index: 4, kind: input, shape index: {}]
  %s5 = inlined_call_operand.vmem [shape: f32[68,32], index: 5, kind: input, shape index: {}]
  %s6 = inlined_call_operand.vmem [shape: f32[32,128], index: 6, kind: output, shape index: {}]
  %s7 = sld [smem:[#allocation0]]
  $region34: #{clip_forward.5} parent=0
    _
  %s9 = ssub.s32 1, %s7
  %s10 = scalar_select 0, %s9, %s7
  %v11 = vstv %s0
  %12 = vst [vmem:[#allocation2] sm:$0x1] %v11
  // Predicated region
  $region2: #{clip_forward.5} parent=0 // pred_check
    _
  $region3: #{clip_forward.5} parent=0 // pred_check_branch
    %14 = sbr.rel (0) target = $region5
  $region4: #{clip_forward.5} parent=0 // pred_region
    _
  $region5: #{clip_forward.5} parent=0 // pred_fallthru
    _
  // Predicated region
  $region6: #{clip_forward.5} parent=0 // pred_check
    _
  $region7: #{clip_forward.5} parent=0 // pred_check_branch
    %16 = sbr.rel (0) target = $region9
  $region8: #{clip_forward.5} parent=0 // pred_region
    _
  $region9: #{clip_forward.5} parent=0 // pred_fallthru
    _
  // Predicated region
  $region10: #{clip_forward.5} parent=0 // pred_check
    _
  $region11: #{clip_forward.5} parent=0 // pred_check_branch
    %18 = sbr.rel (0) target = $region13
  $region12: #{clip_forward.5} parent=0 // pred_region
    _
  $region13: #{clip_forward.5} parent=0 // pred_fallthru
    _
  // Predicated region
  $region14: #{clip_forward.5} parent=0 // pred_check
    _
  $region15: #{clip_forward.5} parent=0 // pred_check_branch
    %20 = sbr.rel (0) target = $region17
  $region16: #{clip_forward.5} parent=0 // pred_region
    _
  $region17: #{clip_forward.5} parent=0 // pred_fallthru
    _
  // Predicated region
  $region18: #{clip_forward.5} parent=0 // pred_check
    _
  $region19: #{clip_forward.5} parent=0 // pred_check_branch
    %22 = sbr.rel (0) target = $region21
  $region20: #{clip_forward.5} parent=0 // pred_region
    _
  $region21: #{clip_forward.5} parent=0 // pred_fallthru
    _
  // Predicated region
  $region22: #{clip_forward.5} parent=0 // pred_check
    _
  $region23: #{clip_forward.5} parent=0 // pred_check_branch
    %24 = sbr.rel (0) target = $region25
  $region24: #{clip_forward.5} parent=0 // pred_region
    _
  $region25: #{clip_forward.5} parent=0 // pred_fallthru
    _
  %v25 = vld [vmem:[%s1] sm:$0x3]
  %v26 = vld [vmem:[%s3] sm:$0xff]
  %v27 = vld [vmem:[%s3 + $0x8] sm:$0xff]
  %vm28 = vcmask 130048
  %v30 = vsel %vm28, %v25, 0
  %32 = vmatprep.subr.mxu0 0.0
  %33 = vmatpush1.msra.mxu0 0.0
  %34 = vmatprep.subr.mxu0 0.0
  %35 = vmatpush1.msra.mxu0 0.0
  %36 = vmatprep.subr.mxu0 0.0
  %37 = vmatpush1.msra.mxu0 0.0
  %38 = vmatprep.subr.mxu0 0.0
  %39 = vmatpush1.msra.mxu0 0.0
  %40 = vmatprep.subr.mxu0 0.0
  %41 = vmatpush1.msra.mxu0 0.0
  %42 = vmatprep.subr.mxu0 0.0
  %43 = vmatpush1.msra.mxu0 0.0
  %44 = vmatprep.subr.mxu0 0.0
  %45 = vmatpush1.msra.mxu0 0.0
  %46 = vmatprep.subr.mxu0 0.0
  %47 = vmatpush1.msra.mxu0 0.0
  %48 = vmatprep.subr.mxu0 0.0
  %49 = vmatpush1.msra.mxu0 0.0
  %50 = vmatprep.subr.mxu0 0.0
  %51 = vmatpush1.msra.mxu0 0.0
  %52 = vmatprep.subr.mxu0 0.0
  %53 = vmatpush1.msra.mxu0 0.0
  %54 = vmatprep.subr.mxu0 0.0
  %55 = vmatpush1.msra.mxu0 0.0
  %56 = vmatprep.subr.mxu0 0.0
  %57 = vmatpush1.msra.mxu0 0.0
  %58 = vmatprep.subr.mxu0 0.0
  %59 = vmatpush1.msra.mxu0 0.0
  %60 = vmatprep.subr.mxu0 0.0
  %61 = vmatpush1.msra.mxu0 %v27
  %62 = vmatprep.subr.mxu0 0.0
  %63 = vmatpush1.msra.mxu0 %v26
  %64 = vmatprep.subr.mxu0 0.0
  %65 = vmatpush2.msra.mxu0 0.0
  %66 = vmatprep.subr.mxu0 0.0
  %67 = vmatpush2.msra.mxu0 0.0
  %68 = vmatprep.subr.mxu0 0.0
  %69 = vmatpush2.msra.mxu0 0.0
  %70 = vmatprep.subr.mxu0 0.0
  %71 = vmatpush2.msra.mxu0 0.0
  %72 = vmatprep.subr.mxu0 0.0
  %73 = vmatpush2.msra.mxu0 0.0
  %74 = vmatprep.subr.mxu0 0.0
  %75 = vmatpush2.msra.mxu0 0.0
  %76 = vmatprep.subr.mxu0 0.0
  %77 = vmatpush2.msra.mxu0 0.0
  %78 = vmatprep.subr.mxu0 0.0
  %79 = vmatpush2.msra.mxu0 0.0
  %80 = vmatprep.subr.mxu0 0.0
  %81 = vmatpush2.msra.mxu0 0.0
  %82 = vmatprep.subr.mxu0 0.0
  %83 = vmatpush2.msra.mxu0 0.0
  %84 = vmatprep.subr.mxu0 0.0
  %85 = vmatpush2.msra.mxu0 0.0
  %86 = vmatprep.subr.mxu0 0.0
  %87 = vmatpush2.msra.mxu0 0.0
  %88 = vmatprep.subr.mxu0 0.0
  %89 = vmatpush2.msra.mxu0 0.0
  %90 = vmatprep.subr.mxu0 0.0
  %91 = vmatpush2.msra.mxu0 0.0
  %92 = vmatprep.subr.mxu0 0.0
  %93 = vmatpush2.msra.mxu0 0.0
  %94 = vmatprep.subr.mxu0 0.0
  %95 = vmatpush2.msra.mxu0 0.0
  %96 = vmatprep.mubr.f32.mxu0 0.0
  %97 = vmatmul.mubr.f32.gmra.mxu0 %v30
  %v98 = vpop.f32.mrf.mxu0
  %v99 = vadd.f32 0.0, %v98
  %v100 = vpop.f32.mrf.mxu0
  %101 = vdwg.mxu0
  %v102 = vld [vmem:[%s5] sm:$0x1]
  %v103 = vld [vmem:[%s5 + $0x1] sm:$0x1]
  %vm104 = vcmask 254976
  %v105 = vsel %vm104, %v99, 0.0
  %106 = vadd.xlane.f32.xlu0 %v105
  %v107 = vpop.xlane.xlu0 %106
  %v108 = vrcp.pop 32.0
  %v109 = vmul.f32 %v107, %v108
  %v110 = vsub.f32 %v99, %v109
  %v111 = vmul.f32 %v110, %v110
  %v112 = vsel %vm104, %v111, 0.0
  %113 = vadd.xlane.f32.xlu0 %v112
  %v114 = vpop.xlane.xlu0 %113
  %v115 = vmul.f32 %v114, %v108
  %v116 = vadd.f32 %v115, 1e-05
  %v117 = vrsqrt.pop %v116
  %v118 = vmul.f32 %v110, %v117
  %v119 = vlaneseq
  %v120 = vshrl.u32 %v119, 7
  %v121 = vsub.s32 0, %v120
  %v122 = vrot.slane %v102, %v121
  %v123 = vmul.f32 %v118, %v122
  %v124 = vlaneseq
  %v125 = vshrl.u32 %v124, 7
  %v126 = vsub.s32 0, %v125
  %v127 = vrot.slane %v103, %v126
  %v128 = vadd.f32 %v123, %v127
  %v129 = vld [vmem:[%s5 + $0x2] sm:$0xff]
  %v130 = vld [vmem:[%s5 + $0xa] sm:$0xff]
  %v131 = vld [vmem:[%s5 + $0x12] sm:$0xff]
  %v132 = vld [vmem:[%s5 + $0x1a] sm:$0xff]
  %vm133 = vcmask 261120
  %v135 = vsel %vm133, %v128, 0
  %137 = vmatprep.subr.mxu0 0.0
  %138 = vmatpush1.msra.mxu0 0.0
  %139 = vmatprep.subr.mxu0 0.0
  %140 = vmatpush1.msra.mxu0 0.0
  %141 = vmatprep.subr.mxu0 0.0
  %142 = vmatpush1.msra.mxu0 0.0
  %143 = vmatprep.subr.mxu0 0.0
  %144 = vmatpush1.msra.mxu0 0.0
  %145 = vmatprep.subr.mxu0 0.0
  %146 = vmatpush1.msra.mxu0 0.0
  %147 = vmatprep.subr.mxu0 0.0
  %148 = vmatpush1.msra.mxu0 0.0
  %149 = vmatprep.subr.mxu0 0.0
  %150 = vmatpush1.msra.mxu0 0.0
  %151 = vmatprep.subr.mxu0 0.0
  %152 = vmatpush1.msra.mxu0 0.0
  %153 = vmatprep.subr.mxu0 0.0
  %154 = vmatpush1.msra.mxu0 0.0
  %155 = vmatprep.subr.mxu0 0.0
  %156 = vmatpush1.msra.mxu0 0.0
  %157 = vmatprep.subr.mxu0 0.0
  %158 = vmatpush1.msra.mxu0 0.0
  %159 = vmatprep.subr.mxu0 0.0
  %160 = vmatpush1.msra.mxu0 0.0
  %161 = vmatprep.subr.mxu0 0.0
  %162 = vmatpush1.msra.mxu0 %v132
  %163 = vmatprep.subr.mxu0 0.0
  %164 = vmatpush1.msra.mxu0 %v131
  %165 = vmatprep.subr.mxu0 0.0
  %166 = vmatpush1.msra.mxu0 %v130
  %167 = vmatprep.subr.mxu0 0.0
  %168 = vmatpush1.msra.mxu0 %v129
  %169 = vmatprep.subr.mxu0 0.0
  %170 = vmatpush2.msra.mxu0 0.0
  %171 = vmatprep.subr.mxu0 0.0
  %172 = vmatpush2.msra.mxu0 0.0
  %173 = vmatprep.subr.mxu0 0.0
  %174 = vmatpush2.msra.mxu0 0.0
  %175 = vmatprep.subr.mxu0 0.0
  %176 = vmatpush2.msra.mxu0 0.0
  %177 = vmatprep.subr.mxu0 0.0
  %178 = vmatpush2.msra.mxu0 0.0
  %179 = vmatprep.subr.mxu0 0.0
  %180 = vmatpush2.msra.mxu0 0.0
  %181 = vmatprep.subr.mxu0 0.0
  %182 = vmatpush2.msra.mxu0 0.0
  %183 = vmatprep.subr.mxu0 0.0
  %184 = vmatpush2.msra.mxu0 0.0
  %185 = vmatprep.subr.mxu0 0.0
  %186 = vmatpush2.msra.mxu0 0.0
  %187 = vmatprep.subr.mxu0 0.0
  %188 = vmatpush2.msra.mxu0 0.0
  %189 = vmatprep.subr.mxu0 0.0
  %190 = vmatpush2.msra.mxu0 0.0
  %191 = vmatprep.subr.mxu0 0.0
  %192 = vmatpush2.msra.mxu0 0.0
  %193 = vmatprep.subr.mxu0 0.0
  %194 = vmatpush2.msra.mxu0 0.0
  %195 = vmatprep.subr.mxu0 0.0
  %196 = vmatpush2.msra.mxu0 0.0
  %197 = vmatprep.subr.mxu0 0.0
  %198 = vmatpush2.msra.mxu0 0.0
  %199 = vmatprep.subr.mxu0 0.0
  %200 = vmatpush2.msra.mxu0 0.0
  %201 = vmatprep.mubr.f32.mxu0 0.0
  %202 = vmatmul.mubr.f32.gmra.mxu0 %v135
  %v203 = vpop.f32.mrf.mxu0
  %v204 = vadd.f32 0.0, %v203
  %v205 = vpop.f32.mrf.mxu0
  %206 = vdwg.mxu0
  %v207 = vld [vmem:[%s2] sm:$0x3]
  %v208 = vld [vmem:[%s4] sm:$0xff]
  %v209 = vld [vmem:[%s4 + $0x8] sm:$0xff]
  %v210 = vld [vmem:[%s4 + $0x10] sm:$0xff]
  %v211 = vld [vmem:[%s4 + $0x18] sm:$0xff]
  %v212 = vld [vmem:[%s4 + $0x20] sm:$0x3]
  %vm213 = vcmask 277504
  %v215 = vsel %vm213, %v207, 0
  %vm217 = vcmask 1041408
  %v219 = vsel %vm217, %v212, 0
  %221 = vmatprep.subr.mxu0 0.0
  %222 = vmatpush1.msra.mxu0 0.0
  %223 = vmatprep.subr.mxu0 0.0
  %224 = vmatpush1.msra.mxu0 0.0
  %225 = vmatprep.subr.mxu0 0.0
  %226 = vmatpush1.msra.mxu0 0.0
  %227 = vmatprep.subr.mxu0 0.0
  %228 = vmatpush1.msra.mxu0 0.0
  %229 = vmatprep.subr.mxu0 0.0
  %230 = vmatpush1.msra.mxu0 0.0
  %231 = vmatprep.subr.mxu0 0.0
  %232 = vmatpush1.msra.mxu0 0.0
  %233 = vmatprep.subr.mxu0 0.0
  %234 = vmatpush1.msra.mxu0 0.0
  %235 = vmatprep.subr.mxu0 0.0
  %236 = vmatpush1.msra.mxu0 0.0
  %237 = vmatprep.subr.mxu0 0.0
  %238 = vmatpush1.msra.mxu0 0.0
  %239 = vmatprep.subr.mxu0 0.0
  %240 = vmatpush1.msra.mxu0 0.0
  %241 = vmatprep.subr.mxu0 0.0
  %242 = vmatpush1.msra.mxu0 0.0
  %243 = vmatprep.subr.mxu0 0.0
  %244 = vmatpush1.msra.mxu0 %v219
  %245 = vmatprep.subr.mxu0 0.0
  %246 = vmatpush1.msra.mxu0 %v211
  %247 = vmatprep.subr.mxu0 0.0
  %248 = vmatpush1.msra.mxu0 %v210
  %249 = vmatprep.subr.mxu0 0.0
  %250 = vmatpush1.msra.mxu0 %v209
  %251 = vmatprep.subr.mxu0 0.0
  %252 = vmatpush1.msra.mxu0 %v208
  %253 = vmatprep.subr.mxu0 0.0
  %254 = vmatpush2.msra.mxu0 0.0
  %255 = vmatprep.subr.mxu0 0.0
  %256 = vmatpush2.msra.mxu0 0.0
  %257 = vmatprep.subr.mxu0 0.0
  %258 = vmatpush2.msra.mxu0 0.0
  %259 = vmatprep.subr.mxu0 0.0
  %260 = vmatpush2.msra.mxu0 0.0
  %261 = vmatprep.subr.mxu0 0.0
  %262 = vmatpush2.msra.mxu0 0.0
  %263 = vmatprep.subr.mxu0 0.0
  %264 = vmatpush2.msra.mxu0 0.0
  %265 = vmatprep.subr.mxu0 0.0
  %266 = vmatpush2.msra.mxu0 0.0
  %267 = vmatprep.subr.mxu0 0.0
  %268 = vmatpush2.msra.mxu0 0.0
  %269 = vmatprep.subr.mxu0 0.0
  %270 = vmatpush2.msra.mxu0 0.0
  %271 = vmatprep.subr.mxu0 0.0
  %272 = vmatpush2.msra.mxu0 0.0
  %273 = vmatprep.subr.mxu0 0.0
  %274 = vmatpush2.msra.mxu0 0.0
  %275 = vmatprep.subr.mxu0 0.0
  %276 = vmatpush2.msra.mxu0 0.0
  %277 = vmatprep.subr.mxu0 0.0
  %278 = vmatpush2.msra.mxu0 0.0
  %279 = vmatprep.subr.mxu0 0.0
  %280 = vmatpush2.msra.mxu0 0.0
  %281 = vmatprep.subr.mxu0 0.0
  %282 = vmatpush2.msra.mxu0 0.0
  %283 = vmatprep.subr.mxu0 0.0
  %284 = vmatpush2.msra.mxu0 0.0
  %285 = vmatprep.mubr.f32.mxu0 0.0
  %286 = vmatmul.mubr.f32.gmra.mxu0 %v215
  %v287 = vpop.f32.mrf.mxu0
  %v288 = vadd.f32 0.0, %v287
  %v289 = vpop.f32.mrf.mxu0
  %290 = vdwg.mxu0
  %v291 = vld [vmem:[%s5 + $0x22] sm:$0x1]
  %v292 = vld [vmem:[%s5 + $0x23] sm:$0x1]
  %v293 = vsel %vm104, %v288, 0.0
  %294 = vadd.xlane.f32.xlu0 %v293
  %v295 = vpop.xlane.xlu0 %294
  %v296 = vmul.f32 %v295, %v108
  %v297 = vsub.f32 %v288, %v296
  %v298 = vmul.f32 %v297, %v297
  %v299 = vsel %vm104, %v298, 0.0
  %300 = vadd.xlane.f32.xlu0 %v299
  %v301 = vpop.xlane.xlu0 %300
  %v302 = vmul.f32 %v301, %v108
  %v303 = vadd.f32 %v302, 1e-05
  %v304 = vrsqrt.pop %v303
  %v305 = vmul.f32 %v297, %v304
  %v306 = vlaneseq
  %v307 = vshrl.u32 %v306, 7
  %v308 = vsub.s32 0, %v307
  %v309 = vrot.slane %v291, %v308
  %v310 = vmul.f32 %v305, %v309
  %v311 = vlaneseq
  %v312 = vshrl.u32 %v311, 7
  %v313 = vsub.s32 0, %v312
  %v314 = vrot.slane %v292, %v313
  %v315 = vadd.f32 %v310, %v314
  %v316 = vld [vmem:[%s5 + $0x24] sm:$0xff]
  %v317 = vld [vmem:[%s5 + $0x2c] sm:$0xff]
  %v318 = vld [vmem:[%s5 + $0x34] sm:$0xff]
  %v319 = vld [vmem:[%s5 + $0x3c] sm:$0xff]
  %v321 = vsel %vm133, %v315, 0
  %323 = vmatprep.subr.mxu0 0.0
  %324 = vmatpush1.msra.mxu0 0.0
  %325 = vmatprep.subr.mxu0 0.0
  %326 = vmatpush1.msra.mxu0 0.0
  %327 = vmatprep.subr.mxu0 0.0
  %328 = vmatpush1.msra.mxu0 0.0
  %329 = vmatprep.subr.mxu0 0.0
  %330 = vmatpush1.msra.mxu0 0.0
  %331 = vmatprep.subr.mxu0 0.0
  %332 = vmatpush1.msra.mxu0 0.0
  %333 = vmatprep.subr.mxu0 0.0
  %334 = vmatpush1.msra.mxu0 0.0
  %335 = vmatprep.subr.mxu0 0.0
  %336 = vmatpush1.msra.mxu0 0.0
  %337 = vmatprep.subr.mxu0 0.0
  %338 = vmatpush1.msra.mxu0 0.0
  %339 = vmatprep.subr.mxu0 0.0
  %340 = vmatpush1.msra.mxu0 0.0
  %341 = vmatprep.subr.mxu0 0.0
  %342 = vmatpush1.msra.mxu0 0.0
  %343 = vmatprep.subr.mxu0 0.0
  %344 = vmatpush1.msra.mxu0 0.0
  %345 = vmatprep.subr.mxu0 0.0
  %346 = vmatpush1.msra.mxu0 0.0
  %347 = vmatprep.subr.mxu0 0.0
  %348 = vmatpush1.msra.mxu0 %v319
  %349 = vmatprep.subr.mxu0 0.0
  %350 = vmatpush1.msra.mxu0 %v318
  %351 = vmatprep.subr.mxu0 0.0
  %352 = vmatpush1.msra.mxu0 %v317
  %353 = vmatprep.subr.mxu0 0.0
  %354 = vmatpush1.msra.mxu0 %v316
  %355 = vmatprep.subr.mxu0 0.0
  %356 = vmatpush2.msra.mxu0 0.0
  %357 = vmatprep.subr.mxu0 0.0
  %358 = vmatpush2.msra.mxu0 0.0
  %359 = vmatprep.subr.mxu0 0.0
  %360 = vmatpush2.msra.mxu0 0.0
  %361 = vmatprep.subr.mxu0 0.0
  %362 = vmatpush2.msra.mxu0 0.0
  %363 = vmatprep.subr.mxu0 0.0
  %364 = vmatpush2.msra.mxu0 0.0
  %365 = vmatprep.subr.mxu0 0.0
  %366 = vmatpush2.msra.mxu0 0.0
  %367 = vmatprep.subr.mxu0 0.0
  %368 = vmatpush2.msra.mxu0 0.0
  %369 = vmatprep.subr.mxu0 0.0
  %370 = vmatpush2.msra.mxu0 0.0
  %371 = vmatprep.subr.mxu0 0.0
  %372 = vmatpush2.msra.mxu0 0.0
  %373 = vmatprep.subr.mxu0 0.0
  %374 = vmatpush2.msra.mxu0 0.0
  %375 = vmatprep.subr.mxu0 0.0
  %376 = vmatpush2.msra.mxu0 0.0
  %377 = vmatprep.subr.mxu0 0.0
  %378 = vmatpush2.msra.mxu0 0.0
  %379 = vmatprep.subr.mxu0 0.0
  %380 = vmatpush2.msra.mxu0 0.0
  %381 = vmatprep.subr.mxu0 0.0
  %382 = vmatpush2.msra.mxu0 0.0
  %383 = vmatprep.subr.mxu0 0.0
  %384 = vmatpush2.msra.mxu0 0.0
  %385 = vmatprep.subr.mxu0 0.0
  %386 = vmatpush2.msra.mxu0 0.0
  %387 = vmatprep.mubr.f32.mxu0 0.0
  %388 = vmatmul.mubr.f32.gmra.mxu0 %v321
  %v389 = vpop.f32.mrf.mxu0
  %v390 = vadd.f32 0.0, %v389
  %v391 = vpop.f32.mrf.mxu0
  %392 = vdwg.mxu0
  %v393 = vmul.f32 %v204, %v204
  %vm394 = vcmask 123904
  %v395 = vsel %vm394, %v393, 0.0
  %396 = vadd.xlane.f32.xlu0 %v395
  %v397 = vpop.xlane.xlu0 %396
  %v398 = vmax.f32 %v397, 1e-12
  %v399 = vrsqrt.pop %v398
  %v400 = vmul.f32 %v204, %v399
  %v401 = vmul.f32 %v390, %v390
  %v402 = vsel %vm394, %v401, 0.0
  %403 = vadd.xlane.f32.xlu0 %v402
  %v404 = vpop.xlane.xlu0 %403
  %v405 = vmax.f32 %v404, 1e-12
  %v406 = vrsqrt.pop %v405
  %v407 = vmul.f32 %v390, %v406
  %v408 = vld [vmem:[#allocation2] sm:$0x1]
  %v409 = vmul.f32 %v408, 1.442695
  %v410 = vpow.pop %v409
  %v412 = vsel %vm28, %v400, 0
  %v415 = vsel %vm28, %v407, 0
  %417 = vmatprep.subr.mxu0 0.0
  %418 = vmatpush1.xpose.msra.mxu0 0.0
  %419 = vmatprep.subr.mxu0 0.0
  %420 = vmatpush1.xpose.msra.mxu0 0.0
  %421 = vmatprep.subr.mxu0 0.0
  %422 = vmatpush1.xpose.msra.mxu0 0.0
  %423 = vmatprep.subr.mxu0 0.0
  %424 = vmatpush1.xpose.msra.mxu0 0.0
  %425 = vmatprep.subr.mxu0 0.0
  %426 = vmatpush1.xpose.msra.mxu0 0.0
  %427 = vmatprep.subr.mxu0 0.0
  %428 = vmatpush1.xpose.msra.mxu0 0.0
  %429 = vmatprep.subr.mxu0 0.0
  %430 = vmatpush1.xpose.msra.mxu0 0.0
  %431 = vmatprep.subr.mxu0 0.0
  %432 = vmatpush1.xpose.msra.mxu0 0.0
  %433 = vmatprep.subr.mxu0 0.0
  %434 = vmatpush1.xpose.msra.mxu0 0.0
  %435 = vmatprep.subr.mxu0 0.0
  %436 = vmatpush1.xpose.msra.mxu0 0.0
  %437 = vmatprep.subr.mxu0 0.0
  %438 = vmatpush1.xpose.msra.mxu0 0.0
  %439 = vmatprep.subr.mxu0 0.0
  %440 = vmatpush1.xpose.msra.mxu0 0.0
  %441 = vmatprep.subr.mxu0 0.0
  %442 = vmatpush1.xpose.msra.mxu0 0.0
  %443 = vmatprep.subr.mxu0 0.0
  %444 = vmatpush1.xpose.msra.mxu0 0.0
  %445 = vmatprep.subr.mxu0 0.0
  %446 = vmatpush1.xpose.msra.mxu0 0.0
  %447 = vmatprep.subr.mxu0 0.0
  %448 = vmatpush1.xpose.msra.mxu0 %v415
  %449 = vmatprep.subr.mxu0 0.0
  %450 = vmatpush2.xpose.msra.mxu0 0.0
  %451 = vmatprep.subr.mxu0 0.0
  %452 = vmatpush2.xpose.msra.mxu0 0.0
  %453 = vmatprep.subr.mxu0 0.0
  %454 = vmatpush2.xpose.msra.mxu0 0.0
  %455 = vmatprep.subr.mxu0 0.0
  %456 = vmatpush2.xpose.msra.mxu0 0.0
  %457 = vmatprep.subr.mxu0 0.0
  %458 = vmatpush2.xpose.msra.mxu0 0.0
  %459 = vmatprep.subr.mxu0 0.0
  %460 = vmatpush2.xpose.msra.mxu0 0.0
  %461 = vmatprep.subr.mxu0 0.0
  %462 = vmatpush2.xpose.msra.mxu0 0.0
  %463 = vmatprep.subr.mxu0 0.0
  %464 = vmatpush2.xpose.msra.mxu0 0.0
  %465 = vmatprep.subr.mxu0 0.0
  %466 = vmatpush2.xpose.msra.mxu0 0.0
  %467 = vmatprep.subr.mxu0 0.0
  %468 = vmatpush2.xpose.msra.mxu0 0.0
  %469 = vmatprep.subr.mxu0 0.0
  %470 = vmatpush2.xpose.msra.mxu0 0.0
  %471 = vmatprep.subr.mxu0 0.0
  %472 = vmatpush2.xpose.msra.mxu0 0.0
  %473 = vmatprep.subr.mxu0 0.0
  %474 = vmatpush2.xpose.msra.mxu0 0.0
  %475 = vmatprep.subr.mxu0 0.0
  %476 = vmatpush2.xpose.msra.mxu0 0.0
  %477 = vmatprep.subr.mxu0 0.0
  %478 = vmatpush2.xpose.msra.mxu0 0.0
  %479 = vmatprep.subr.mxu0 0.0
  %480 = vmatpush2.xpose.msra.mxu0 0.0
  %481 = vmatprep.mubr.f32.mxu0 0.0
  %482 = vmatmul.mubr.f32.gmra.mxu0 %v412
  %v483 = vpop.f32.mrf.mxu0
  %v484 = vadd.f32 0.0, %v483
  %v485 = vpop.f32.mrf.mxu0
  %486 = vdwg.mxu0
  %v488 = vlaneseq
  %v489 = vshrl.u32 %v488, 7
  %v490 = vsub.s32 0, %v489
  %v491 = vrot.slane %v410, %v490
  %492 = vset.pattern.permute.xlu0 0
  %493 = vperm.xlu0 %492, %v491
  %v494 = vpop.permute.xlu0 %493
  %v496 = vmul.f32 %v494, %v484
  %v497 = vlaneseq
  %v498 = vshrl.u32 %v497, 7
  %v499 = vlaneseq
  %v500 = vand.u32 %v499, 127
  %vm501 = vcmp.eq.s32.totalorder %v498, %v500
  %v502 = vsel %vm501, 1, 0
  %v503 = vcvt.s32.f32 %v502
  %vm504 = vcmask 9216
  %v505 = vsel %vm504, %v496, -inf
  %506 = vmax.xlane.f32.xlu0 %v505
  %v507 = vpop.xlane.xlu0 %506
  %v508 = vsub.f32 %v496, %v507
  %v509 = vmul.f32 %v508, 1.442695
  %v510 = vpow.pop %v509
  %v511 = vsel %vm504, %v510, 0.0
  %512 = vadd.xlane.f32.xlu0 %v511
  %v513 = vpop.xlane.xlu0 %512
  %v514 = vlog2.pop %v513
  %v515 = vmul.f32 %v514, 0.6931472
  %v516 = vadd.f32 %v507, %v515
  %v517 = vmul.f32 %v496, %v503
  %v518 = vsel %vm504, %v517, 0.0
  %519 = vadd.xlane.f32.xlu0 %v518
  %v520 = vpop.xlane.xlu0 %519
  %v521 = vsub.f32 %v516, %v520
  %v522 = vsel %vm217, %v521, 0.0
  %v523 = vrot.slane %v522, 4
  %v524 = vadd.f32 %v522, %v523
  %v525 = vrot.slane %v524, 2
  %v526 = vadd.f32 %v524, %v525
  %v527 = vrot.slane %v526, 1
  %v528 = vadd.f32 %v526, %v527
  %v529 = vrcp.pop 2.0
  %v530 = vmul.f32 %v528, %v529
  %v531 = vrot.slane %v505, 4
  %v532 = vmax.f32 %v505, %v531
  %v533 = vrot.slane %v532, 2
  %v534 = vmax.f32 %v532, %v533
  %v535 = vrot.slane %v534, 1
  %v536 = vmax.f32 %v534, %v535
  %v537 = vsub.f32 %v496, %v536
  %v538 = vmul.f32 %v537, 1.442695
  %v539 = vpow.pop %v538
  %v540 = vsel %vm504, %v539, 0.0
  %v541 = vrot.slane %v540, 4
  %v542 = vadd.f32 %v540, %v541
  %v543 = vrot.slane %v542, 2
  %v544 = vadd.f32 %v542, %v543
  %v545 = vrot.slane %v544, 1
  %v546 = vadd.f32 %v544, %v545
  %v547 = vlog2.pop %v546
  %v548 = vmul.f32 %v547, 0.6931472
  %v549 = vadd.f32 %v536, %v548
  %v550 = vrot.slane %v518, 4
  %v551 = vadd.f32 %v518, %v550
  %v552 = vrot.slane %v551, 2
  %v553 = vadd.f32 %v551, %v552
  %v554 = vrot.slane %v553, 1
  %v555 = vadd.f32 %v553, %v554
  %v556 = vsub.f32 %v549, %v555
  %vm557 = vcmask 15360
  %v558 = vsel %vm557, %v556, 0.0
  %559 = vadd.xlane.f32.xlu0 %v558
  %v560 = vpop.xlane.xlu0 %559
  %v561 = vmul.f32 %v560, %v529
  %v562 = vadd.f32 %v530, %v561
  %v563 = vmul.f32 %v562, 0.5
  %564 = vst [vmem:[%s6] sm:$0xff] 0.0
  %565 = vst [vmem:[%s6 + $0x8] sm:$0xff] 0.0
  %566 = vst [vmem:[%s6 + $0x10] sm:$0xff] 0.0
  %567 = vst [vmem:[%s6 + $0x18] sm:$0xff] 0.0
  %568 = vst.msk [vmem:[%s6] sm:$0x3] %vm504, %v496
  %569 = vst.msk [vmem:[%s6 + $0x8] sm:$0x3] %vm394, %v400
  %570 = vst.msk [vmem:[%s6 + $0x10] sm:$0x3] %vm394, %v407
  %vm571 = vcmask 0
  %572 = vst.msk [vmem:[%s6 + $0x18] sm:$0x1] %vm571, %v563
  // Predicated region
  $region26: #{clip_forward.5} parent=0 // pred_check
    _
  $region27: #{clip_forward.5} parent=0 // pred_check_branch
    %574 = sbr.rel (0) target = $region29
  $region28: #{clip_forward.5} parent=0 // pred_region
    _
  $region29: #{clip_forward.5} parent=0 // pred_fallthru
    _
  // Predicated region
  $region30: #{clip_forward.5} parent=0 // pred_check
    _
  $region31: #{clip_forward.5} parent=0 // pred_check_branch
    %576 = sbr.rel (0) target = $region33
  $region32: #{clip_forward.5} parent=0 // pred_region
    _
  $region33: #{clip_forward.5} parent=0 // pred_fallthru
    _

// kernel: clip_forward.4
$region0: #{clip_forward.4}
  #allocation0 [shape = 'u32[]', space=smem, size = 0x4, offset = 0x4, fixed_abs, tag = 'smem constant byte address 0x4 - core index']
  #allocation1 [shape = 'u32[144,128]{1,0:T(1,128)}', space=vmem, size = 0x12000, scoped, tag = 'internal scratch']
  %s0 = inlined_call_operand.vmem [shape: f32[32,48], index: 0, kind: input, shape index: {}]
  %s1 = inlined_call_operand.vmem [shape: f32[68,32], index: 1, kind: input, shape index: {}]
  %s2 = inlined_call_operand.vmem [shape: f32[34,34], index: 2, kind: input, shape index: {}]
  %s3 = inlined_call_operand.vmem [shape: f32[2,400,128], index: 3, kind: input, shape index: {}]
  %s4 = inlined_call_operand.vmem [shape: f32[34,32], index: 4, kind: output, shape index: {}]
  %s5 = sld [smem:[#allocation0]]
  $region53: #{clip_forward.4} parent=0
    _
  %s7 = ssub.s32 1, %s5
  %s8 = scalar_select 0, %s7, %s5
  loop: start=0, step=1, limit=4
  $region2: #{clip_forward.4} parent=0 // loop_pre_header
    _
  $region3: #{clip_forward.4} parent=0 // loop_header
    %s10 = sphi 0, %s14
    %p11 = scmp.ge.s32.totalorder %s10, 4
    %s18 = sphi 0, %s18
    %s20 = sphi 0, %s18
    %s21 = sphi 0, %s20
    %s35 = sphi 0, %s21
    %s39 = sphi 0, %s39
    %s41 = sphi 0, %s39
    %s42 = sphi 0, %s41
    %s56 = sphi 0, %s42
    %s60 = sphi 0, %s60
    %s62 = sphi 0, %s60
    %s63 = sphi 0, %s62
    %s77 = sphi 0, %s63
    %s83 = sphi 0, %s85
    %s86 = sphi 0, %s83
    %s87 = sphi 0, %s86
    %s103 = sphi 0, %s87
    %s107 = sphi 0, %s107
    %s109 = sphi 0, %s107
    %s110 = sphi 0, %s109
    %s124 = sphi 0, %s110
  $region4: #{clip_forward.4} parent=0 // loop_header_branch
    %13 = sbr.rel (%p11) target = $region8
  $region5: #{clip_forward.4} parent=0 // loop_body
    %s15 = ssub.s32 %s10, 1
    %s16 = ssub.s32 %s10, 2
    %s17 = sadd.s32 %s10, 1
    %s19 = sadd.s32 %s18, 1
    %p22 = scmp.eq.s32.totalorder %s10, 1
    %p23 = scmp.ne.s32.totalorder %s18, %s20
    %p24 = scmp.eq.s32.totalorder %s10, 0
    %p25 = por %p23, %p24
    %p26 = scmp.ne.s32.totalorder %s18, %s20
    %p27 = scmp.eq.s32.totalorder %s15, 1
    %p28 = por %p26, %p27
    %p29 = scmp.ne.s32.totalorder %s20, %s21
    %p30 = scmp.eq.s32.totalorder %s15, 0
    %p31 = por %p29, %p30
    %p32 = scmp.ne.s32.totalorder %s20, %s21
    %p33 = scmp.eq.s32.totalorder %s16, 1
    %p34 = por %p32, %p33
    %p36 = scmp.ne.s32.totalorder %s21, %s35
    %p37 = scmp.eq.s32.totalorder %s16, 0
    %p38 = por %p36, %p37
    %s40 = sadd.s32 %s39, 1
    %p43 = scmp.eq.s32.totalorder %s10, 1
    %p44 = scmp.ne.s32.totalorder %s39, %s41
    %p45 = scmp.eq.s32.totalorder %s10, 0
    %p46 = por %p44, %p45
    %p47 = scmp.ne.s32.totalorder %s39, %s41
    %p48 = scmp.eq.s32.totalorder %s15, 1
    %p49 = por %p47, %p48
    %p50 = scmp.ne.s32.totalorder %s41, %s42
    %p51 = scmp.eq.s32.totalorder %s15, 0
    %p52 = por %p50, %p51
    %p53 = scmp.ne.s32.totalorder %s41, %s42
    %p54 = scmp.eq.s32.totalorder %s16, 1
    %p55 = por %p53, %p54
    %p57 = scmp.ne.s32.totalorder %s42, %s56
    %p58 = scmp.eq.s32.totalorder %s16, 0
    %p59 = por %p57, %p58
    %s61 = sadd.s32 %s60, 1
    %p64 = scmp.eq.s32.totalorder %s10, 1
    %p65 = scmp.ne.s32.totalorder %s60, %s62
    %p66 = scmp.eq.s32.totalorder %s10, 0
    %p67 = por %p65, %p66
    %p68 = scmp.ne.s32.totalorder %s60, %s62
    %p69 = scmp.eq.s32.totalorder %s15, 1
    %p70 = por %p68, %p69
    %p71 = scmp.ne.s32.totalorder %s62, %s63
    %p72 = scmp.eq.s32.totalorder %s15, 0
    %p73 = por %p71, %p72
    %p74 = scmp.ne.s32.totalorder %s62, %s63
    %p75 = scmp.eq.s32.totalorder %s16, 1
    %p76 = por %p74, %p75
    %p78 = scmp.ne.s32.totalorder %s63, %s77
    %p79 = scmp.eq.s32.totalorder %s16, 0
    %p80 = por %p78, %p79
    %s81 = ssub.s32 %s10, %s17
    %p82 = scmp.eq.s32.totalorder %s81, 0
    %s84 = sadd.s32 %s83, 1
    %s85 = scalar_select %p82, %s83, %s84
    %p88 = pneg %p82
    %p89 = scmp.eq.s32.totalorder %s10, 1
    %p90 = por %p88, %p89
    %p91 = scmp.ne.s32.totalorder %s83, %s86
    %p92 = scmp.eq.s32.totalorder %s10, 0
    %p93 = por %p91, %p92
    %p94 = scmp.ne.s32.totalorder %s83, %s86
    %p95 = scmp.eq.s32.totalorder %s15, 1
    %p96 = por %p94, %p95
    %p97 = scmp.ne.s32.totalorder %s86, %s87
    %p98 = scmp.eq.s32.totalorder %s15, 0
    %p99 = por %p97, %p98
    %p100 = scmp.ne.s32.totalorder %s86, %s87
    %p101 = scmp.eq.s32.totalorder %s16, 1
    %p102 = por %p100, %p101
    %p104 = scmp.ne.s32.totalorder %s87, %s103
    %p105 = scmp.eq.s32.totalorder %s16, 0
    %p106 = por %p104, %p105
    %s108 = sadd.s32 %s107, 1
    %p111 = scmp.eq.s32.totalorder %s10, 1
    %p112 = scmp.ne.s32.totalorder %s107, %s109
    %p113 = scmp.eq.s32.totalorder %s10, 0
    %p114 = por %p112, %p113
    %p115 = scmp.ne.s32.totalorder %s107, %s109
    %p116 = scmp.eq.s32.totalorder %s15, 1
    %p117 = por %p115, %p116
    %p118 = scmp.ne.s32.totalorder %s109, %s110
    %p119 = scmp.eq.s32.totalorder %s15, 0
    %p120 = por %p118, %p119
    %p121 = scmp.ne.s32.totalorder %s109, %s110
    %p122 = scmp.eq.s32.totalorder %s16, 1
    %p123 = por %p121, %p122
    %p125 = scmp.ne.s32.totalorder %s110, %s124
    %p126 = scmp.eq.s32.totalorder %s16, 0
    %p127 = por %p125, %p126
    %p128 = scmp.le.s32.totalorder 1, %s10
    %p129 = scmp.lt.s32.totalorder %s10, 3
    %p130 = pnand %p128, %p129
    %p131 = pneg %p130
    // Predicated region
    $region9: #{clip_forward.4} parent=5 // pred_check
      _
    $region10: #{clip_forward.4} parent=5 // pred_check_branch
      %133 = sbr.rel (%p130) target = $region12
    $region11: #{clip_forward.4} parent=5 // pred_region
      %s134 = ssub.s32 %s10, 1
      // Predicated region
      $region13: #{clip_forward.4} parent=11 // pred_check
        %p135 = pneg %p31
      $region14: #{clip_forward.4} parent=11 // pred_check_branch
        %137 = sbr.rel (%p135) target = $region16
      $region15: #{clip_forward.4} parent=11 // pred_region
        _
      $region16: #{clip_forward.4} parent=11 // pred_fallthru
        _
      // Predicated region
      $region17: #{clip_forward.4} parent=11 // pred_check
        %p138 = pneg %p52
      $region18: #{clip_forward.4} parent=11 // pred_check_branch
        %140 = sbr.rel (%p138) target = $region20
      $region19: #{clip_forward.4} parent=11 // pred_region
        _
      $region20: #{clip_forward.4} parent=11 // pred_fallthru
        _
      // Predicated region
      $region21: #{clip_forward.4} parent=11 // pred_check
        %p141 = pneg %p73
      $region22: #{clip_forward.4} parent=11 // pred_check_branch
        %143 = sbr.rel (%p141) target = $region24
      $region23: #{clip_forward.4} parent=11 // pred_region
        _
      $region24: #{clip_forward.4} parent=11 // pred_fallthru
        _
    $region12: #{clip_forward.4} parent=5 // pred_fallthru
      _
    %p144 = scmp.lt.s32.totalorder %s10, 2
    // Predicated region
    $region25: #{clip_forward.4} parent=5 // pred_check
      %p145 = pneg %p144
    $region26: #{clip_forward.4} parent=5 // pred_check_branch
      %147 = sbr.rel (%p145) target = $region28
    $region27: #{clip_forward.4} parent=5 // pred_region
      // Predicated region
      $region29: #{clip_forward.4} parent=27 // pred_check
        %p148 = pneg %p93
      $region30: #{clip_forward.4} parent=27 // pred_check_branch
        %150 = sbr.rel (%p148) target = $region32
      $region31: #{clip_forward.4} parent=27 // pred_region
        %p151 = scmp.lt.s32.totalorder %s10, 1
        %s152 = scalar_select %p151, %s10, 1
        %s153 = smul.addr %s152, 50
        %s154 = smul.addr %s153, 8
        %s155 = scalar_lea.vmem %s3, %s154
      $region32: #{clip_forward.4} parent=27 // pred_fallthru
        _
    $region28: #{clip_forward.4} parent=5 // pred_fallthru
      _
    %p156 = scmp.le.s32.totalorder 1, %s10
    %p157 = scmp.lt.s32.totalorder %s10, 3
    %p158 = pnand %p156, %p157
    %p159 = pneg %p158
    // Predicated region
    $region33: #{clip_forward.4} parent=5 // pred_check
      _
    $region34: #{clip_forward.4} parent=5 // pred_check_branch
      %161 = sbr.rel (%p158) target = $region36
    $region35: #{clip_forward.4} parent=5 // pred_region
      %s162 = ssub.s32 %s10, 1
      %p163 = pneg %p31
      %p164 = pneg %p28
      %p165 = pneg %p52
      %p166 = pneg %p49
      %p167 = pneg %p73
      %p168 = pneg %p70
      %p169 = scmp.lt.s32.totalorder %s15, 1
      %s170 = scalar_select %p169, %s15, 1
      %s171 = smul.addr %s170, 50
      %s172 = smul.addr %s171, 8
      %s173 = scalar_lea.vmem %s3, %s172
      %p174 = pneg %p99
      %p175 = pneg %p96
      %p176 = pneg %p120
      %p177 = pneg %p117
      %p178 = scmp.lt.s32.totalorder %s15, 1
      %s179 = scalar_select %p178, %s15, 1
      %s180 = smul.addr %s179, 50
      %s181 = smul.addr %s180, 8
      %s182 = scalar_lea.vmem %s3, %s181
      %p183 = scmp.eq.s32.totalorder %s15, 0
      // Predicated region
      $region37: #{clip_forward.4} parent=35 // pred_check
        %p184 = pneg %p183
      $region38: #{clip_forward.4} parent=35 // pred_check_branch
        %186 = sbr.rel (%p184) target = $region40
      $region39: #{clip_forward.4} parent=35 // pred_region
        %v187 = vld [vmem:[%s1] sm:$0xff]
        %v188 = vld [vmem:[%s1 + $0x8] sm:$0xff]
        %v189 = vld [vmem:[%s1 + $0x10] sm:$0xff]
        %v190 = vld [vmem:[%s1 + $0x18] sm:$0xff]
        %v191 = vld [vmem:[%s1 + $0x20] sm:$0xff]
        %v192 = vld [vmem:[%s1 + $0x28] sm:$0xff]
        %v193 = vld [vmem:[%s1 + $0x30] sm:$0x1]
        %v194 = vld [vmem:[%s1 + $0x31] sm:$0x1]
        %v195 = vld [vmem:[%s1 + $0x32] sm:$0xff]
        %v196 = vld [vmem:[%s1 + $0x3a] sm:$0xff]
        %v197 = vld [vmem:[%s1 + $0x42] sm:$0x1]
        %v198 = vld [vmem:[%s1 + $0x43] sm:$0x1]
        %v199 = vld [vmem:[%s0] sm:$0xff]
        %v200 = vld [vmem:[%s0 + $0x8] sm:$0xff]
        %v201 = vld [vmem:[%s0 + $0x10] sm:$0xff]
        %v202 = vld [vmem:[%s0 + $0x18] sm:$0xff]
        %vm203 = vcmask 392192
        %v205 = vsel %vm203, %v199, 0
        %v208 = vsel %vm203, %v200, 0
        %v211 = vsel %vm203, %v201, 0
        %v214 = vsel %vm203, %v202, 0
        %216 = vmatprep.subr.mxu0 0.0
        %217 = vmatpush1.msra.mxu0 0.0
        %218 = vmatprep.subr.mxu0 0.0
        %219 = vmatpush1.msra.mxu0 0.0
        %220 = vmatprep.subr.mxu0 0.0
        %221 = vmatpush1.msra.mxu0 0.0
        %222 = vmatprep.subr.mxu0 0.0
        %223 = vmatpush1.msra.mxu0 0.0
        %224 = vmatprep.subr.mxu0 0.0
        %225 = vmatpush1.msra.mxu0 0.0
        %226 = vmatprep.subr.mxu0 0.0
        %227 = vmatpush1.msra.mxu0 0.0
        %228 = vmatprep.subr.mxu0 0.0
        %229 = vmatpush1.msra.mxu0 0.0
        %230 = vmatprep.subr.mxu0 0.0
        %231 = vmatpush1.msra.mxu0 0.0
        %232 = vmatprep.subr.mxu0 0.0
        %233 = vmatpush1.msra.mxu0 0.0
        %234 = vmatprep.subr.mxu0 0.0
        %235 = vmatpush1.msra.mxu0 0.0
        %236 = vmatprep.subr.mxu0 0.0
        %237 = vmatpush1.msra.mxu0 %v192
        %238 = vmatprep.subr.mxu0 0.0
        %239 = vmatpush1.msra.mxu0 %v191
        %240 = vmatprep.subr.mxu0 0.0
        %241 = vmatpush1.msra.mxu0 %v190
        %242 = vmatprep.subr.mxu0 0.0
        %243 = vmatpush1.msra.mxu0 %v189
        %244 = vmatprep.subr.mxu0 0.0
        %245 = vmatpush1.msra.mxu0 %v188
        %246 = vmatprep.subr.mxu0 0.0
        %247 = vmatpush1.msra.mxu0 %v187
        %248 = vmatprep.subr.mxu0 0.0
        %249 = vmatpush2.msra.mxu0 0.0
        %250 = vmatprep.subr.mxu0 0.0
        %251 = vmatpush2.msra.mxu0 0.0
        %252 = vmatprep.subr.mxu0 0.0
        %253 = vmatpush2.msra.mxu0 0.0
        %254 = vmatprep.subr.mxu0 0.0
        %255 = vmatpush2.msra.mxu0 0.0
        %256 = vmatprep.subr.mxu0 0.0
        %257 = vmatpush2.msra.mxu0 0.0
        %258 = vmatprep.subr.mxu0 0.0
        %259 = vmatpush2.msra.mxu0 0.0
        %260 = vmatprep.subr.mxu0 0.0
        %261 = vmatpush2.msra.mxu0 0.0
        %262 = vmatprep.subr.mxu0 0.0
        %263 = vmatpush2.msra.mxu0 0.0
        %264 = vmatprep.subr.mxu0 0.0
        %265 = vmatpush2.msra.mxu0 0.0
        %266 = vmatprep.subr.mxu0 0.0
        %267 = vmatpush2.msra.mxu0 0.0
        %268 = vmatprep.subr.mxu0 0.0
        %269 = vmatpush2.msra.mxu0 0.0
        %270 = vmatprep.subr.mxu0 0.0
        %271 = vmatpush2.msra.mxu0 0.0
        %272 = vmatprep.subr.mxu0 0.0
        %273 = vmatpush2.msra.mxu0 0.0
        %274 = vmatprep.subr.mxu0 0.0
        %275 = vmatpush2.msra.mxu0 0.0
        %276 = vmatprep.subr.mxu0 0.0
        %277 = vmatpush2.msra.mxu0 0.0
        %278 = vmatprep.subr.mxu0 0.0
        %279 = vmatpush2.msra.mxu0 0.0
        %280 = vmatprep.mubr.f32.mxu0 0.0
        %281 = vmatmul.mubr.f32.gmra.mxu0 %v205
        %v282 = vpop.f32.mrf.mxu0
        %v283 = vadd.f32 0.0, %v282
        %v284 = vpop.f32.mrf.mxu0
        %285 = vmatprep.mubr.f32.mxu0 0.0
        %286 = vmatmul.mubr.f32.gmra.mxu0 %v208
        %v287 = vpop.f32.mrf.mxu0
        %v288 = vadd.f32 0.0, %v287
        %v289 = vpop.f32.mrf.mxu0
        %290 = vmatprep.mubr.f32.mxu0 0.0
        %291 = vmatmul.mubr.f32.gmra.mxu0 %v211
        %v292 = vpop.f32.mrf.mxu0
        %v293 = vadd.f32 0.0, %v292
        %v294 = vpop.f32.mrf.mxu0
        %295 = vmatprep.mubr.f32.mxu0 0.0
        %296 = vmatmul.mubr.f32.gmra.mxu0 %v214
        %v297 = vpop.f32.mrf.mxu0
        %v298 = vadd.f32 0.0, %v297
        %v299 = vpop.f32.mrf.mxu0
        %300 = vdwg.mxu0
        %v301 = vadd.f32 %v193, %v194
        %v302 = vadd.f32 %v283, %v195
        %v303 = vadd.f32 %v288, %v196
        %v304 = vadd.f32 %v293, %v195
        %v305 = vadd.f32 %v298, %v196
        %vm308 = vcmask 1040384
        %v309 = vrot.slane %v302, 7
        %v310 = vrot.slane %v303, 7
        %v311 = vsel %vm308, %v309, %v310
        %v316 = vrot.slane %v301, 7
        %vm320 = vcmask 1041408
        %v321 = vrot.slane %v304, 6
        %v322 = vrot.slane %v305, 6
        %v323 = vsel %vm320, %v321, %v322
        %v327 = vsel %vm308, %v301, %v309
        %v328 = vsel %vm308, %v310, %v316
        %v329 = vsel %vm320, %v328, %v321
        %vm330 = vcmask 261120
        %v331 = vsel %vm330, %v327, 0.0
        %332 = vadd.xlane.f32.xlu0 %v331
        %v333 = vpop.xlane.xlu0 %332
        %v334 = vsel %vm330, %v311, 0.0
        %335 = vadd.xlane.f32.xlu0 %v334
        %v336 = vpop.xlane.xlu0 %335
        %v337 = vsel %vm330, %v329, 0.0
        %338 = vadd.xlane.f32.xlu0 %v337
        %v339 = vpop.xlane.xlu0 %338
        %v340 = vsel %vm330, %v323, 0.0
        %341 = vadd.xlane.f32.xlu0 %v340
        %v342 = vpop.xlane.xlu0 %341
        %vm343 = vcmask 254976
        %v344 = vsel %vm343, %v322, 0.0
        %345 = vadd.xlane.f32.xlu0 %v344
        %v346 = vpop.xlane.xlu0 %345
        %v347 = vrcp.pop 32.0
        %v348 = vmul.f32 %v333, %v347
        %v349 = vmul.f32 %v336, %v347
        %v350 = vmul.f32 %v339, %v347
        %v351 = vmul.f32 %v342, %v347
        %v352 = vmul.f32 %v346, %v347
        %v353 = vsub.f32 %v327, %v348
        %v354 = vsub.f32 %v311, %v349
        %v355 = vsub.f32 %v329, %v350
        %v356 = vsub.f32 %v323, %v351
        %v357 = vsub.f32 %v322, %v352
        %v358 = vmul.f32 %v353, %v353
        %v359 = vmul.f32 %v354, %v354
        %v360 = vmul.f32 %v355, %v355
        %v361 = vmul.f32 %v356, %v356
        %v362 = vmul.f32 %v357, %v357
        %v363 = vsel %vm330, %v358, 0.0
        %364 = vadd.xlane.f32.xlu0 %v363
        %v365 = vpop.xlane.xlu0 %364
        %v366 = vsel %vm330, %v359, 0.0
        %367 = vadd.xlane.f32.xlu0 %v366
        %v368 = vpop.xlane.xlu0 %367
        %v369 = vsel %vm330, %v360, 0.0
        %370 = vadd.xlane.f32.xlu0 %v369
        %v371 = vpop.xlane.xlu0 %370
        %v372 = vsel %vm330, %v361, 0.0
        %373 = vadd.xlane.f32.xlu0 %v372
        %v374 = vpop.xlane.xlu0 %373
        %v375 = vsel %vm343, %v362, 0.0
        %376 = vadd.xlane.f32.xlu0 %v375
        %v377 = vpop.xlane.xlu0 %376
        %v378 = vmul.f32 %v365, %v347
        %v379 = vmul.f32 %v368, %v347
        %v380 = vmul.f32 %v371, %v347
        %v381 = vmul.f32 %v374, %v347
        %v382 = vmul.f32 %v377, %v347
        %v383 = vadd.f32 %v378, 1e-05
        %v384 = vadd.f32 %v379, 1e-05
        %v385 = vadd.f32 %v380, 1e-05
        %v386 = vadd.f32 %v381, 1e-05
        %v387 = vadd.f32 %v382, 1e-05
        %v388 = vrsqrt.pop %v383
        %v389 = vrsqrt.pop %v384
        %v390 = vrsqrt.pop %v385
        %v391 = vrsqrt.pop %v386
        %v392 = vrsqrt.pop %v387
        %v393 = vmul.f32 %v353, %v388
        %v394 = vmul.f32 %v354, %v389
        %v395 = vmul.f32 %v355, %v390
        %v396 = vmul.f32 %v356, %v391
        %v397 = vmul.f32 %v357, %v392
        %v398 = vlaneseq
        %v399 = vshrl.u32 %v398, 7
        %v400 = vsub.s32 0, %v399
        %v401 = vrot.slane %v197, %v400
        %v402 = vmul.f32 %v393, %v401
        %v403 = vmul.f32 %v394, %v401
        %v404 = vmul.f32 %v395, %v401
        %v405 = vmul.f32 %v396, %v401
        %v406 = vmul.f32 %v397, %v401
        %v407 = vlaneseq
        %v408 = vshrl.u32 %v407, 7
        %v409 = vsub.s32 0, %v408
        %v410 = vrot.slane %v198, %v409
        %v411 = vadd.f32 %v402, %v410
        %v412 = vadd.f32 %v403, %v410
        %v413 = vadd.f32 %v404, %v410
        %v414 = vadd.f32 %v405, %v410
        %v415 = vadd.f32 %v406, %v410
        %416 = vst.msk [vmem:[%s4] sm:$0xff] %vm330, %v411
        %417 = vst.msk [vmem:[%s4 + $0x8] sm:$0xff] %vm330, %v412
        %418 = vst.msk [vmem:[%s4 + $0x10] sm:$0xff] %vm330, %v413
        %419 = vst.msk [vmem:[%s4 + $0x18] sm:$0xff] %vm330, %v414
        %420 = vst.msk [vmem:[%s4 + $0x20] sm:$0x3] %vm343, %v415
      $region40: #{clip_forward.4} parent=35 // pred_fallthru
        _
      %v421 = vld [vmem:[%s4] sm:$0xff]
      %v422 = vld [vmem:[%s4 + $0x8] sm:$0xff]
      %v423 = vld [vmem:[%s4 + $0x10] sm:$0xff]
      %v424 = vld [vmem:[%s4 + $0x18] sm:$0xff]
      %v425 = vld [vmem:[%s4 + $0x20] sm:$0x3]
      %v426 = vld [vmem:[%s2] sm:$0xff]
      %v427 = vld [vmem:[%s2 + $0x8] sm:$0xff]
      %v428 = vld [vmem:[%s2 + $0x10] sm:$0xff]
      %v429 = vld [vmem:[%s2 + $0x18] sm:$0xff]
      %v430 = vld [vmem:[%s2 + $0x20] sm:$0x3]
      %v431 = vld [vmem:[%s182 + $0x180] sm:$0x1]
      %v432 = vld [vmem:[%s182 + $0x181] sm:$0x1]
      %vm433 = vcmask 261120
      %v434 = vsel %vm433, %v421, 0.0
      %435 = vadd.xlane.f32.xlu0 %v434
      %v436 = vpop.xlane.xlu0 %435
      %v437 = vsel %vm433, %v422, 0.0
      %438 = vadd.xlane.f32.xlu0 %v437
      %v439 = vpop.xlane.xlu0 %438
      %v440 = vsel %vm433, %v423, 0.0
      %441 = vadd.xlane.f32.xlu0 %v440
      %v442 = vpop.xlane.xlu0 %441
      %v443 = vsel %vm433, %v424, 0.0
      %444 = vadd.xlane.f32.xlu0 %v443
      %v445 = vpop.xlane.xlu0 %444
      %vm446 = vcmask 254976
      %v447 = vsel %vm446, %v425, 0.0
      %448 = vadd.xlane.f32.xlu0 %v447
      %v449 = vpop.xlane.xlu0 %448
      %v450 = vrcp.pop 32.0
      %v451 = vmul.f32 %v436, %v450
      %v452 = vmul.f32 %v439, %v450
      %v453 = vmul.f32 %v442, %v450
      %v454 = vmul.f32 %v445, %v450
      %v455 = vmul.f32 %v449, %v450
      %v456 = vsub.f32 %v421, %v451
      %v457 = vsub.f32 %v422, %v452
      %v458 = vsub.f32 %v423, %v453
      %v459 = vsub.f32 %v424, %v454
      %v460 = vsub.f32 %v425, %v455
      %v461 = vmul.f32 %v456, %v456
      %v462 = vmul.f32 %v457, %v457
      %v463 = vmul.f32 %v458, %v458
      %v464 = vmul.f32 %v459, %v459
      %v465 = vmul.f32 %v460, %v460
      %v466 = vsel %vm433, %v461, 0.0
      %467 = vadd.xlane.f32.xlu0 %v466
      %v468 = vpop.xlane.xlu0 %467
      %v469 = vsel %vm433, %v462, 0.0
      %470 = vadd.xlane.f32.xlu0 %v469
      %v471 = vpop.xlane.xlu0 %470
      %v472 = vsel %vm433, %v463, 0.0
      %473 = vadd.xlane.f32.xlu0 %v472
      %v474 = vpop.xlane.xlu0 %473
      %v475 = vsel %vm433, %v464, 0.0
      %476 = vadd.xlane.f32.xlu0 %v475
      %v477 = vpop.xlane.xlu0 %476
      %v478 = vsel %vm446, %v465, 0.0
      %479 = vadd.xlane.f32.xlu0 %v478
      %v480 = vpop.xlane.xlu0 %479
      %v481 = vmul.f32 %v468, %v450
      %v482 = vmul.f32 %v471, %v450
      %v483 = vmul.f32 %v474, %v450
      %v484 = vmul.f32 %v477, %v450
      %v485 = vmul.f32 %v480, %v450
      %v486 = vadd.f32 %v481, 1e-05
      %v487 = vadd.f32 %v482, 1e-05
      %v488 = vadd.f32 %v483, 1e-05
      %v489 = vadd.f32 %v484, 1e-05
      %v490 = vadd.f32 %v485, 1e-05
      %v491 = vrsqrt.pop %v486
      %v492 = vrsqrt.pop %v487
      %v493 = vrsqrt.pop %v488
      %v494 = vrsqrt.pop %v489
      %v495 = vrsqrt.pop %v490
      %v496 = vmul.f32 %v456, %v491
      %v497 = vmul.f32 %v457, %v492
      %v498 = vmul.f32 %v458, %v493
      %v499 = vmul.f32 %v459, %v494
      %v500 = vmul.f32 %v460, %v495
      %v501 = vlaneseq
      %v502 = vshrl.u32 %v501, 7
      %v503 = vsub.s32 0, %v502
      %v504 = vrot.slane %v431, %v503
      %v505 = vmul.f32 %v496, %v504
      %v506 = vmul.f32 %v497, %v504
      %v507 = vmul.f32 %v498, %v504
      %v508 = vmul.f32 %v499, %v504
      %v509 = vmul.f32 %v500, %v504
      %v510 = vlaneseq
      %v511 = vshrl.u32 %v510, 7
      %v512 = vsub.s32 0, %v511
      %v513 = vrot.slane %v432, %v512
      %v514 = vadd.f32 %v505, %v513
      %v515 = vadd.f32 %v506, %v513
      %v516 = vadd.f32 %v507, %v513
      %v517 = vadd.f32 %v508, %v513
      %v518 = vadd.f32 %v509, %v513
      %v519 = vld [vmem:[%s182] sm:$0xff]
      %v520 = vld [vmem:[%s182 + $0x8] sm:$0xff]
      %v521 = vld [vmem:[%s182 + $0x10] sm:$0xff]
      %v522 = vld [vmem:[%s182 + $0x18] sm:$0xff]
      %v523 = vld [vmem:[%s182 + $0x187] sm:$0x1]
      %v524 = vlaneseq
      %v525 = vshrl.u32 %v524, 7
      %v526 = vsub.s32 0, %v525
      %v527 = vrot.slane %v523, %v526
      %v529 = vsel %vm433, %v514, 0
      %v532 = vsel %vm433, %v515, 0
      %v535 = vsel %vm433, %v516, 0
      %v538 = vsel %vm433, %v517, 0
      %v541 = vsel %vm433, %v518, 0
      %543 = vmatprep.subr.mxu0 0.0
      %544 = vmatpush1.msra.mxu0 0.0
      %545 = vmatprep.subr.mxu0 0.0
      %546 = vmatpush1.msra.mxu0 0.0
      %547 = vmatprep.subr.mxu0 0.0
      %548 = vmatpush1.msra.mxu0 0.0
      %549 = vmatprep.subr.mxu0 0.0
      %550 = vmatpush1.msra.mxu0 0.0
      %551 = vmatprep.subr.mxu0 0.0
      %552 = vmatpush1.msra.mxu0 0.0
      %553 = vmatprep.subr.mxu0 0.0
      %554 = vmatpush1.msra.mxu0 0.0
      %555 = vmatprep.subr.mxu0 0.0
      %556 = vmatpush1.msra.mxu0 0.0
      %557 = vmatprep.subr.mxu0 0.0
      %558 = vmatpush1.msra.mxu0 0.0
      %559 = vmatprep.subr.mxu0 0.0
      %560 = vmatpush1.msra.mxu0 0.0
      %561 = vmatprep.subr.mxu0 0.0
      %562 = vmatpush1.msra.mxu0 0.0
      %563 = vmatprep.subr.mxu0 0.0
      %564 = vmatpush1.msra.mxu0 0.0
      %565 = vmatprep.subr.mxu0 0.0
      %566 = vmatpush1.msra.mxu0 0.0
      %567 = vmatprep.subr.mxu0 0.0
      %568 = vmatpush1.msra.mxu0 %v522
      %569 = vmatprep.subr.mxu0 0.0
      %570 = vmatpush1.msra.mxu0 %v521
      %571 = vmatprep.subr.mxu0 0.0
      %572 = vmatpush1.msra.mxu0 %v520
      %573 = vmatprep.subr.mxu0 0.0
      %574 = vmatpush1.msra.mxu0 %v519
      %575 = vmatprep.subr.mxu0 0.0
      %576 = vmatpush2.msra.mxu0 0.0
      %577 = vmatprep.subr.mxu0 0.0
      %578 = vmatpush2.msra.mxu0 0.0
      %579 = vmatprep.subr.mxu0 0.0
      %580 = vmatpush2.msra.mxu0 0.0
      %581 = vmatprep.subr.mxu0 0.0
      %582 = vmatpush2.msra.mxu0 0.0
      %583 = vmatprep.subr.mxu0 0.0
      %584 = vmatpush2.msra.mxu0 0.0
      %585 = vmatprep.subr.mxu0 0.0
      %586 = vmatpush2.msra.mxu0 0.0
      %587 = vmatprep.subr.mxu0 0.0
      %588 = vmatpush2.msra.mxu0 0.0
      %589 = vmatprep.subr.mxu0 0.0
      %590 = vmatpush2.msra.mxu0 0.0
      %591 = vmatprep.subr.mxu0 0.0
      %592 = vmatpush2.msra.mxu0 0.0
      %593 = vmatprep.subr.mxu0 0.0
      %594 = vmatpush2.msra.mxu0 0.0
      %595 = vmatprep.subr.mxu0 0.0
      %596 = vmatpush2.msra.mxu0 0.0
      %597 = vmatprep.subr.mxu0 0.0
      %598 = vmatpush2.msra.mxu0 0.0
      %599 = vmatprep.subr.mxu0 0.0
      %600 = vmatpush2.msra.mxu0 0.0
      %601 = vmatprep.subr.mxu0 0.0
      %602 = vmatpush2.msra.mxu0 0.0
      %603 = vmatprep.subr.mxu0 0.0
      %604 = vmatpush2.msra.mxu0 0.0
      %605 = vmatprep.subr.mxu0 0.0
      %606 = vmatpush2.msra.mxu0 0.0
      %607 = vmatprep.mubr.f32.mxu0 0.0
      %608 = vmatmul.mubr.f32.gmra.mxu0 %v529
      %v609 = vpop.f32.mrf.mxu0
      %v610 = vadd.f32 %v527, %v609
      %v611 = vpop.f32.mrf.mxu0
      %612 = vmatprep.mubr.f32.mxu0 0.0
      %613 = vmatmul.mubr.f32.gmra.mxu0 %v532
      %v614 = vpop.f32.mrf.mxu0
      %v615 = vadd.f32 %v527, %v614
      %v616 = vpop.f32.mrf.mxu0
      %617 = vmatprep.mubr.f32.mxu0 0.0
      %618 = vmatmul.mubr.f32.gmra.mxu0 %v535
      %v619 = vpop.f32.mrf.mxu0
      %v620 = vadd.f32 %v527, %v619
      %v621 = vpop.f32.mrf.mxu0
      %622 = vmatprep.mubr.f32.mxu0 0.0
      %623 = vmatmul.mubr.f32.gmra.mxu0 %v538
      %v624 = vpop.f32.mrf.mxu0
      %v625 = vadd.f32 %v527, %v624
      %v626 = vpop.f32.mrf.mxu0
      %627 = vmatprep.mubr.f32.mxu0 0.0
      %628 = vmatmul.mubr.f32.gmra.mxu0 %v541
      %v629 = vpop.f32.mrf.mxu0
      %v630 = vadd.f32 %v527, %v629
      %v631 = vpop.f32.mrf.mxu0
      %632 = vdwg.mxu0
      %v633 = vld [vmem:[%s182 + $0x20] sm:$0xff]
      %v634 = vld [vmem:[%s182 + $0x28] sm:$0xff]
      %v635 = vld [vmem:[%s182 + $0x30] sm:$0xff]
      %v636 = vld [vmem:[%s182 + $0x38] sm:$0xff]
      %v637 = vld [vmem:[%s182 + $0x188] sm:$0x1]
      %v638 = vlaneseq
      %v639 = vshrl.u32 %v638, 7
      %v640 = vsub.s32 0, %v639
      %v641 = vrot.slane %v637, %v640
      %642 = vmatprep.subr.mxu0 0.0
      %643 = vmatpush1.msra.mxu0 0.0
      %644 = vmatprep.subr.mxu0 0.0
      %645 = vmatpush1.msra.mxu0 0.0
      %646 = vmatprep.subr.mxu0 0.0
      %647 = vmatpush1.msra.mxu0 0.0
      %648 = vmatprep.subr.mxu0 0.0
      %649 = vmatpush1.msra.mxu0 0.0
      %650 = vmatprep.subr.mxu0 0.0
      %651 = vmatpush1.msra.mxu0 0.0
      %652 = vmatprep.subr.mxu0 0.0
      %653 = vmatpush1.msra.mxu0 0.0
      %654 = vmatprep.subr.mxu0 0.0
      %655 = vmatpush1.msra.mxu0 0.0
      %656 = vmatprep.subr.mxu0 0.0
      %657 = vmatpush1.msra.mxu0 0.0
      %658 = vmatprep.subr.mxu0 0.0
      %659 = vmatpush1.msra.mxu0 0.0
      %660 = vmatprep.subr.mxu0 0.0
      %661 = vmatpush1.msra.mxu0 0.0
      %662 = vmatprep.subr.mxu0 0.0
      %663 = vmatpush1.msra.mxu0 0.0
      %664 = vmatprep.subr.mxu0 0.0
      %665 = vmatpush1.msra.mxu0 0.0
      %666 = vmatprep.subr.mxu0 0.0
      %667 = vmatpush1.msra.mxu0 %v636
      %668 = vmatprep.subr.mxu0 0.0
      %669 = vmatpush1.msra.mxu0 %v635
      %670 = vmatprep.subr.mxu0 0.0
      %671 = vmatpush1.msra.mxu0 %v634
      %672 = vmatprep.subr.mxu0 0.0
      %673 = vmatpush1.msra.mxu0 %v633
      %674 = vmatprep.subr.mxu0 0.0
      %675 = vmatpush2.msra.mxu0 0.0
      %676 = vmatprep.subr.mxu0 0.0
      %677 = vmatpush2.msra.mxu0 0.0
      %678 = vmatprep.subr.mxu0 0.0
      %679 = vmatpush2.msra.mxu0 0.0
      %680 = vmatprep.subr.mxu0 0.0
      %681 = vmatpush2.msra.mxu0 0.0
      %682 = vmatprep.subr.mxu0 0.0
      %683 = vmatpush2.msra.mxu0 0.0
      %684 = vmatprep.subr.mxu0 0.0
      %685 = vmatpush2.msra.mxu0 0.0
      %686 = vmatprep.subr.mxu0 0.0
      %687 = vmatpush2.msra.mxu0 0.0
      %688 = vmatprep.subr.mxu0 0.0
      %689 = vmatpush2.msra.mxu0 0.0
      %690 = vmatprep.subr.mxu0 0.0
      %691 = vmatpush2.msra.mxu0 0.0
      %692 = vmatprep.subr.mxu0 0.0
      %693 = vmatpush2.msra.mxu0 0.0
      %694 = vmatprep.subr.mxu0 0.0
      %695 = vmatpush2.msra.mxu0 0.0
      %696 = vmatprep.subr.mxu0 0.0
      %697 = vmatpush2.msra.mxu0 0.0
      %698 = vmatprep.subr.mxu0 0.0
      %699 = vmatpush2.msra.mxu0 0.0
      %700 = vmatprep.subr.mxu0 0.0
      %701 = vmatpush2.msra.mxu0 0.0
      %702 = vmatprep.subr.mxu0 0.0
      %703 = vmatpush2.msra.mxu0 0.0
      %704 = vmatprep.subr.mxu0 0.0
      %705 = vmatpush2.msra.mxu0 0.0
      %706 = vmatprep.mubr.f32.mxu0 0.0
      %707 = vmatmul.mubr.f32.gmra.mxu0 %v529
      %v708 = vpop.f32.mrf.mxu0
      %v709 = vadd.f32 %v641, %v708
      %v710 = vpop.f32.mrf.mxu0
      %711 = vmatprep.mubr.f32.mxu0 0.0
      %712 = vmatmul.mubr.f32.gmra.mxu0 %v532
      %v713 = vpop.f32.mrf.mxu0
      %v714 = vadd.f32 %v641, %v713
      %v715 = vpop.f32.mrf.mxu0
      %716 = vmatprep.mubr.f32.mxu0 0.0
      %717 = vmatmul.mubr.f32.gmra.mxu0 %v535
      %v718 = vpop.f32.mrf.mxu0
      %v719 = vadd.f32 %v641, %v718
      %v720 = vpop.f32.mrf.mxu0
      %721 = vmatprep.mubr.f32.mxu0 0.0
      %722 = vmatmul.mubr.f32.gmra.mxu0 %v538
      %v723 = vpop.f32.mrf.mxu0
      %v724 = vadd.f32 %v641, %v723
      %v725 = vpop.f32.mrf.mxu0
      %726 = vmatprep.mubr.f32.mxu0 0.0
      %727 = vmatmul.mubr.f32.gmra.mxu0 %v541
      %v728 = vpop.f32.mrf.mxu0
      %v729 = vadd.f32 %v641, %v728
      %v730 = vpop.f32.mrf.mxu0
      %731 = vdwg.mxu0
      %v732 = vld [vmem:[%s182 + $0x40] sm:$0xff]
      %v733 = vld [vmem:[%s182 + $0x48] sm:$0xff]
      %v734 = vld [vmem:[%s182 + $0x50] sm:$0xff]
      %v735 = vld [vmem:[%s182 + $0x58] sm:$0xff]
      %v736 = vld [vmem:[%s182 + $0x189] sm:$0x1]
      %v737 = vlaneseq
      %v738 = vshrl.u32 %v737, 7
      %v739 = vsub.s32 0, %v738
      %v740 = vrot.slane %v736, %v739
      %741 = vmatprep.subr.mxu0 0.0
      %742 = vmatpush1.msra.mxu0 0.0
      %743 = vmatprep.subr.mxu0 0.0
      %744 = vmatpush1.msra.mxu0 0.0
      %745 = vmatprep.subr.mxu0 0.0
      %746 = vmatpush1.msra.mxu0 0.0
      %747 = vmatprep.subr.mxu0 0.0
      %748 = vmatpush1.msra.mxu0 0.0
      %749 = vmatprep.subr.mxu0 0.0
      %750 = vmatpush1.msra.mxu0 0.0
      %751 = vmatprep.subr.mxu0 0.0
      %752 = vmatpush1.msra.mxu0 0.0
      %753 = vmatprep.subr.mxu0 0.0
      %754 = vmatpush1.msra.mxu0 0.0
      %755 = vmatprep.subr.mxu0 0.0
      %756 = vmatpush1.msra.mxu0 0.0
      %757 = vmatprep.subr.mxu0 0.0
      %758 = vmatpush1.msra.mxu0 0.0
      %759 = vmatprep.subr.mxu0 0.0
      %760 = vmatpush1.msra.mxu0 0.0
      %761 = vmatprep.subr.mxu0 0.0
      %762 = vmatpush1.msra.mxu0 0.0
      %763 = vmatprep.subr.mxu0 0.0
      %764 = vmatpush1.msra.mxu0 0.0
      %765 = vmatprep.subr.mxu0 0.0
      %766 = vmatpush1.msra.mxu0 %v735
      %767 = vmatprep.subr.mxu0 0.0
      %768 = vmatpush1.msra.mxu0 %v734
      %769 = vmatprep.subr.mxu0 0.0
      %770 = vmatpush1.msra.mxu0 %v733
      %771 = vmatprep.subr.mxu0 0.0
      %772 = vmatpush1.msra.mxu0 %v732
      %773 = vmatprep.subr.mxu0 0.0
      %774 = vmatpush2.msra.mxu0 0.0
      %775 = vmatprep.subr.mxu0 0.0
      %776 = vmatpush2.msra.mxu0 0.0
      %777 = vmatprep.subr.mxu0 0.0
      %778 = vmatpush2.msra.mxu0 0.0
      %779 = vmatprep.subr.mxu0 0.0
      %780 = vmatpush2.msra.mxu0 0.0
      %781 = vmatprep.subr.mxu0 0.0
      %782 = vmatpush2.msra.mxu0 0.0
      %783 = vmatprep.subr.mxu0 0.0
      %784 = vmatpush2.msra.mxu0 0.0
      %785 = vmatprep.subr.mxu0 0.0
      %786 = vmatpush2.msra.mxu0 0.0
      %787 = vmatprep.subr.mxu0 0.0
      %788 = vmatpush2.msra.mxu0 0.0
      %789 = vmatprep.subr.mxu0 0.0
      %790 = vmatpush2.msra.mxu0 0.0
      %791 = vmatprep.subr.mxu0 0.0
      %792 = vmatpush2.msra.mxu0 0.0
      %793 = vmatprep.subr.mxu0 0.0
      %794 = vmatpush2.msra.mxu0 0.0
      %795 = vmatprep.subr.mxu0 0.0
      %796 = vmatpush2.msra.mxu0 0.0
      %797 = vmatprep.subr.mxu0 0.0
      %798 = vmatpush2.msra.mxu0 0.0
      %799 = vmatprep.subr.mxu0 0.0
      %800 = vmatpush2.msra.mxu0 0.0
      %801 = vmatprep.subr.mxu0 0.0
      %802 = vmatpush2.msra.mxu0 0.0
      %803 = vmatprep.subr.mxu0 0.0
      %804 = vmatpush2.msra.mxu0 0.0
      %805 = vmatprep.mubr.f32.mxu0 0.0
      %806 = vmatmul.mubr.f32.gmra.mxu0 %v529
      %v807 = vpop.f32.mrf.mxu0
      %v808 = vadd.f32 %v740, %v807
      %v809 = vpop.f32.mrf.mxu0
      %810 = vmatprep.mubr.f32.mxu0 0.0
      %811 = vmatmul.mubr.f32.gmra.mxu0 %v532
      %v812 = vpop.f32.mrf.mxu0
      %v813 = vadd.f32 %v740, %v812
      %v814 = vpop.f32.mrf.mxu0
      %815 = vmatprep.mubr.f32.mxu0 0.0
      %816 = vmatmul.mubr.f32.gmra.mxu0 %v535
      %v817 = vpop.f32.mrf.mxu0
      %v818 = vadd.f32 %v740, %v817
      %v819 = vpop.f32.mrf.mxu0
      %820 = vmatprep.mubr.f32.mxu0 0.0
      %821 = vmatmul.mubr.f32.gmra.mxu0 %v538
      %v822 = vpop.f32.mrf.mxu0
      %v823 = vadd.f32 %v740, %v822
      %v824 = vpop.f32.mrf.mxu0
      %825 = vmatprep.mubr.f32.mxu0 0.0
      %826 = vmatmul.mubr.f32.gmra.mxu0 %v541
      %v827 = vpop.f32.mrf.mxu0
      %v828 = vadd.f32 %v740, %v827
      %v829 = vpop.f32.mrf.mxu0
      %830 = vdwg.mxu0
      %vm831 = vcmask 130048
      %v833 = vsel %vm831, %v610, 0
      %v836 = vsel %vm831, %v615, 0
      %v839 = vsel %vm831, %v620, 0
      %v842 = vsel %vm831, %v625, 0
      %v845 = vsel %vm831, %v630, 0
      %v848 = vsel %vm831, %v709, 0
      %v851 = vsel %vm831, %v714, 0
      %v854 = vsel %vm831, %v719, 0
      %v857 = vsel %vm831, %v724, 0
      %v860 = vsel %vm831, %v729, 0
      %862 = vmatprep.subr.mxu0 0.0
      %863 = vmatpush1.xpose.msra.mxu0 0.0
      %864 = vmatprep.subr.mxu0 0.0
      %865 = vmatpush1.xpose.msra.mxu0 0.0
      %866 = vmatprep.subr.mxu0 0.0
      %867 = vmatpush1.xpose.msra.mxu0 0.0
      %868 = vmatprep.subr.mxu0 0.0
      %869 = vmatpush1.xpose.msra.mxu0 0.0
      %870 = vmatprep.subr.mxu0 0.0
      %871 = vmatpush1.xpose.msra.mxu0 0.0
      %872 = vmatprep.subr.mxu0 0.0
      %873 = vmatpush1.xpose.msra.mxu0 0.0
      %874 = vmatprep.subr.mxu0 0.0
      %875 = vmatpush1.xpose.msra.mxu0 0.0
      %876 = vmatprep.subr.mxu0 0.0
      %877 = vmatpush1.xpose.msra.mxu0 0.0
      %878 = vmatprep.subr.mxu0 0.0
      %879 = vmatpush1.xpose.msra.mxu0 0.0
      %880 = vmatprep.subr.mxu0 0.0
      %881 = vmatpush1.xpose.msra.mxu0 0.0
      %882 = vmatprep.subr.mxu0 0.0
      %883 = vmatpush1.xpose.msra.mxu0 0.0
      %884 = vmatprep.subr.mxu0 0.0
      %885 = vmatpush1.xpose.msra.mxu0 %v860
      %886 = vmatprep.subr.mxu0 0.0
      %887 = vmatpush1.xpose.msra.mxu0 %v857
      %888 = vmatprep.subr.mxu0 0.0
      %889 = vmatpush1.xpose.msra.mxu0 %v854
      %890 = vmatprep.subr.mxu0 0.0
      %891 = vmatpush1.xpose.msra.mxu0 %v851
      %892 = vmatprep.subr.mxu0 0.0
      %893 = vmatpush1.xpose.msra.mxu0 %v848
      %894 = vmatprep.subr.mxu0 0.0
      %895 = vmatpush2.xpose.msra.mxu0 0.0
      %896 = vmatprep.subr.mxu0 0.0
      %897 = vmatpush2.xpose.msra.mxu0 0.0
      %898 = vmatprep.subr.mxu0 0.0
      %899 = vmatpush2.xpose.msra.mxu0 0.0
      %900 = vmatprep.subr.mxu0 0.0
      %901 = vmatpush2.xpose.msra.mxu0 0.0
      %902 = vmatprep.subr.mxu0 0.0
      %903 = vmatpush2.xpose.msra.mxu0 0.0
      %904 = vmatprep.subr.mxu0 0.0
      %905 = vmatpush2.xpose.msra.mxu0 0.0
      %906 = vmatprep.subr.mxu0 0.0
      %907 = vmatpush2.xpose.msra.mxu0 0.0
      %908 = vmatprep.subr.mxu0 0.0
      %909 = vmatpush2.xpose.msra.mxu0 0.0
      %910 = vmatprep.subr.mxu0 0.0
      %911 = vmatpush2.xpose.msra.mxu0 0.0
      %912 = vmatprep.subr.mxu0 0.0
      %913 = vmatpush2.xpose.msra.mxu0 0.0
      %914 = vmatprep.subr.mxu0 0.0
      %915 = vmatpush2.xpose.msra.mxu0 0.0
      %916 = vmatprep.subr.mxu0 0.0
      %917 = vmatpush2.xpose.msra.mxu0 0.0
      %918 = vmatprep.subr.mxu0 0.0
      %919 = vmatpush2.xpose.msra.mxu0 0.0
      %920 = vmatprep.subr.mxu0 0.0
      %921 = vmatpush2.xpose.msra.mxu0 0.0
      %922 = vmatprep.subr.mxu0 0.0
      %923 = vmatpush2.xpose.msra.mxu0 0.0
      %924 = vmatprep.subr.mxu0 0.0
      %925 = vmatpush2.xpose.msra.mxu0 0.0
      %926 = vmatprep.mubr.f32.mxu0 0.0
      %927 = vmatmul.mubr.f32.gmra.mxu0 %v833
      %v928 = vpop.f32.mrf.mxu0
      %v929 = vadd.f32 0.0, %v928
      %v930 = vpop.f32.mrf.mxu0
      %931 = vmatprep.mubr.f32.mxu0 0.0
      %932 = vmatmul.mubr.f32.gmra.mxu0 %v836
      %v933 = vpop.f32.mrf.mxu0
      %v934 = vadd.f32 0.0, %v933
      %v935 = vpop.f32.mrf.mxu0
      %936 = vmatprep.mubr.f32.mxu0 0.0
      %937 = vmatmul.mubr.f32.gmra.mxu0 %v839
      %v938 = vpop.f32.mrf.mxu0
      %v939 = vadd.f32 0.0, %v938
      %v940 = vpop.f32.mrf.mxu0
      %941 = vmatprep.mubr.f32.mxu0 0.0
      %942 = vmatmul.mubr.f32.gmra.mxu0 %v842
      %v943 = vpop.f32.mrf.mxu0
      %v944 = vadd.f32 0.0, %v943
      %v945 = vpop.f32.mrf.mxu0
      %946 = vmatprep.mubr.f32.mxu0 0.0
      %947 = vmatmul.mubr.f32.gmra.mxu0 %v845
      %v948 = vpop.f32.mrf.mxu0
      %v949 = vadd.f32 0.0, %v948
      %v950 = vpop.f32.mrf.mxu0
      %951 = vdwg.mxu0
      %v952 = vmul.f32 %v929, 0.25
      %v953 = vmul.f32 %v934, 0.25
      %v954 = vmul.f32 %v939, 0.25
      %v955 = vmul.f32 %v944, 0.25
      %v956 = vmul.f32 %v949, 0.25
      %v957 = vadd.f32 %v952, %v426
      %v958 = vadd.f32 %v953, %v427
      %v959 = vadd.f32 %v954, %v428
      %v960 = vadd.f32 %v955, %v429
      %v961 = vadd.f32 %v956, %v430
      %vm962 = vcmask 277504
      %v963 = vsel %vm962, %v957, -inf
      %964 = vmax.xlane.f32.xlu0 %v963
      %v965 = vpop.xlane.xlu0 %964
      %v966 = vsel %vm962, %v958, -inf
      %967 = vmax.xlane.f32.xlu0 %v966
      %v968 = vpop.xlane.xlu0 %967
      %v969 = vsel %vm962, %v959, -inf
      %970 = vmax.xlane.f32.xlu0 %v969
      %v971 = vpop.xlane.xlu0 %970
      %v972 = vsel %vm962, %v960, -inf
      %973 = vmax.xlane.f32.xlu0 %v972
      %v974 = vpop.xlane.xlu0 %973
      %vm975 = vcmask 271360
      %v976 = vsel %vm975, %v961, -inf
      %977 = vmax.xlane.f32.xlu0 %v976
      %v978 = vpop.xlane.xlu0 %977
      %v979 = vsub.f32 %v957, %v965
      %v980 = vsub.f32 %v958, %v968
      %v981 = vsub.f32 %v959, %v971
      %v982 = vsub.f32 %v960, %v974
      %v983 = vsub.f32 %v961, %v978
      %v984 = vmul.f32 %v979, 1.442695
      %v985 = vpow.pop %v984
      %v986 = vmul.f32 %v980, 1.442695
      %v987 = vpow.pop %v986
      %v988 = vmul.f32 %v981, 1.442695
      %v989 = vpow.pop %v988
      %v990 = vmul.f32 %v982, 1.442695
      %v991 = vpow.pop %v990
      %v992 = vmul.f32 %v983, 1.442695
      %v993 = vpow.pop %v992
      %v994 = vsel %vm962, %v985, 0.0
      %995 = vadd.xlane.f32.xlu0 %v994
      %v996 = vpop.xlane.xlu0 %995
      %v997 = vsel %vm962, %v987, 0.0
      %998 = vadd.xlane.f32.xlu0 %v997
      %v999 = vpop.xlane.xlu0 %998
      %v1000 = vsel %vm962, %v989, 0.0
      %1001 = vadd.xlane.f32.xlu0 %v1000
      %v1002 = vpop.xlane.xlu0 %1001
      %v1003 = vsel %vm962, %v991, 0.0
      %1004 = vadd.xlane.f32.xlu0 %v1003
      %v1005 = vpop.xlane.xlu0 %1004
      %v1006 = vsel %vm975, %v993, 0.0
      %1007 = vadd.xlane.f32.xlu0 %v1006
      %v1008 = vpop.xlane.xlu0 %1007
      %v1009 = vrcp.pop %v996
      %v1010 = vmul.f32 %v985, %v1009
      %v1011 = vrcp.pop %v999
      %v1012 = vmul.f32 %v987, %v1011
      %v1013 = vrcp.pop %v1002
      %v1014 = vmul.f32 %v989, %v1013
      %v1015 = vrcp.pop %v1005
      %v1016 = vmul.f32 %v991, %v1015
      %v1017 = vrcp.pop %v1008
      %v1018 = vmul.f32 %v993, %v1017
      %v1020 = vsel %vm962, %v1010, 0
      %v1023 = vsel %vm962, %v1012, 0
      %v1026 = vsel %vm962, %v1014, 0
      %v1029 = vsel %vm962, %v1016, 0
      %v1032 = vsel %vm962, %v1018, 0
      %vm1034 = vcmask 1041408
      %v1036 = vsel %vm1034, %v828, 0
      %1038 = vmatprep.subr.mxu0 0.0
      %1039 = vmatpush1.msra.mxu0 0.0
      %1040 = vmatprep.subr.mxu0 0.0
      %1041 = vmatpush1.msra.mxu0 0.0
      %1042 = vmatprep.subr.mxu0 0.0
      %1043 = vmatpush1.msra.mxu0 0.0
      %1044 = vmatprep.subr.mxu0 0.0
      %1045 = vmatpush1.msra.mxu0 0.0
      %1046 = vmatprep.subr.mxu0 0.0
      %1047 = vmatpush1.msra.mxu0 0.0
      %1048 = vmatprep.subr.mxu0 0.0
      %1049 = vmatpush1.msra.mxu0 0.0
      %1050 = vmatprep.subr.mxu0 0.0
      %1051 = vmatpush1.msra.mxu0 0.0
      %1052 = vmatprep.subr.mxu0 0.0
      %1053 = vmatpush1.msra.mxu0 0.0
      %1054 = vmatprep.subr.mxu0 0.0
      %1055 = vmatpush1.msra.mxu0 0.0
      %1056 = vmatprep.subr.mxu0 0.0
      %1057 = vmatpush1.msra.mxu0 0.0
      %1058 = vmatprep.subr.mxu0 0.0
      %1059 = vmatpush1.msra.mxu0 0.0
      %1060 = vmatprep.subr.mxu0 0.0
      %1061 = vmatpush1.msra.mxu0 %v1036
      %1062 = vmatprep.subr.mxu0 0.0
      %1063 = vmatpush1.msra.mxu0 %v823
      %1064 = vmatprep.subr.mxu0 0.0
      %1065 = vmatpush1.msra.mxu0 %v818
      %1066 = vmatprep.subr.mxu0 0.0
      %1067 = vmatpush1.msra.mxu0 %v813
      %1068 = vmatprep.subr.mxu0 0.0
      %1069 = vmatpush1.msra.mxu0 %v808
      %1070 = vmatprep.subr.mxu0 0.0
      %1071 = vmatpush2.msra.mxu0 0.0
      %1072 = vmatprep.subr.mxu0 0.0
      %1073 = vmatpush2.msra.mxu0 0.0
      %1074 = vmatprep.subr.mxu0 0.0
      %1075 = vmatpush2.msra.mxu0 0.0
      %1076 = vmatprep.subr.mxu0 0.0
      %1077 = vmatpush2.msra.mxu0 0.0
      %1078 = vmatprep.subr.mxu0 0.0
      %1079 = vmatpush2.msra.mxu0 0.0
      %1080 = vmatprep.subr.mxu0 0.0
      %1081 = vmatpush2.msra.mxu0 0.0
      %1082 = vmatprep.subr.mxu0 0.0
      %1083 = vmatpush2.msra.mxu0 0.0
      %1084 = vmatprep.subr.mxu0 0.0
      %1085 = vmatpush2.msra.mxu0 0.0
      %1086 = vmatprep.subr.mxu0 0.0
      %1087 = vmatpush2.msra.mxu0 0.0
      %1088 = vmatprep.subr.mxu0 0.0
      %1089 = vmatpush2.msra.mxu0 0.0
      %1090 = vmatprep.subr.mxu0 0.0
      %1091 = vmatpush2.msra.mxu0 0.0
      %1092 = vmatprep.subr.mxu0 0.0
      %1093 = vmatpush2.msra.mxu0 0.0
      %1094 = vmatprep.subr.mxu0 0.0
      %1095 = vmatpush2.msra.mxu0 0.0
      %1096 = vmatprep.subr.mxu0 0.0
      %1097 = vmatpush2.msra.mxu0 0.0
      %1098 = vmatprep.subr.mxu0 0.0
      %1099 = vmatpush2.msra.mxu0 0.0
      %1100 = vmatprep.subr.mxu0 0.0
      %1101 = vmatpush2.msra.mxu0 0.0
      %1102 = vmatprep.mubr.f32.mxu0 0.0
      %1103 = vmatmul.mubr.f32.gmra.mxu0 %v1020
      %v1104 = vpop.f32.mrf.mxu0
      %v1105 = vadd.f32 0.0, %v1104
      %v1106 = vpop.f32.mrf.mxu0
      %1107 = vmatprep.mubr.f32.mxu0 0.0
      %1108 = vmatmul.mubr.f32.gmra.mxu0 %v1023
      %v1109 = vpop.f32.mrf.mxu0
      %v1110 = vadd.f32 0.0, %v1109
      %v1111 = vpop.f32.mrf.mxu0
      %1112 = vmatprep.mubr.f32.mxu0 0.0
      %1113 = vmatmul.mubr.f32.gmra.mxu0 %v1026
      %v1114 = vpop.f32.mrf.mxu0
      %v1115 = vadd.f32 0.0, %v1114
      %v1116 = vpop.f32.mrf.mxu0
      %1117 = vmatprep.mubr.f32.mxu0 0.0
      %1118 = vmatmul.mubr.f32.gmra.mxu0 %v1029
      %v1119 = vpop.f32.mrf.mxu0
      %v1120 = vadd.f32 0.0, %v1119
      %v1121 = vpop.f32.mrf.mxu0
      %1122 = vmatprep.mubr.f32.mxu0 0.0
      %1123 = vmatmul.mubr.f32.gmra.mxu0 %v1032
      %v1124 = vpop.f32.mrf.mxu0
      %v1125 = vadd.f32 0.0, %v1124
      %v1126 = vpop.f32.mrf.mxu0
      %1127 = vdwg.mxu0
      %v1128 = vld [vmem:[%s182 + $0xc0] sm:$0xff]
      %v1129 = vld [vmem:[%s182 + $0xc8] sm:$0xff]
      %v1130 = vld [vmem:[%s182 + $0x60] sm:$0xff]
      %v1131 = vld [vmem:[%s182 + $0x68] sm:$0xff]
      %v1132 = vld [vmem:[%s182 + $0x70] sm:$0xff]
      %v1133 = vld [vmem:[%s182 + $0x78] sm:$0xff]
      %v1134 = vld [vmem:[%s182 + $0x18a] sm:$0x1]
      %v1135 = vlaneseq
      %v1136 = vshrl.u32 %v1135, 7
      %v1137 = vsub.s32 0, %v1136
      %v1138 = vrot.slane %v1134, %v1137
      %1139 = vmatprep.subr.mxu0 0.0
      %1140 = vmatpush1.msra.mxu0 0.0
      %1141 = vmatprep.subr.mxu0 0.0
      %1142 = vmatpush1.msra.mxu0 0.0
      %1143 = vmatprep.subr.mxu0 0.0
      %1144 = vmatpush1.msra.mxu0 0.0
      %1145 = vmatprep.subr.mxu0 0.0
      %1146 = vmatpush1.msra.mxu0 0.0
      %1147 = vmatprep.subr.mxu0 0.0
      %1148 = vmatpush1.msra.mxu0 0.0
      %1149 = vmatprep.subr.mxu0 0.0
      %1150 = vmatpush1.msra.mxu0 0.0
      %1151 = vmatprep.subr.mxu0 0.0
      %1152 = vmatpush1.msra.mxu0 0.0
      %1153 = vmatprep.subr.mxu0 0.0
      %1154 = vmatpush1.msra.mxu0 0.0
      %1155 = vmatprep.subr.mxu0 0.0
      %1156 = vmatpush1.msra.mxu0 0.0
      %1157 = vmatprep.subr.mxu0 0.0
      %1158 = vmatpush1.msra.mxu0 0.0
      %1159 = vmatprep.subr.mxu0 0.0
      %1160 = vmatpush1.msra.mxu0 0.0
      %1161 = vmatprep.subr.mxu0 0.0
      %1162 = vmatpush1.msra.mxu0 0.0
      %1163 = vmatprep.subr.mxu0 0.0
      %1164 = vmatpush1.msra.mxu0 %v1133
      %1165 = vmatprep.subr.mxu0 0.0
      %1166 = vmatpush1.msra.mxu0 %v1132
      %1167 = vmatprep.subr.mxu0 0.0
      %1168 = vmatpush1.msra.mxu0 %v1131
      %1169 = vmatprep.subr.mxu0 0.0
      %1170 = vmatpush1.msra.mxu0 %v1130
      %1171 = vmatprep.subr.mxu0 0.0
      %1172 = vmatpush2.msra.mxu0 0.0
      %1173 = vmatprep.subr.mxu0 0.0
      %1174 = vmatpush2.msra.mxu0 0.0
      %1175 = vmatprep.subr.mxu0 0.0
      %1176 = vmatpush2.msra.mxu0 0.0
      %1177 = vmatprep.subr.mxu0 0.0
      %1178 = vmatpush2.msra.mxu0 0.0
      %1179 = vmatprep.subr.mxu0 0.0
      %1180 = vmatpush2.msra.mxu0 0.0
      %1181 = vmatprep.subr.mxu0 0.0
      %1182 = vmatpush2.msra.mxu0 0.0
      %1183 = vmatprep.subr.mxu0 0.0
      %1184 = vmatpush2.msra.mxu0 0.0
      %1185 = vmatprep.subr.mxu0 0.0
      %1186 = vmatpush2.msra.mxu0 0.0
      %1187 = vmatprep.subr.mxu0 0.0
      %1188 = vmatpush2.msra.mxu0 0.0
      %1189 = vmatprep.subr.mxu0 0.0
      %1190 = vmatpush2.msra.mxu0 0.0
      %1191 = vmatprep.subr.mxu0 0.0
      %1192 = vmatpush2.msra.mxu0 0.0
      %1193 = vmatprep.subr.mxu0 0.0
      %1194 = vmatpush2.msra.mxu0 0.0
      %1195 = vmatprep.subr.mxu0 0.0
      %1196 = vmatpush2.msra.mxu0 0.0
      %1197 = vmatprep.subr.mxu0 0.0
      %1198 = vmatpush2.msra.mxu0 0.0
      %1199 = vmatprep.subr.mxu0 0.0
      %1200 = vmatpush2.msra.mxu0 0.0
      %1201 = vmatprep.subr.mxu0 0.0
      %1202 = vmatpush2.msra.mxu0 0.0
      %1203 = vmatprep.mubr.f32.mxu0 0.0
      %1204 = vmatmul.mubr.f32.gmra.mxu0 %v529
      %v1205 = vpop.f32.mrf.mxu0
      %v1206 = vadd.f32 %v1138, %v1205
      %v1207 = vpop.f32.mrf.mxu0
      %1208 = vmatprep.mubr.f32.mxu0 0.0
      %1209 = vmatmul.mubr.f32.gmra.mxu0 %v532
      %v1210 = vpop.f32.mrf.mxu0
      %v1211 = vadd.f32 %v1138, %v1210
      %v1212 = vpop.f32.mrf.mxu0
      %1213 = vmatprep.mubr.f32.mxu0 0.0
      %1214 = vmatmul.mubr.f32.gmra.mxu0 %v535
      %v1215 = vpop.f32.mrf.mxu0
      %v1216 = vadd.f32 %v1138, %v1215
      %v1217 = vpop.f32.mrf.mxu0
      %1218 = vmatprep.mubr.f32.mxu0 0.0
      %1219 = vmatmul.mubr.f32.gmra.mxu0 %v538
      %v1220 = vpop.f32.mrf.mxu0
      %v1221 = vadd.f32 %v1138, %v1220
      %v1222 = vpop.f32.mrf.mxu0
      %1223 = vmatprep.mubr.f32.mxu0 0.0
      %1224 = vmatmul.mubr.f32.gmra.mxu0 %v541
      %v1225 = vpop.f32.mrf.mxu0
      %v1226 = vadd.f32 %v1138, %v1225
      %v1227 = vpop.f32.mrf.mxu0
      %1228 = vdwg.mxu0
      %v1229 = vld [vmem:[%s182 + $0x80] sm:$0xff]
      %v1230 = vld [vmem:[%s182 + $0x88] sm:$0xff]
      %v1231 = vld [vmem:[%s182 + $0x90] sm:$0xff]
      %v1232 = vld [vmem:[%s182 + $0x98] sm:$0xff]
      %v1233 = vld [vmem:[%s182 + $0x18b] sm:$0x1]
      %v1234 = vlaneseq
      %v1235 = vshrl.u32 %v1234, 7
      %v1236 = vsub.s32 0, %v1235
      %v1237 = vrot.slane %v1233, %v1236
      %1238 = vmatprep.subr.mxu0 0.0
      %1239 = vmatpush1.msra.mxu0 0.0
      %1240 = vmatprep.subr.mxu0 0.0
      %1241 = vmatpush1.msra.mxu0 0.0
      %1242 = vmatprep.subr.mxu0 0.0
      %1243 = vmatpush1.msra.mxu0 0.0
      %1244 = vmatprep.subr.mxu0 0.0
      %1245 = vmatpush1.msra.mxu0 0.0
      %1246 = vmatprep.subr.mxu0 0.0
      %1247 = vmatpush1.msra.mxu0 0.0
      %1248 = vmatprep.subr.mxu0 0.0
      %1249 = vmatpush1.msra.mxu0 0.0
      %1250 = vmatprep.subr.mxu0 0.0
      %1251 = vmatpush1.msra.mxu0 0.0
      %1252 = vmatprep.subr.mxu0 0.0
      %1253 = vmatpush1.msra.mxu0 0.0
      %1254 = vmatprep.subr.mxu0 0.0
      %1255 = vmatpush1.msra.mxu0 0.0
      %1256 = vmatprep.subr.mxu0 0.0
      %1257 = vmatpush1.msra.mxu0 0.0
      %1258 = vmatprep.subr.mxu0 0.0
      %1259 = vmatpush1.msra.mxu0 0.0
      %1260 = vmatprep.subr.mxu0 0.0
      %1261 = vmatpush1.msra.mxu0 0.0
      %1262 = vmatprep.subr.mxu0 0.0
      %1263 = vmatpush1.msra.mxu0 %v1232
      %1264 = vmatprep.subr.mxu0 0.0
      %1265 = vmatpush1.msra.mxu0 %v1231
      %1266 = vmatprep.subr.mxu0 0.0
      %1267 = vmatpush1.msra.mxu0 %v1230
      %1268 = vmatprep.subr.mxu0 0.0
      %1269 = vmatpush1.msra.mxu0 %v1229
      %1270 = vmatprep.subr.mxu0 0.0
      %1271 = vmatpush2.msra.mxu0 0.0
      %1272 = vmatprep.subr.mxu0 0.0
      %1273 = vmatpush2.msra.mxu0 0.0
      %1274 = vmatprep.subr.mxu0 0.0
      %1275 = vmatpush2.msra.mxu0 0.0
      %1276 = vmatprep.subr.mxu0 0.0
      %1277 = vmatpush2.msra.mxu0 0.0
      %1278 = vmatprep.subr.mxu0 0.0
      %1279 = vmatpush2.msra.mxu0 0.0
      %1280 = vmatprep.subr.mxu0 0.0
      %1281 = vmatpush2.msra.mxu0 0.0
      %1282 = vmatprep.subr.mxu0 0.0
      %1283 = vmatpush2.msra.mxu0 0.0
      %1284 = vmatprep.subr.mxu0 0.0
      %1285 = vmatpush2.msra.mxu0 0.0
      %1286 = vmatprep.subr.mxu0 0.0
      %1287 = vmatpush2.msra.mxu0 0.0
      %1288 = vmatprep.subr.mxu0 0.0
      %1289 = vmatpush2.msra.mxu0 0.0
      %1290 = vmatprep.subr.mxu0 0.0
      %1291 = vmatpush2.msra.mxu0 0.0
      %1292 = vmatprep.subr.mxu0 0.0
      %1293 = vmatpush2.msra.mxu0 0.0
      %1294 = vmatprep.subr.mxu0 0.0
      %1295 = vmatpush2.msra.mxu0 0.0
      %1296 = vmatprep.subr.mxu0 0.0
      %1297 = vmatpush2.msra.mxu0 0.0
      %1298 = vmatprep.subr.mxu0 0.0
      %1299 = vmatpush2.msra.mxu0 0.0
      %1300 = vmatprep.subr.mxu0 0.0
      %1301 = vmatpush2.msra.mxu0 0.0
      %1302 = vmatprep.mubr.f32.mxu0 0.0
      %1303 = vmatmul.mubr.f32.gmra.mxu0 %v529
      %v1304 = vpop.f32.mrf.mxu0
      %v1305 = vadd.f32 %v1237, %v1304
      %v1306 = vpop.f32.mrf.mxu0
      %1307 = vmatprep.mubr.f32.mxu0 0.0
      %1308 = vmatmul.mubr.f32.gmra.mxu0 %v532
      %v1309 = vpop.f32.mrf.mxu0
      %v1310 = vadd.f32 %v1237, %v1309
      %v1311 = vpop.f32.mrf.mxu0
      %1312 = vmatprep.mubr.f32.mxu0 0.0
      %1313 = vmatmul.mubr.f32.gmra.mxu0 %v535
      %v1314 = vpop.f32.mrf.mxu0
      %v1315 = vadd.f32 %v1237, %v1314
      %v1316 = vpop.f32.mrf.mxu0
      %1317 = vmatprep.mubr.f32.mxu0 0.0
      %1318 = vmatmul.mubr.f32.gmra.mxu0 %v538
      %v1319 = vpop.f32.mrf.mxu0
      %v1320 = vadd.f32 %v1237, %v1319
      %v1321 = vpop.f32.mrf.mxu0
      %1322 = vmatprep.mubr.f32.mxu0 0.0
      %1323 = vmatmul.mubr.f32.gmra.mxu0 %v541
      %v1324 = vpop.f32.mrf.mxu0
      %v1325 = vadd.f32 %v1237, %v1324
      %v1326 = vpop.f32.mrf.mxu0
      %1327 = vdwg.mxu0
      %v1328 = vld [vmem:[%s182 + $0xa0] sm:$0xff]
      %v1329 = vld [vmem:[%s182 + $0xa8] sm:$0xff]
      %v1330 = vld [vmem:[%s182 + $0xb0] sm:$0xff]
      %v1331 = vld [vmem:[%s182 + $0xb8] sm:$0xff]
      %v1332 = vld [vmem:[%s182 + $0x18c] sm:$0x1]
      %v1333 = vlaneseq
      %v1334 = vshrl.u32 %v1333, 7
      %v1335 = vsub.s32 0, %v1334
      %v1336 = vrot.slane %v1332, %v1335
      %1337 = vmatprep.subr.mxu0 0.0
      %1338 = vmatpush1.msra.mxu0 0.0
      %1339 = vmatprep.subr.mxu0 0.0
      %1340 = vmatpush1.msra.mxu0 0.0
      %1341 = vmatprep.subr.mxu0 0.0
      %1342 = vmatpush1.msra.mxu0 0.0
      %1343 = vmatprep.subr.mxu0 0.0
      %1344 = vmatpush1.msra.mxu0 0.0
      %1345 = vmatprep.subr.mxu0 0.0
      %1346 = vmatpush1.msra.mxu0 0.0
      %1347 = vmatprep.subr.mxu0 0.0
      %1348 = vmatpush1.msra.mxu0 0.0
      %1349 = vmatprep.subr.mxu0 0.0
      %1350 = vmatpush1.msra.mxu0 0.0
      %1351 = vmatprep.subr.mxu0 0.0
      %1352 = vmatpush1.msra.mxu0 0.0
      %1353 = vmatprep.subr.mxu0 0.0
      %1354 = vmatpush1.msra.mxu0 0.0
      %1355 = vmatprep.subr.mxu0 0.0
      %1356 = vmatpush1.msra.mxu0 0.0
      %1357 = vmatprep.subr.mxu0 0.0
      %1358 = vmatpush1.msra.mxu0 0.0
      %1359 = vmatprep.subr.mxu0 0.0
      %1360 = vmatpush1.msra.mxu0 0.0
      %1361 = vmatprep.subr.mxu0 0.0
      %1362 = vmatpush1.msra.mxu0 %v1331
      %1363 = vmatprep.subr.mxu0 0.0
      %1364 = vmatpush1.msra.mxu0 %v1330
      %1365 = vmatprep.subr.mxu0 0.0
      %1366 = vmatpush1.msra.mxu0 %v1329
      %1367 = vmatprep.subr.mxu0 0.0
      %1368 = vmatpush1.msra.mxu0 %v1328
      %1369 = vmatprep.subr.mxu0 0.0
      %1370 = vmatpush2.msra.mxu0 0.0
      %1371 = vmatprep.subr.mxu0 0.0
      %1372 = vmatpush2.msra.mxu0 0.0
      %1373 = vmatprep.subr.mxu0 0.0
      %1374 = vmatpush2.msra.mxu0 0.0
      %1375 = vmatprep.subr.mxu0 0.0
      %1376 = vmatpush2.msra.mxu0 0.0
      %1377 = vmatprep.subr.mxu0 0.0
      %1378 = vmatpush2.msra.mxu0 0.0
      %1379 = vmatprep.subr.mxu0 0.0
      %1380 = vmatpush2.msra.mxu0 0.0
      %1381 = vmatprep.subr.mxu0 0.0
      %1382 = vmatpush2.msra.mxu0 0.0
      %1383 = vmatprep.subr.mxu0 0.0
      %1384 = vmatpush2.msra.mxu0 0.0
      %1385 = vmatprep.subr.mxu0 0.0
      %1386 = vmatpush2.msra.mxu0 0.0
      %1387 = vmatprep.subr.mxu0 0.0
      %1388 = vmatpush2.msra.mxu0 0.0
      %1389 = vmatprep.subr.mxu0 0.0
      %1390 = vmatpush2.msra.mxu0 0.0
      %1391 = vmatprep.subr.mxu0 0.0
      %1392 = vmatpush2.msra.mxu0 0.0
      %1393 = vmatprep.subr.mxu0 0.0
      %1394 = vmatpush2.msra.mxu0 0.0
      %1395 = vmatprep.subr.mxu0 0.0
      %1396 = vmatpush2.msra.mxu0 0.0
      %1397 = vmatprep.subr.mxu0 0.0
      %1398 = vmatpush2.msra.mxu0 0.0
      %1399 = vmatprep.subr.mxu0 0.0
      %1400 = vmatpush2.msra.mxu0 0.0
      %1401 = vmatprep.mubr.f32.mxu0 0.0
      %1402 = vmatmul.mubr.f32.gmra.mxu0 %v529
      %v1403 = vpop.f32.mrf.mxu0
      %v1404 = vadd.f32 %v1336, %v1403
      %v1405 = vpop.f32.mrf.mxu0
      %1406 = vmatprep.mubr.f32.mxu0 0.0
      %1407 = vmatmul.mubr.f32.gmra.mxu0 %v532
      %v1408 = vpop.f32.mrf.mxu0
      %v1409 = vadd.f32 %v1336, %v1408
      %v1410 = vpop.f32.mrf.mxu0
      %1411 = vmatprep.mubr.f32.mxu0 0.0
      %1412 = vmatmul.mubr.f32.gmra.mxu0 %v535
      %v1413 = vpop.f32.mrf.mxu0
      %v1414 = vadd.f32 %v1336, %v1413
      %v1415 = vpop.f32.mrf.mxu0
      %1416 = vmatprep.mubr.f32.mxu0 0.0
      %1417 = vmatmul.mubr.f32.gmra.mxu0 %v538
      %v1418 = vpop.f32.mrf.mxu0
      %v1419 = vadd.f32 %v1336, %v1418
      %v1420 = vpop.f32.mrf.mxu0
      %1421 = vmatprep.mubr.f32.mxu0 0.0
      %1422 = vmatmul.mubr.f32.gmra.mxu0 %v541
      %v1423 = vpop.f32.mrf.mxu0
      %v1424 = vadd.f32 %v1336, %v1423
      %v1425 = vpop.f32.mrf.mxu0
      %1426 = vdwg.mxu0
      %v1428 = vsel %vm831, %v1206, 0
      %v1431 = vsel %vm831, %v1211, 0
      %v1434 = vsel %vm831, %v1216, 0
      %v1437 = vsel %vm831, %v1221, 0
      %v1440 = vsel %vm831, %v1226, 0
      %v1443 = vsel %vm831, %v1305, 0
      %v1446 = vsel %vm831, %v1310, 0
      %v1449 = vsel %vm831, %v1315, 0
      %v1452 = vsel %vm831, %v1320, 0
      %v1455 = vsel %vm831, %v1325, 0
      %1457 = vmatprep.subr.mxu0 0.0
      %1458 = vmatpush1.xpose.msra.mxu0 0.0
      %1459 = vmatprep.subr.mxu0 0.0
      %1460 = vmatpush1.xpose.msra.mxu0 0.0
      %1461 = vmatprep.subr.mxu0 0.0
      %1462 = vmatpush1.xpose.msra.mxu0 0.0
      %1463 = vmatprep.subr.mxu0 0.0
      %1464 = vmatpush1.xpose.msra.mxu0 0.0
      %1465 = vmatprep.subr.mxu0 0.0
      %1466 = vmatpush1.xpose.msra.mxu0 0.0
      %1467 = vmatprep.subr.mxu0 0.0
      %1468 = vmatpush1.xpose.msra.mxu0 0.0
      %1469 = vmatprep.subr.mxu0 0.0
      %1470 = vmatpush1.xpose.msra.mxu0 0.0
      %1471 = vmatprep.subr.mxu0 0.0
      %1472 = vmatpush1.xpose.msra.mxu0 0.0
      %1473 = vmatprep.subr.mxu0 0.0
      %1474 = vmatpush1.xpose.msra.mxu0 0.0
      %1475 = vmatprep.subr.mxu0 0.0
      %1476 = vmatpush1.xpose.msra.mxu0 0.0
      %1477 = vmatprep.subr.mxu0 0.0
      %1478 = vmatpush1.xpose.msra.mxu0 0.0
      %1479 = vmatprep.subr.mxu0 0.0
      %1480 = vmatpush1.xpose.msra.mxu0 %v1455
      %1481 = vmatprep.subr.mxu0 0.0
      %1482 = vmatpush1.xpose.msra.mxu0 %v1452
      %1483 = vmatprep.subr.mxu0 0.0
      %1484 = vmatpush1.xpose.msra.mxu0 %v1449
      %1485 = vmatprep.subr.mxu0 0.0
      %1486 = vmatpush1.xpose.msra.mxu0 %v1446
      %1487 = vmatprep.subr.mxu0 0.0
      %1488 = vmatpush1.xpose.msra.mxu0 %v1443
      %1489 = vmatprep.subr.mxu0 0.0
      %1490 = vmatpush2.xpose.msra.mxu0 0.0
      %1491 = vmatprep.subr.mxu0 0.0
      %1492 = vmatpush2.xpose.msra.mxu0 0.0
      %1493 = vmatprep.subr.mxu0 0.0
      %1494 = vmatpush2.xpose.msra.mxu0 0.0
      %1495 = vmatprep.subr.mxu0 0.0
      %1496 = vmatpush2.xpose.msra.mxu0 0.0
      %1497 = vmatprep.subr.mxu0 0.0
      %1498 = vmatpush2.xpose.msra.mxu0 0.0
      %1499 = vmatprep.subr.mxu0 0.0
      %1500 = vmatpush2.xpose.msra.mxu0 0.0
      %1501 = vmatprep.subr.mxu0 0.0
      %1502 = vmatpush2.xpose.msra.mxu0 0.0
      %1503 = vmatprep.subr.mxu0 0.0
      %1504 = vmatpush2.xpose.msra.mxu0 0.0
      %1505 = vmatprep.subr.mxu0 0.0
      %1506 = vmatpush2.xpose.msra.mxu0 0.0
      %1507 = vmatprep.subr.mxu0 0.0
      %1508 = vmatpush2.xpose.msra.mxu0 0.0
      %1509 = vmatprep.subr.mxu0 0.0
      %1510 = vmatpush2.xpose.msra.mxu0 0.0
      %1511 = vmatprep.subr.mxu0 0.0
      %1512 = vmatpush2.xpose.msra.mxu0 0.0
      %1513 = vmatprep.subr.mxu0 0.0
      %1514 = vmatpush2.xpose.msra.mxu0 0.0
      %1515 = vmatprep.subr.mxu0 0.0
      %1516 = vmatpush2.xpose.msra.mxu0 0.0
      %1517 = vmatprep.subr.mxu0 0.0
      %1518 = vmatpush2.xpose.msra.mxu0 0.0
      %1519 = vmatprep.subr.mxu0 0.0
      %1520 = vmatpush2.xpose.msra.mxu0 0.0
      %1521 = vmatprep.mubr.f32.mxu0 0.0
      %1522 = vmatmul.mubr.f32.gmra.mxu0 %v1428
      %v1523 = vpop.f32.mrf.mxu0
      %v1524 = vadd.f32 0.0, %v1523
      %v1525 = vpop.f32.mrf.mxu0
      %1526 = vmatprep.mubr.f32.mxu0 0.0
      %1527 = vmatmul.mubr.f32.gmra.mxu0 %v1431
      %v1528 = vpop.f32.mrf.mxu0
      %v1529 = vadd.f32 0.0, %v1528
      %v1530 = vpop.f32.mrf.mxu0
      %1531 = vmatprep.mubr.f32.mxu0 0.0
      %1532 = vmatmul.mubr.f32.gmra.mxu0 %v1434
      %v1533 = vpop.f32.mrf.mxu0
      %v1534 = vadd.f32 0.0, %v1533
      %v1535 = vpop.f32.mrf.mxu0
      %1536 = vmatprep.mubr.f32.mxu0 0.0
      %1537 = vmatmul.mubr.f32.gmra.mxu0 %v1437
      %v1538 = vpop.f32.mrf.mxu0
      %v1539 = vadd.f32 0.0, %v1538
      %v1540 = vpop.f32.mrf.mxu0
      %1541 = vmatprep.mubr.f32.mxu0 0.0
      %1542 = vmatmul.mubr.f32.gmra.mxu0 %v1440
      %v1543 = vpop.f32.mrf.mxu0
      %v1544 = vadd.f32 0.0, %v1543
      %v1545 = vpop.f32.mrf.mxu0
      %1546 = vdwg.mxu0
      %v1547 = vmul.f32 %v1524, 0.25
      %v1548 = vmul.f32 %v1529, 0.25
      %v1549 = vmul.f32 %v1534, 0.25
      %v1550 = vmul.f32 %v1539, 0.25
      %v1551 = vmul.f32 %v1544, 0.25
      %v1552 = vadd.f32 %v1547, %v426
      %v1553 = vadd.f32 %v1548, %v427
      %v1554 = vadd.f32 %v1549, %v428
      %v1555 = vadd.f32 %v1550, %v429
      %v1556 = vadd.f32 %v1551, %v430
      %v1557 = vsel %vm962, %v1552, -inf
      %1558 = vmax.xlane.f32.xlu0 %v1557
      %v1559 = vpop.xlane.xlu0 %1558
      %v1560 = vsel %vm962, %v1553, -inf
      %1561 = vmax.xlane.f32.xlu0 %v1560
      %v1562 = vpop.xlane.xlu0 %1561
      %v1563 = vsel %vm962, %v1554, -inf
      %1564 = vmax.xlane.f32.xlu0 %v1563
      %v1565 = vpop.xlane.xlu0 %1564
      %v1566 = vsel %vm962, %v1555, -inf
      %1567 = vmax.xlane.f32.xlu0 %v1566
      %v1568 = vpop.xlane.xlu0 %1567
      %v1569 = vsel %vm975, %v1556, -inf
      %1570 = vmax.xlane.f32.xlu0 %v1569
      %v1571 = vpop.xlane.xlu0 %1570
      %v1572 = vsub.f32 %v1552, %v1559
      %v1573 = vsub.f32 %v1553, %v1562
      %v1574 = vsub.f32 %v1554, %v1565
      %v1575 = vsub.f32 %v1555, %v1568
      %v1576 = vsub.f32 %v1556, %v1571
      %v1577 = vmul.f32 %v1572, 1.442695
      %v1578 = vpow.pop %v1577
      %v1579 = vmul.f32 %v1573, 1.442695
      %v1580 = vpow.pop %v1579
      %v1581 = vmul.f32 %v1574, 1.442695
      %v1582 = vpow.pop %v1581
      %v1583 = vmul.f32 %v1575, 1.442695
      %v1584 = vpow.pop %v1583
      %v1585 = vmul.f32 %v1576, 1.442695
      %v1586 = vpow.pop %v1585
      %v1587 = vsel %vm962, %v1578, 0.0
      %1588 = vadd.xlane.f32.xlu0 %v1587
      %v1589 = vpop.xlane.xlu0 %1588
      %v1590 = vsel %vm962, %v1580, 0.0
      %1591 = vadd.xlane.f32.xlu0 %v1590
      %v1592 = vpop.xlane.xlu0 %1591
      %v1593 = vsel %vm962, %v1582, 0.0
      %1594 = vadd.xlane.f32.xlu0 %v1593
      %v1595 = vpop.xlane.xlu0 %1594
      %v1596 = vsel %vm962, %v1584, 0.0
      %1597 = vadd.xlane.f32.xlu0 %v1596
      %v1598 = vpop.xlane.xlu0 %1597
      %v1599 = vsel %vm975, %v1586, 0.0
      %1600 = vadd.xlane.f32.xlu0 %v1599
      %v1601 = vpop.xlane.xlu0 %1600
      %v1602 = vrcp.pop %v1589
      %v1603 = vmul.f32 %v1578, %v1602
      %v1604 = vrcp.pop %v1592
      %v1605 = vmul.f32 %v1580, %v1604
      %v1606 = vrcp.pop %v1595
      %v1607 = vmul.f32 %v1582, %v1606
      %v1608 = vrcp.pop %v1598
      %v1609 = vmul.f32 %v1584, %v1608
      %v1610 = vrcp.pop %v1601
      %v1611 = vmul.f32 %v1586, %v1610
      %v1613 = vsel %vm962, %v1603, 0
      %v1616 = vsel %vm962, %v1605, 0
      %v1619 = vsel %vm962, %v1607, 0
      %v1622 = vsel %vm962, %v1609, 0
      %v1625 = vsel %vm962, %v1611, 0
      %v1628 = vsel %vm1034, %v1424, 0
      %1630 = vmatprep.subr.mxu0 0.0
      %1631 = vmatpush1.msra.mxu0 0.0
      %1632 = vmatprep.subr.mxu0 0.0
      %1633 = vmatpush1.msra.mxu0 0.0
      %1634 = vmatprep.subr.mxu0 0.0
      %1635 = vmatpush1.msra.mxu0 0.0
      %1636 = vmatprep.subr.mxu0 0.0
      %1637 = vmatpush1.msra.mxu0 0.0
      %1638 = vmatprep.subr.mxu0 0.0
      %1639 = vmatpush1.msra.mxu0 0.0
      %1640 = vmatprep.subr.mxu0 0.0
      %1641 = vmatpush1.msra.mxu0 0.0
      %1642 = vmatprep.subr.mxu0 0.0
      %1643 = vmatpush1.msra.mxu0 0.0
      %1644 = vmatprep.subr.mxu0 0.0
      %1645 = vmatpush1.msra.mxu0 0.0
      %1646 = vmatprep.subr.mxu0 0.0
      %1647 = vmatpush1.msra.mxu0 0.0
      %1648 = vmatprep.subr.mxu0 0.0
      %1649 = vmatpush1.msra.mxu0 0.0
      %1650 = vmatprep.subr.mxu0 0.0
      %1651 = vmatpush1.msra.mxu0 0.0
      %1652 = vmatprep.subr.mxu0 0.0
      %1653 = vmatpush1.msra.mxu0 %v1628
      %1654 = vmatprep.subr.mxu0 0.0
      %1655 = vmatpush1.msra.mxu0 %v1419
      %1656 = vmatprep.subr.mxu0 0.0
      %1657 = vmatpush1.msra.mxu0 %v1414
      %1658 = vmatprep.subr.mxu0 0.0
      %1659 = vmatpush1.msra.mxu0 %v1409
      %1660 = vmatprep.subr.mxu0 0.0
      %1661 = vmatpush1.msra.mxu0 %v1404
      %1662 = vmatprep.subr.mxu0 0.0
      %1663 = vmatpush2.msra.mxu0 0.0
      %1664 = vmatprep.subr.mxu0 0.0
      %1665 = vmatpush2.msra.mxu0 0.0
      %1666 = vmatprep.subr.mxu0 0.0
      %1667 = vmatpush2.msra.mxu0 0.0
      %1668 = vmatprep.subr.mxu0 0.0
      %1669 = vmatpush2.msra.mxu0 0.0
      %1670 = vmatprep.subr.mxu0 0.0
      %1671 = vmatpush2.msra.mxu0 0.0
      %1672 = vmatprep.subr.mxu0 0.0
      %1673 = vmatpush2.msra.mxu0 0.0
      %1674 = vmatprep.subr.mxu0 0.0
      %1675 = vmatpush2.msra.mxu0 0.0
      %1676 = vmatprep.subr.mxu0 0.0
      %1677 = vmatpush2.msra.mxu0 0.0
      %1678 = vmatprep.subr.mxu0 0.0
      %1679 = vmatpush2.msra.mxu0 0.0
      %1680 = vmatprep.subr.mxu0 0.0
      %1681 = vmatpush2.msra.mxu0 0.0
      %1682 = vmatprep.subr.mxu0 0.0
      %1683 = vmatpush2.msra.mxu0 0.0
      %1684 = vmatprep.subr.mxu0 0.0
      %1685 = vmatpush2.msra.mxu0 0.0
      %1686 = vmatprep.subr.mxu0 0.0
      %1687 = vmatpush2.msra.mxu0 0.0
      %1688 = vmatprep.subr.mxu0 0.0
      %1689 = vmatpush2.msra.mxu0 0.0
      %1690 = vmatprep.subr.mxu0 0.0
      %1691 = vmatpush2.msra.mxu0 0.0
      %1692 = vmatprep.subr.mxu0 0.0
      %1693 = vmatpush2.msra.mxu0 0.0
      %1694 = vmatprep.mubr.f32.mxu0 0.0
      %1695 = vmatmul.mubr.f32.gmra.mxu0 %v1613
      %v1696 = vpop.f32.mrf.mxu0
      %v1697 = vadd.f32 0.0, %v1696
      %v1698 = vpop.f32.mrf.mxu0
      %1699 = vmatprep.mubr.f32.mxu0 0.0
      %1700 = vmatmul.mubr.f32.gmra.mxu0 %v1616
      %v1701 = vpop.f32.mrf.mxu0
      %v1702 = vadd.f32 0.0, %v1701
      %v1703 = vpop.f32.mrf.mxu0
      %1704 = vmatprep.mubr.f32.mxu0 0.0
      %1705 = vmatmul.mubr.f32.gmra.mxu0 %v1619
      %v1706 = vpop.f32.mrf.mxu0
      %v1707 = vadd.f32 0.0, %v1706
      %v1708 = vpop.f32.mrf.mxu0
      %1709 = vmatprep.mubr.f32.mxu0 0.0
      %1710 = vmatmul.mubr.f32.gmra.mxu0 %v1622
      %v1711 = vpop.f32.mrf.mxu0
      %v1712 = vadd.f32 0.0, %v1711
      %v1713 = vpop.f32.mrf.mxu0
      %1714 = vmatprep.mubr.f32.mxu0 0.0
      %1715 = vmatmul.mubr.f32.gmra.mxu0 %v1625
      %v1716 = vpop.f32.mrf.mxu0
      %v1717 = vadd.f32 0.0, %v1716
      %v1718 = vpop.f32.mrf.mxu0
      %1719 = vdwg.mxu0
      %v1720 = vld [vmem:[%s182 + $0xd0] sm:$0xff]
      %v1721 = vld [vmem:[%s182 + $0xd8] sm:$0xff]
      %v1723 = vsel %vm831, %v1697, 0
      %v1726 = vsel %vm831, %v1702, 0
      %v1729 = vsel %vm831, %v1707, 0
      %v1732 = vsel %vm831, %v1712, 0
      %v1735 = vsel %vm831, %v1717, 0
      %1737 = vmatprep.subr.mxu0 0.0
      %1738 = vmatpush1.msra.mxu0 0.0
      %1739 = vmatprep.subr.mxu0 0.0
      %1740 = vmatpush1.msra.mxu0 0.0
      %1741 = vmatprep.subr.mxu0 0.0
      %1742 = vmatpush1.msra.mxu0 0.0
      %1743 = vmatprep.subr.mxu0 0.0
      %1744 = vmatpush1.msra.mxu0 0.0
      %1745 = vmatprep.subr.mxu0 0.0
      %1746 = vmatpush1.msra.mxu0 0.0
      %1747 = vmatprep.subr.mxu0 0.0
      %1748 = vmatpush1.msra.mxu0 0.0
      %1749 = vmatprep.subr.mxu0 0.0
      %1750 = vmatpush1.msra.mxu0 0.0
      %1751 = vmatprep.subr.mxu0 0.0
      %1752 = vmatpush1.msra.mxu0 0.0
      %1753 = vmatprep.subr.mxu0 0.0
      %1754 = vmatpush1.msra.mxu0 0.0
      %1755 = vmatprep.subr.mxu0 0.0
      %1756 = vmatpush1.msra.mxu0 0.0
      %1757 = vmatprep.subr.mxu0 0.0
      %1758 = vmatpush1.msra.mxu0 0.0
      %1759 = vmatprep.subr.mxu0 0.0
      %1760 = vmatpush1.msra.mxu0 0.0
      %1761 = vmatprep.subr.mxu0 0.0
      %1762 = vmatpush1.msra.mxu0 0.0
      %1763 = vmatprep.subr.mxu0 0.0
      %1764 = vmatpush1.msra.mxu0 0.0
      %1765 = vmatprep.subr.mxu0 0.0
      %1766 = vmatpush1.msra.mxu0 %v1721
      %1767 = vmatprep.subr.mxu0 0.0
      %1768 = vmatpush1.msra.mxu0 %v1720
      %1769 = vmatprep.subr.mxu0 0.0
      %1770 = vmatpush2.msra.mxu0 0.0
      %1771 = vmatprep.subr.mxu0 0.0
      %1772 = vmatpush2.msra.mxu0 0.0
      %1773 = vmatprep.subr.mxu0 0.0
      %1774 = vmatpush2.msra.mxu0 0.0
      %1775 = vmatprep.subr.mxu0 0.0
      %1776 = vmatpush2.msra.mxu0 0.0
      %1777 = vmatprep.subr.mxu0 0.0
      %1778 = vmatpush2.msra.mxu0 0.0
      %1779 = vmatprep.subr.mxu0 0.0
      %1780 = vmatpush2.msra.mxu0 0.0
      %1781 = vmatprep.subr.mxu0 0.0
      %1782 = vmatpush2.msra.mxu0 0.0
      %1783 = vmatprep.subr.mxu0 0.0
      %1784 = vmatpush2.msra.mxu0 0.0
      %1785 = vmatprep.subr.mxu0 0.0
      %1786 = vmatpush2.msra.mxu0 0.0
      %1787 = vmatprep.subr.mxu0 0.0
      %1788 = vmatpush2.msra.mxu0 0.0
      %1789 = vmatprep.subr.mxu0 0.0
      %1790 = vmatpush2.msra.mxu0 0.0
      %1791 = vmatprep.subr.mxu0 0.0
      %1792 = vmatpush2.msra.mxu0 0.0
      %1793 = vmatprep.subr.mxu0 0.0
      %1794 = vmatpush2.msra.mxu0 0.0
      %1795 = vmatprep.subr.mxu0 0.0
      %1796 = vmatpush2.msra.mxu0 0.0
      %1797 = vmatprep.subr.mxu0 0.0
      %1798 = vmatpush2.msra.mxu0 0.0
      %1799 = vmatprep.subr.mxu0 0.0
      %1800 = vmatpush2.msra.mxu0 0.0
      %1801 = vmatprep.mubr.f32.mxu0 0.0
      %1802 = vmatmul.mubr.f32.gmra.mxu0 %v1723
      %v1803 = vpop.f32.mrf.mxu0
      %v1804 = vadd.f32 0.0, %v1803
      %v1805 = vpop.f32.mrf.mxu0
      %1806 = vmatprep.mubr.f32.mxu0 0.0
      %1807 = vmatmul.mubr.f32.gmra.mxu0 %v1726
      %v1808 = vpop.f32.mrf.mxu0
      %v1809 = vadd.f32 0.0, %v1808
      %v1810 = vpop.f32.mrf.mxu0
      %1811 = vmatprep.mubr.f32.mxu0 0.0
      %1812 = vmatmul.mubr.f32.gmra.mxu0 %v1729
      %v1813 = vpop.f32.mrf.mxu0
      %v1814 = vadd.f32 0.0, %v1813
      %v1815 = vpop.f32.mrf.mxu0
      %1816 = vmatprep.mubr.f32.mxu0 0.0
      %1817 = vmatmul.mubr.f32.gmra.mxu0 %v1732
      %v1818 = vpop.f32.mrf.mxu0
      %v1819 = vadd.f32 0.0, %v1818
      %v1820 = vpop.f32.mrf.mxu0
      %1821 = vmatprep.mubr.f32.mxu0 0.0
      %1822 = vmatmul.mubr.f32.gmra.mxu0 %v1735
      %v1823 = vpop.f32.mrf.mxu0
      %v1824 = vadd.f32 0.0, %v1823
      %v1825 = vpop.f32.mrf.mxu0
      %1826 = vdwg.mxu0
      %v1828 = vsel %vm831, %v1105, 0
      %v1831 = vsel %vm831, %v1110, 0
      %v1834 = vsel %vm831, %v1115, 0
      %v1837 = vsel %vm831, %v1120, 0
      %v1840 = vsel %vm831, %v1125, 0
      %1842 = vmatprep.subr.mxu0 0.0
      %1843 = vmatpush1.msra.mxu0 0.0
      %1844 = vmatprep.subr.mxu0 0.0
      %1845 = vmatpush1.msra.mxu0 0.0
      %1846 = vmatprep.subr.mxu0 0.0
      %1847 = vmatpush1.msra.mxu0 0.0
      %1848 = vmatprep.subr.mxu0 0.0
      %1849 = vmatpush1.msra.mxu0 0.0
      %1850 = vmatprep.subr.mxu0 0.0
      %1851 = vmatpush1.msra.mxu0 0.0
      %1852 = vmatprep.subr.mxu0 0.0
      %1853 = vmatpush1.msra.mxu0 0.0
      %1854 = vmatprep.subr.mxu0 0.0
      %1855 = vmatpush1.msra.mxu0 0.0
      %1856 = vmatprep.subr.mxu0 0.0
      %1857 = vmatpush1.msra.mxu0 0.0
      %1858 = vmatprep.subr.mxu0 0.0
      %1859 = vmatpush1.msra.mxu0 0.0
      %1860 = vmatprep.subr.mxu0 0.0
      %1861 = vmatpush1.msra.mxu0 0.0
      %1862 = vmatprep.subr.mxu0 0.0
      %1863 = vmatpush1.msra.mxu0 0.0
      %1864 = vmatprep.subr.mxu0 0.0
      %1865 = vmatpush1.msra.mxu0 0.0
      %1866 = vmatprep.subr.mxu0 0.0
      %1867 = vmatpush1.msra.mxu0 0.0
      %1868 = vmatprep.subr.mxu0 0.0
      %1869 = vmatpush1.msra.mxu0 0.0
      %1870 = vmatprep.subr.mxu0 0.0
      %1871 = vmatpush1.msra.mxu0 %v1129
      %1872 = vmatprep.subr.mxu0 0.0
      %1873 = vmatpush1.msra.mxu0 %v1128
      %1874 = vmatprep.subr.mxu0 0.0
      %1875 = vmatpush2.msra.mxu0 0.0
      %1876 = vmatprep.subr.mxu0 0.0
      %1877 = vmatpush2.msra.mxu0 0.0
      %1878 = vmatprep.subr.mxu0 0.0
      %1879 = vmatpush2.msra.mxu0 0.0
      %1880 = vmatprep.subr.mxu0 0.0
      %1881 = vmatpush2.msra.mxu0 0.0
      %1882 = vmatprep.subr.mxu0 0.0
      %1883 = vmatpush2.msra.mxu0 0.0
      %1884 = vmatprep.subr.mxu0 0.0
      %1885 = vmatpush2.msra.mxu0 0.0
      %1886 = vmatprep.subr.mxu0 0.0
      %1887 = vmatpush2.msra.mxu0 0.0
      %1888 = vmatprep.subr.mxu0 0.0
      %1889 = vmatpush2.msra.mxu0 0.0
      %1890 = vmatprep.subr.mxu0 0.0
      %1891 = vmatpush2.msra.mxu0 0.0
      %1892 = vmatprep.subr.mxu0 0.0
      %1893 = vmatpush2.msra.mxu0 0.0
      %1894 = vmatprep.subr.mxu0 0.0
      %1895 = vmatpush2.msra.mxu0 0.0
      %1896 = vmatprep.subr.mxu0 0.0
      %1897 = vmatpush2.msra.mxu0 0.0
      %1898 = vmatprep.subr.mxu0 0.0
      %1899 = vmatpush2.msra.mxu0 0.0
      %1900 = vmatprep.subr.mxu0 0.0
      %1901 = vmatpush2.msra.mxu0 0.0
      %1902 = vmatprep.subr.mxu0 0.0
      %1903 = vmatpush2.msra.mxu0 0.0
      %1904 = vmatprep.subr.mxu0 0.0
      %1905 = vmatpush2.msra.mxu0 0.0
      %1906 = vmatprep.mubr.f32.mxu0 0.0
      %1907 = vmatmul.mubr.f32.gmra.mxu0 %v1828
      %v1908 = vpop.f32.mrf.mxu0
      %v1909 = vadd.f32 %v1804, %v1908
      %v1910 = vpop.f32.mrf.mxu0
      %1911 = vmatprep.mubr.f32.mxu0 0.0
      %1912 = vmatmul.mubr.f32.gmra.mxu0 %v1831
      %v1913 = vpop.f32.mrf.mxu0
      %v1914 = vadd.f32 %v1809, %v1913
      %v1915 = vpop.f32.mrf.mxu0
      %1916 = vmatprep.mubr.f32.mxu0 0.0
      %1917 = vmatmul.mubr.f32.gmra.mxu0 %v1834
      %v1918 = vpop.f32.mrf.mxu0
      %v1919 = vadd.f32 %v1814, %v1918
      %v1920 = vpop.f32.mrf.mxu0
      %1921 = vmatprep.mubr.f32.mxu0 0.0
      %1922 = vmatmul.mubr.f32.gmra.mxu0 %v1837
      %v1923 = vpop.f32.mrf.mxu0
      %v1924 = vadd.f32 %v1819, %v1923
      %v1925 = vpop.f32.mrf.mxu0
      %1926 = vmatprep.mubr.f32.mxu0 0.0
      %1927 = vmatmul.mubr.f32.gmra.mxu0 %v1840
      %v1928 = vpop.f32.mrf.mxu0
      %v1929 = vadd.f32 %v1824, %v1928
      %v1930 = vpop.f32.mrf.mxu0
      %1931 = vdwg.mxu0
      %v1932 = vadd.f32 %v421, %v1909
      %v1933 = vadd.f32 %v422, %v1914
      %v1934 = vadd.f32 %v423, %v1919
      %v1935 = vadd.f32 %v424, %v1924
      %v1936 = vadd.f32 %v425, %v1929
      %v1937 = vld [vmem:[%s182 + $0x184] sm:$0x1]
      %v1938 = vlaneseq
      %v1939 = vshrl.u32 %v1938, 7
      %v1940 = vsub.s32 0, %v1939
      %v1941 = vrot.slane %v1937, %v1940
      %v1942 = vadd.f32 %v1932, %v1941
      %v1943 = vadd.f32 %v1933, %v1941
      %v1944 = vadd.f32 %v1934, %v1941
      %v1945 = vadd.f32 %v1935, %v1941
      %v1946 = vadd.f32 %v1936, %v1941
      %v1947 = vld [vmem:[%s182 + $0x182] sm:$0x1]
      %v1948 = vld [vmem:[%s182 + $0x183] sm:$0x1]
      %v1949 = vsel %vm433, %v1942, 0.0
      %1950 = vadd.xlane.f32.xlu0 %v1949
      %v1951 = vpop.xlane.xlu0 %1950
      %v1952 = vsel %vm433, %v1943, 0.0
      %1953 = vadd.xlane.f32.xlu0 %v1952
      %v1954 = vpop.xlane.xlu0 %1953
      %v1955 = vsel %vm433, %v1944, 0.0
      %1956 = vadd.xlane.f32.xlu0 %v1955
      %v1957 = vpop.xlane.xlu0 %1956
      %v1958 = vsel %vm433, %v1945, 0.0
      %1959 = vadd.xlane.f32.xlu0 %v1958
      %v1960 = vpop.xlane.xlu0 %1959
      %v1961 = vsel %vm446, %v1946, 0.0
      %1962 = vadd.xlane.f32.xlu0 %v1961
      %v1963 = vpop.xlane.xlu0 %1962
      %v1964 = vmul.f32 %v1951, %v450
      %v1965 = vmul.f32 %v1954, %v450
      %v1966 = vmul.f32 %v1957, %v450
      %v1967 = vmul.f32 %v1960, %v450
      %v1968 = vmul.f32 %v1963, %v450
      %v1969 = vsub.f32 %v1942, %v1964
      %v1970 = vsub.f32 %v1943, %v1965
      %v1971 = vsub.f32 %v1944, %v1966
      %v1972 = vsub.f32 %v1945, %v1967
      %v1973 = vsub.f32 %v1946, %v1968
      %v1974 = vmul.f32 %v1969, %v1969
      %v1975 = vmul.f32 %v1970, %v1970
      %v1976 = vmul.f32 %v1971, %v1971
      %v1977 = vmul.f32 %v1972, %v1972
      %v1978 = vmul.f32 %v1973, %v1973
      %v1979 = vsel %vm433, %v1974, 0.0
      %1980 = vadd.xlane.f32.xlu0 %v1979
      %v1981 = vpop.xlane.xlu0 %1980
      %v1982 = vsel %vm433, %v1975, 0.0
      %1983 = vadd.xlane.f32.xlu0 %v1982
      %v1984 = vpop.xlane.xlu0 %1983
      %v1985 = vsel %vm433, %v1976, 0.0
      %1986 = vadd.xlane.f32.xlu0 %v1985
      %v1987 = vpop.xlane.xlu0 %1986
      %v1988 = vsel %vm433, %v1977, 0.0
      %1989 = vadd.xlane.f32.xlu0 %v1988
      %v1990 = vpop.xlane.xlu0 %1989
      %v1991 = vsel %vm446, %v1978, 0.0
      %1992 = vadd.xlane.f32.xlu0 %v1991
      %v1993 = vpop.xlane.xlu0 %1992
      %v1994 = vmul.f32 %v1981, %v450
      %v1995 = vmul.f32 %v1984, %v450
      %v1996 = vmul.f32 %v1987, %v450
      %v1997 = vmul.f32 %v1990, %v450
      %v1998 = vmul.f32 %v1993, %v450
      %v1999 = vadd.f32 %v1994, 1e-05
      %v2000 = vadd.f32 %v1995, 1e-05
      %v2001 = vadd.f32 %v1996, 1e-05
      %v2002 = vadd.f32 %v1997, 1e-05
      %v2003 = vadd.f32 %v1998, 1e-05
      %v2004 = vrsqrt.pop %v1999
      %v2005 = vrsqrt.pop %v2000
      %v2006 = vrsqrt.pop %v2001
      %v2007 = vrsqrt.pop %v2002
      %v2008 = vrsqrt.pop %v2003
      %v2009 = vmul.f32 %v1969, %v2004
      %v2010 = vmul.f32 %v1970, %v2005
      %v2011 = vmul.f32 %v1971, %v2006
      %v2012 = vmul.f32 %v1972, %v2007
      %v2013 = vmul.f32 %v1973, %v2008
      %v2014 = vlaneseq
      %v2015 = vshrl.u32 %v2014, 7
      %v2016 = vsub.s32 0, %v2015
      %v2017 = vrot.slane %v1947, %v2016
      %v2018 = vmul.f32 %v2009, %v2017
      %v2019 = vmul.f32 %v2010, %v2017
      %v2020 = vmul.f32 %v2011, %v2017
      %v2021 = vmul.f32 %v2012, %v2017
      %v2022 = vmul.f32 %v2013, %v2017
      %v2023 = vlaneseq
      %v2024 = vshrl.u32 %v2023, 7
      %v2025 = vsub.s32 0, %v2024
      %v2026 = vrot.slane %v1948, %v2025
      %v2027 = vadd.f32 %v2018, %v2026
      %v2028 = vadd.f32 %v2019, %v2026
      %v2029 = vadd.f32 %v2020, %v2026
      %v2030 = vadd.f32 %v2021, %v2026
      %v2031 = vadd.f32 %v2022, %v2026
      %v2032 = vld [vmem:[%s182 + $0xe0] sm:$0xff]
      %v2033 = vld [vmem:[%s182 + $0xe8] sm:$0xff]
      %v2034 = vld [vmem:[%s182 + $0xf0] sm:$0xff]
      %v2035 = vld [vmem:[%s182 + $0xf8] sm:$0xff]
      %v2036 = vld [vmem:[%s182 + $0x185] sm:$0x1]
      %v2037 = vlaneseq
      %v2038 = vshrl.u32 %v2037, 7
      %v2039 = vsub.s32 0, %v2038
      %v2040 = vrot.slane %v2036, %v2039
      %v2042 = vsel %vm433, %v2027, 0
      %v2045 = vsel %vm433, %v2028, 0
      %v2048 = vsel %vm433, %v2029, 0
      %v2051 = vsel %vm433, %v2030, 0
      %v2054 = vsel %vm433, %v2031, 0
      %2056 = vmatprep.subr.mxu0 0.0
      %2057 = vmatpush1.msra.mxu0 0.0
      %2058 = vmatprep.subr.mxu0 0.0
      %2059 = vmatpush1.msra.mxu0 0.0
      %2060 = vmatprep.subr.mxu0 0.0
      %2061 = vmatpush1.msra.mxu0 0.0
      %2062 = vmatprep.subr.mxu0 0.0
      %2063 = vmatpush1.msra.mxu0 0.0
      %2064 = vmatprep.subr.mxu0 0.0
      %2065 = vmatpush1.msra.mxu0 0.0
      %2066 = vmatprep.subr.mxu0 0.0
      %2067 = vmatpush1.msra.mxu0 0.0
      %2068 = vmatprep.subr.mxu0 0.0
      %2069 = vmatpush1.msra.mxu0 0.0
      %2070 = vmatprep.subr.mxu0 0.0
      %2071 = vmatpush1.msra.mxu0 0.0
      %2072 = vmatprep.subr.mxu0 0.0
      %2073 = vmatpush1.msra.mxu0 0.0
      %2074 = vmatprep.subr.mxu0 0.0
      %2075 = vmatpush1.msra.mxu0 0.0
      %2076 = vmatprep.subr.mxu0 0.0
      %2077 = vmatpush1.msra.mxu0 0.0
      %2078 = vmatprep.subr.mxu0 0.0
      %2079 = vmatpush1.msra.mxu0 0.0
      %2080 = vmatprep.subr.mxu0 0.0
      %2081 = vmatpush1.msra.mxu0 %v2035
      %2082 = vmatprep.subr.mxu0 0.0
      %2083 = vmatpush1.msra.mxu0 %v2034
      %2084 = vmatprep.subr.mxu0 0.0
      %2085 = vmatpush1.msra.mxu0 %v2033
      %2086 = vmatprep.subr.mxu0 0.0
      %2087 = vmatpush1.msra.mxu0 %v2032
      %2088 = vmatprep.subr.mxu0 0.0
      %2089 = vmatpush2.msra.mxu0 0.0
      %2090 = vmatprep.subr.mxu0 0.0
      %2091 = vmatpush2.msra.mxu0 0.0
      %2092 = vmatprep.subr.mxu0 0.0
      %2093 = vmatpush2.msra.mxu0 0.0
      %2094 = vmatprep.subr.mxu0 0.0
      %2095 = vmatpush2.msra.mxu0 0.0
      %2096 = vmatprep.subr.mxu0 0.0
      %2097 = vmatpush2.msra.mxu0 0.0
      %2098 = vmatprep.subr.mxu0 0.0
      %2099 = vmatpush2.msra.mxu0 0.0
      %2100 = vmatprep.subr.mxu0 0.0
      %2101 = vmatpush2.msra.mxu0 0.0
      %2102 = vmatprep.subr.mxu0 0.0
      %2103 = vmatpush2.msra.mxu0 0.0
      %2104 = vmatprep.subr.mxu0 0.0
      %2105 = vmatpush2.msra.mxu0 0.0
      %2106 = vmatprep.subr.mxu0 0.0
      %2107 = vmatpush2.msra.mxu0 0.0
      %2108 = vmatprep.subr.mxu0 0.0
      %2109 = vmatpush2.msra.mxu0 0.0
      %2110 = vmatprep.subr.mxu0 0.0
      %2111 = vmatpush2.msra.mxu0 0.0
      %2112 = vmatprep.subr.mxu0 0.0
      %2113 = vmatpush2.msra.mxu0 0.0
      %2114 = vmatprep.subr.mxu0 0.0
      %2115 = vmatpush2.msra.mxu0 0.0
      %2116 = vmatprep.subr.mxu0 0.0
      %2117 = vmatpush2.msra.mxu0 0.0
      %2118 = vmatprep.subr.mxu0 0.0
      %2119 = vmatpush2.msra.mxu0 0.0
      %2120 = vmatprep.mubr.f32.mxu0 0.0
      %2121 = vmatmul.mubr.f32.gmra.mxu0 %v2042
      %v2122 = vpop.f32.mrf.mxu0
      %v2123 = vadd.f32 %v2040, %v2122
      %v2124 = vpop.f32.mrf.mxu0
      %2125 = vmatprep.mubr.f32.mxu0 0.0
      %2126 = vmatmul.mubr.f32.gmra.mxu0 %v2045
      %v2127 = vpop.f32.mrf.mxu0
      %v2128 = vadd.f32 %v2040, %v2127
      %v2129 = vpop.f32.mrf.mxu0
      %2130 = vmatprep.mubr.f32.mxu0 0.0
      %2131 = vmatmul.mubr.f32.gmra.mxu0 %v2048
      %v2132 = vpop.f32.mrf.mxu0
      %v2133 = vadd.f32 %v2040, %v2132
      %v2134 = vpop.f32.mrf.mxu0
      %2135 = vmatprep.mubr.f32.mxu0 0.0
      %2136 = vmatmul.mubr.f32.gmra.mxu0 %v2051
      %v2137 = vpop.f32.mrf.mxu0
      %v2138 = vadd.f32 %v2040, %v2137
      %v2139 = vpop.f32.mrf.mxu0
      %2140 = vmatprep.mubr.f32.mxu0 0.0
      %2141 = vmatmul.mubr.f32.gmra.mxu0 %v2054
      %v2142 = vpop.f32.mrf.mxu0
      %v2143 = vadd.f32 %v2040, %v2142
      %v2144 = vpop.f32.mrf.mxu0
      %2145 = vdwg.mxu0
      %v2146 = vmul.f32 %v2123, 1.702
      %v2147 = vmul.f32 %v2128, 1.702
      %v2148 = vmul.f32 %v2133, 1.702
      %v2149 = vmul.f32 %v2138, 1.702
      %v2150 = vmul.f32 %v2143, 1.702
      %v2151 = vxor.u32 %v2146, 2147483648
      %v2152 = vxor.u32 %v2147, 2147483648
      %v2153 = vxor.u32 %v2148, 2147483648
      %v2154 = vxor.u32 %v2149, 2147483648
      %v2155 = vxor.u32 %v2150, 2147483648
      %v2156 = vmul.f32 %v2151, 1.442695
      %v2157 = vpow.pop %v2156
      %v2158 = vmul.f32 %v2152, 1.442695
      %v2159 = vpow.pop %v2158
      %v2160 = vmul.f32 %v2153, 1.442695
      %v2161 = vpow.pop %v2160
      %v2162 = vmul.f32 %v2154, 1.442695
      %v2163 = vpow.pop %v2162
      %v2164 = vmul.f32 %v2155, 1.442695
      %v2165 = vpow.pop %v2164
      %v2166 = vadd.f32 %v2157, 1.0
      %v2167 = vadd.f32 %v2159, 1.0
      %v2168 = vadd.f32 %v2161, 1.0
      %v2169 = vadd.f32 %v2163, 1.0
      %v2170 = vadd.f32 %v2165, 1.0
      %v2171 = vrcp.pop %v2166
      %v2172 = vmul.f32 1.0, %v2171
      %v2173 = vrcp.pop %v2167
      %v2174 = vmul.f32 1.0, %v2173
      %v2175 = vrcp.pop %v2168
      %v2176 = vmul.f32 1.0, %v2175
      %v2177 = vrcp.pop %v2169
      %v2178 = vmul.f32 1.0, %v2177
      %v2179 = vrcp.pop %v2170
      %v2180 = vmul.f32 1.0, %v2179
      %v2181 = vmul.f32 %v2123, %v2172
      %v2182 = vmul.f32 %v2128, %v2174
      %v2183 = vmul.f32 %v2133, %v2176
      %v2184 = vmul.f32 %v2138, %v2178
      %v2185 = vmul.f32 %v2143, %v2180
      %v2186 = vld [vmem:[%s182 + $0x100] sm:$0xff]
      %v2187 = vld [vmem:[%s182 + $0x108] sm:$0xff]
      %v2188 = vld [vmem:[%s182 + $0x110] sm:$0xff]
      %v2189 = vld [vmem:[%s182 + $0x118] sm:$0xff]
      %v2190 = vld [vmem:[%s182 + $0x120] sm:$0xff]
      %v2191 = vld [vmem:[%s182 + $0x128] sm:$0xff]
      %v2192 = vld [vmem:[%s182 + $0x130] sm:$0xff]
      %v2193 = vld [vmem:[%s182 + $0x138] sm:$0xff]
      %v2194 = vld [vmem:[%s182 + $0x140] sm:$0xff]
      %v2195 = vld [vmem:[%s182 + $0x148] sm:$0xff]
      %v2196 = vld [vmem:[%s182 + $0x150] sm:$0xff]
      %v2197 = vld [vmem:[%s182 + $0x158] sm:$0xff]
      %v2198 = vld [vmem:[%s182 + $0x160] sm:$0xff]
      %v2199 = vld [vmem:[%s182 + $0x168] sm:$0xff]
      %v2200 = vld [vmem:[%s182 + $0x170] sm:$0xff]
      %v2201 = vld [vmem:[%s182 + $0x178] sm:$0xff]
      %v2202 = vld [vmem:[%s182 + $0x186] sm:$0x1]
      %v2203 = vlaneseq
      %v2204 = vshrl.u32 %v2203, 7
      %v2205 = vsub.s32 0, %v2204
      %v2206 = vrot.slane %v2202, %v2205
      %2207 = vmatprep.subr.mxu0 0.0
      %2208 = vmatpush1.msra.mxu0 %v2201
      %2209 = vmatprep.subr.mxu0 0.0
      %2210 = vmatpush1.msra.mxu0 %v2200
      %2211 = vmatprep.subr.mxu0 0.0
      %2212 = vmatpush1.msra.mxu0 %v2199
      %2213 = vmatprep.subr.mxu0 0.0
      %2214 = vmatpush1.msra.mxu0 %v2198
      %2215 = vmatprep.subr.mxu0 0.0
      %2216 = vmatpush1.msra.mxu0 %v2197
      %2217 = vmatprep.subr.mxu0 0.0
      %2218 = vmatpush1.msra.mxu0 %v2196
      %2219 = vmatprep.subr.mxu0 0.0
      %2220 = vmatpush1.msra.mxu0 %v2195
      %2221 = vmatprep.subr.mxu0 0.0
      %2222 = vmatpush1.msra.mxu0 %v2194
      %2223 = vmatprep.subr.mxu0 0.0
      %2224 = vmatpush1.msra.mxu0 %v2193
      %2225 = vmatprep.subr.mxu0 0.0
      %2226 = vmatpush1.msra.mxu0 %v2192
      %2227 = vmatprep.subr.mxu0 0.0
      %2228 = vmatpush1.msra.mxu0 %v2191
      %2229 = vmatprep.subr.mxu0 0.0
      %2230 = vmatpush1.msra.mxu0 %v2190
      %2231 = vmatprep.subr.mxu0 0.0
      %2232 = vmatpush1.msra.mxu0 %v2189
      %2233 = vmatprep.subr.mxu0 0.0
      %2234 = vmatpush1.msra.mxu0 %v2188
      %2235 = vmatprep.subr.mxu0 0.0
      %2236 = vmatpush1.msra.mxu0 %v2187
      %2237 = vmatprep.subr.mxu0 0.0
      %2238 = vmatpush1.msra.mxu0 %v2186
      %2239 = vmatprep.subr.mxu0 0.0
      %2240 = vmatpush2.msra.mxu0 0.0
      %2241 = vmatprep.subr.mxu0 0.0
      %2242 = vmatpush2.msra.mxu0 0.0
      %2243 = vmatprep.subr.mxu0 0.0
      %2244 = vmatpush2.msra.mxu0 0.0
      %2245 = vmatprep.subr.mxu0 0.0
      %2246 = vmatpush2.msra.mxu0 0.0
      %2247 = vmatprep.subr.mxu0 0.0
      %2248 = vmatpush2.msra.mxu0 0.0
      %2249 = vmatprep.subr.mxu0 0.0
      %2250 = vmatpush2.msra.mxu0 0.0
      %2251 = vmatprep.subr.mxu0 0.0
      %2252 = vmatpush2.msra.mxu0 0.0
      %2253 = vmatprep.subr.mxu0 0.0
      %2254 = vmatpush2.msra.mxu0 0.0
      %2255 = vmatprep.subr.mxu0 0.0
      %2256 = vmatpush2.msra.mxu0 0.0
      %2257 = vmatprep.subr.mxu0 0.0
      %2258 = vmatpush2.msra.mxu0 0.0
      %2259 = vmatprep.subr.mxu0 0.0
      %2260 = vmatpush2.msra.mxu0 0.0
      %2261 = vmatprep.subr.mxu0 0.0
      %2262 = vmatpush2.msra.mxu0 0.0
      %2263 = vmatprep.subr.mxu0 0.0
      %2264 = vmatpush2.msra.mxu0 0.0
      %2265 = vmatprep.subr.mxu0 0.0
      %2266 = vmatpush2.msra.mxu0 0.0
      %2267 = vmatprep.subr.mxu0 0.0
      %2268 = vmatpush2.msra.mxu0 0.0
      %2269 = vmatprep.subr.mxu0 0.0
      %2270 = vmatpush2.msra.mxu0 0.0
      %2271 = vmatprep.mubr.f32.mxu0 0.0
      %2272 = vmatmul.mubr.f32.gmra.mxu0 %v2181
      %v2273 = vpop.f32.mrf.mxu0
      %v2274 = vadd.f32 %v2206, %v2273
      %v2275 = vpop.f32.mrf.mxu0
      %2276 = vmatprep.mubr.f32.mxu0 0.0
      %2277 = vmatmul.mubr.f32.gmra.mxu0 %v2182
      %v2278 = vpop.f32.mrf.mxu0
      %v2279 = vadd.f32 %v2206, %v2278
      %v2280 = vpop.f32.mrf.mxu0
      %2281 = vmatprep.mubr.f32.mxu0 0.0
      %2282 = vmatmul.mubr.f32.gmra.mxu0 %v2183
      %v2283 = vpop.f32.mrf.mxu0
      %v2284 = vadd.f32 %v2206, %v2283
      %v2285 = vpop.f32.mrf.mxu0
      %2286 = vmatprep.mubr.f32.mxu0 0.0
      %2287 = vmatmul.mubr.f32.gmra.mxu0 %v2184
      %v2288 = vpop.f32.mrf.mxu0
      %v2289 = vadd.f32 %v2206, %v2288
      %v2290 = vpop.f32.mrf.mxu0
      %2291 = vmatprep.mubr.f32.mxu0 0.0
      %2292 = vmatmul.mubr.f32.gmra.mxu0 %v2185
      %v2293 = vpop.f32.mrf.mxu0
      %v2294 = vadd.f32 %v2206, %v2293
      %v2295 = vpop.f32.mrf.mxu0
      %2296 = vdwg.mxu0
      %v2297 = vadd.f32 %v1942, %v2274
      %v2298 = vadd.f32 %v1943, %v2279
      %v2299 = vadd.f32 %v1944, %v2284
      %v2300 = vadd.f32 %v1945, %v2289
      %v2301 = vadd.f32 %v1946, %v2294
      %2302 = vst.msk [vmem:[%s4] sm:$0xff] %vm433, %v2297
      %2303 = vst.msk [vmem:[%s4 + $0x8] sm:$0xff] %vm433, %v2298
      %2304 = vst.msk [vmem:[%s4 + $0x10] sm:$0xff] %vm433, %v2299
      %2305 = vst.msk [vmem:[%s4 + $0x18] sm:$0xff] %vm433, %v2300
      %2306 = vst.msk [vmem:[%s4 + $0x20] sm:$0x3] %vm446, %v2301
      // Predicated region
      $region41: #{clip_forward.4} parent=35 // pred_check
        %p2307 = pneg %p117
      $region42: #{clip_forward.4} parent=35 // pred_check_branch
        %2309 = sbr.rel (%p2307) target = $region44
      $region43: #{clip_forward.4} parent=35 // pred_region
        _
      $region44: #{clip_forward.4} parent=35 // pred_fallthru
        _
      // Predicated region
      $region45: #{clip_forward.4} parent=35 // pred_check
        %p2310 = pneg %p117
      $region46: #{clip_forward.4} parent=35 // pred_check_branch
        %2312 = sbr.rel (%p2310) target = $region48
      $region47: #{clip_forward.4} parent=35 // pred_region
        _
      $region48: #{clip_forward.4} parent=35 // pred_fallthru
        _
    $region36: #{clip_forward.4} parent=5 // pred_fallthru
      _
    %p2313 = scmp.le.s32.totalorder 2, %s10
    // Predicated region
    $region49: #{clip_forward.4} parent=5 // pred_check
      %p2314 = pneg %p2313
    $region50: #{clip_forward.4} parent=5 // pred_check_branch
      %2316 = sbr.rel (%p2314) target = $region52
    $region51: #{clip_forward.4} parent=5 // pred_region
      %s2317 = ssub.s32 %s10, 2
    $region52: #{clip_forward.4} parent=5 // pred_fallthru
      _
  $region6: #{clip_forward.4} parent=0 // loop_footer
    %s14 = sadd.s32 1, %s10
  $region7: #{clip_forward.4} parent=0 // loop_footer_branch
    %9 = sbr.rel target = $region3
  $region8: #{clip_forward.4} parent=0 // loop_exit
    _

</llo_original>
